<compile_context>
chip_gen: v7x
topology: tpu7x:2x2x1
jax: 0.10.0
libtpu: 0.0.40
codegen_flags: <defaults>
</compile_context>

<pallas_src>
import math

import jax
import jax.numpy as jnp
from jax import lax
from jax.experimental import pallas as pl
from jax.experimental.pallas import tpu as pltpu

_SQRT_HALF = 0.7071067811865476
_LANE = 128
_MAX_TILE = 16384   # lanes per grid step; ~<1 MiB double-buffered VMEM -> safe on v7x too
_MIN_STEPS = 8      # >= 4 steps per core on v7x's 2 TensorCores for big problems
_CHUNK = 512        # in-kernel lane chunk -> bounded vreg live ranges


def _gelu_erf(y):
    # v2 = y*0.5 ; v3 = y*0.7071...; v4 = erf(v3); v5 = v4+1; out = v2*v5
    return (y * 0.5) * (lax.erf(y * _SQRT_HALF) + 1.0)


def _round_up(a, b):
    return (a + b - 1) // b * b


def _choose_tile(hw_pad, n):
    """Lane-dense tile (multiple of 128) that divides hw_pad."""
    if n * hw_pad <= _MAX_TILE:
        return hw_pad                      # small problem: one grid step per image
    units = hw_pad // _LANE
    tiles = [d * _LANE for d in range(1, units + 1) if units % d == 0]
    good = [t for t in tiles if t <= _MAX_TILE and n * (hw_pad // t) >= _MIN_STEPS]
    if good:
        return max(good)
    return max(t for t in tiles if t <= _MAX_TILE)   # 128 always qualifies


def _layout(c_in, c1, c2):
    """Column offsets of [w1|b1|w2|b2|w3|b3] in the packed operand."""
    o_b1 = c_in
    o_w2 = o_b1 + 1
    o_b2 = o_w2 + c1
    o_w3 = o_b2 + 1
    o_b3 = o_w3 + c2
    return o_b1, o_w2, o_b2, o_w3, o_b3, o_b3 + 1


def _pack_params(w1, b1, w2, b2, w3, b3):
    c1, c_in = w1.shape
    c2 = w2.shape[0]
    c3 = w3.shape[0]
    o_b1, o_w2, o_b2, o_w3, o_b3, cols = _layout(c_in, c1, c2)
    rows = _round_up(max(c1, c2, c3), 8)
    p = jnp.zeros((rows, cols), jnp.float32)
    p = p.at[:c1, 0:c_in].set(w1)
    p = p.at[:c1, o_b1].set(b1)
    p = p.at[:c2, o_w2:o_w2 + c1].set(w2)
    p = p.at[:c2, o_b2].set(b2)
    p = p.at[:c3, o_w3:o_w3 + c2].set(w3)
    p = p.at[:c3, o_b3].set(b3)
    return p


def _make_kernel(c_in, c1, c2, c3, tile, chunk):
    o_b1, o_w2, o_b2, o_w3, o_b3, _ = _layout(c_in, c1, c2)
    n_chunks = tile // chunk

    def kernel(p_ref, x_ref, o_ref):
        # Packed weights/biases: one tiny VMEM-resident operand, sliced once.
        pw = p_ref[...]
        w1 = pw[:c1, 0:c_in]
        b1 = pw[:c1, o_b1:o_b1 + 1]
        w2 = pw[:c2, o_w2:o_w2 + c1]
        b2 = pw[:c2, o_b2:o_b2 + 1]
        w3 = pw[:c3, o_w3:o_w3 + c2]
        b3 = pw[:c3, o_b3:o_b3 + 1]

        def chunk_body(j, carry):
            s = pl.multiple_of(j * chunk, chunk)
            x = x_ref[:, pl.ds(s, chunk)]
            h = _gelu_erf(jnp.dot(w1, x, preferred_element_type=jnp.float32) + b1)
            h = _gelu_erf(jnp.dot(w2, h, preferred_element_type=jnp.float32) + b2)
            y = jnp.dot(w3, h, preferred_element_type=jnp.float32) + b3
            o_ref[:, pl.ds(s, chunk)] = y.astype(o_ref.dtype)
            return carry

        lax.fori_loop(0, n_chunks, chunk_body, 0, unroll=n_chunks <= 8)

    return kernel


def _fused_interior(x, w1, b1, w2, b2, w3, b3):
    """Fused conv1+GELU+conv2+GELU+conv3 on the interior H x W pixels.
    (Borders are handled analytically by the caller: 1x1 convs never mix
    border and interior pixels.)"""
    N, c_in, H, W = x.shape
    c1, c2, c3 = w1.shape[0], w2.shape[0], w3.shape[0]

    HW = H * W
    HW_pad = _round_up(HW, _LANE)

    x3 = x.reshape(N, c_in, HW)            # free: no data movement
    if HW_pad != HW:
        x3 = jnp.pad(x3, ((0, 0), (0, 0), (0, HW_pad - HW)))

    T = _choose_tile(HW_pad, N)
    chunk = _LANE * math.gcd(T // _LANE, _CHUNK // _LANE)

    packed = _pack_params(w1, b1, w2, b2, w3, b3)
    rows_p, cols_p = packed.shape
    kernel = _make_kernel(c_in, c1, c2, c3, T, chunk)

    out3 = pl.pallas_call(
        kernel,
        out_shape=jax.ShapeDtypeStruct((N, c3, HW_pad), jnp.float32),
        grid_spec=pltpu.PrefetchScalarGridSpec(
            num_scalar_prefetch=0,
            grid=(N, HW_pad // T),
            in_specs=[
                # packed weights/biases: constant block index -> DMA'd once, resident
                pl.BlockSpec((rows_p, cols_p), lambda n, i: (0, 0)),
                # pixel tile of image n (leading batch dim squeezed)
                pl.BlockSpec((None, c_in, T), lambda n, i: (n, 0, i)),
            ],
            out_specs=pl.BlockSpec((None, c3, T), lambda n, i: (n, 0, i)),
        ),
        compiler_params=pltpu.CompilerParams(
            dimension_semantics=("parallel", "parallel")),  # megacore splits freely
    )(packed, x3)

    if HW_pad != HW:
        out3 = out3[:, :, :HW]
    return out3.reshape(N, c3, H, W)


@jax.jit
def model_forward(x, params):
    (w1, b1), (w2, b2), (w3, b3) = params
    N, _, H, W = x.shape
    c3 = w3.shape[0]

    # Interior pixels: fused Pallas kernel, one HBM pass, no intermediates in HBM.
    interior = _fused_interior(x, w1, b1, w2, b2, w3, b3)    # (N, 1, H, W)

    # Border rings (per-channel constants because the convs are 1x1):
    #   ring0 (outermost) = b3
    #   ring1             = w3 @ gelu(b2) + b3
    #   ring2             = w3 @ gelu(w2 @ gelu(b1) + b2) + b3
    c1_ring = _gelu_erf(b1)
    r2_outer = _gelu_erf(b2)
    r2_inner = _gelu_erf(w2 @ c1_ring + b2)
    ring_out = b3[0]
    ring_mid = (w3 @ r2_outer + b3)[0]
    ring_in = (w3 @ r2_inner + b3)[0]

    dt = interior.dtype
    out = jnp.full((N, c3, H + 6, W + 6), ring_out, dt)
    out = lax.dynamic_update_slice(
        out, jnp.full((N, c3, H + 4, W + 4), ring_mid, dt), (0, 0, 1, 1))
    out = lax.dynamic_update_slice(
        out, jnp.full((N, c3, H + 2, W + 2), ring_in, dt), (0, 0, 2, 2))
    out = lax.dynamic_update_slice(out, interior, (0, 0, 3, 3))
    return out                                               # (N, 1, H+6, W+6)


def init_params(key):
    """Deterministic PyTorch-style Conv2d init (uniform(-1/sqrt(fan_in), +))."""
    def conv_init(k, c_out, c_in):
        k1, k2 = jax.random.split(k)
        bound = 1.0 / (c_in ** 0.5)
        w = jax.random.uniform(k1, (c_out, c_in), jnp.float32, -bound, bound)
        bias = jax.random.uniform(k2, (c_out,), jnp.float32, -bound, bound)
        return w, bias

    k1, k2, k3 = jax.random.split(key, 3)
    p1 = conv_init(k1, 7, 5)   # conv1 (channels reconciled, see header note)
    p2 = conv_init(k2, 7, 7)   # conv2 (as declared: 7 -> 7)
    p3 = conv_init(k3, 1, 7)   # conv3 (channels reconciled, see header note)
    return p1, p2, p3


def _reference_forward(x, params):
    """Pure-JAX reference (explicit zero-padded 1x1 convs, same math)."""
    def conv(x, w, b):
        xp = jnp.pad(x, ((0, 0), (0, 0), (1, 1), (1, 1)))
        return jnp.einsum('oc,nchw->nohw', w, xp) + b[None, :, None, None]

    (w1, b1), (w2, b2), (w3, b3) = params
    return conv(_gelu_erf(conv(_gelu_erf(conv(x, w1, b1)), w2, b2)), w3, b3)


if __name__ == "__main__":
    key = jax.random.PRNGKey(0)
    kx, kp = jax.random.split(key)
    params = init_params(kp)

    # (1,5,64,64) matches the original module's input; the smaller shapes
    # exercise the multi-batch grid and the lane-padding (HW not /128) paths.
    for shape in [(1, 5, 64, 64), (2, 5, 16, 16), (1, 5, 10, 10)]:
        x = jax.random.normal(kx, shape, dtype=jnp.float32)
        out = jax.block_until_ready(model_forward(x, params))
        N, _, H, W = shape
        assert out.shape == (N, 1, H + 6, W + 6), out.shape
        ref = _reference_forward(x, params)
        err = float(jnp.max(jnp.abs(out - ref)))
        assert err < 5e-4, err

    print("KERNEL_OK")
</pallas_src>

<mosaic_0001>
module attributes {stable_mosaic.version = 11 : i64} {
  func.func @kernel(%arg0: i32, %arg1: i32, %arg2: memref<8x22xf32, #tpu.memory_space<vmem>>, %arg3: memref<1x5x4096xf32, #tpu.memory_space<vmem>>, %arg4: memref<1x1x4096xf32, #tpu.memory_space<vmem>>) attributes {dimension_semantics = [#tpu.dimension_semantics<parallel>, #tpu.dimension_semantics<parallel>], iteration_bounds = array<i64: 1, 1>, scalar_prefetch = 0 : i64, scratch_operands = 0 : i64, tpu.core_type = #tpu.core_type<tc>, window_params = [{pipeline_mode = #tpu.pipeline_mode<synchronous>, transform_indices = @transform_0, window_bounds = array<i64: 8, 22>}, {transform_indices = @transform_1, window_bounds = array<i64: 1, 5, 4096>}, {transform_indices = @transform_2, window_bounds = array<i64: 1, 1, 4096>}]} {
    %c0 = arith.constant 0 : index
    %c0_0 = arith.constant 0 : index
    %0 = vector.load %arg2[%c0, %c0_0] : memref<8x22xf32, #tpu.memory_space<vmem>>, vector<8x22xf32>
    %1 = vector.extract_strided_slice %0 {offsets = [0, 0], sizes = [7, 5], strides = [1, 1]} : vector<8x22xf32> to vector<7x5xf32>
    %2 = vector.extract_strided_slice %0 {offsets = [0, 5], sizes = [7, 1], strides = [1, 1]} : vector<8x22xf32> to vector<7x1xf32>
    %3 = vector.extract_strided_slice %0 {offsets = [0, 6], sizes = [7, 7], strides = [1, 1]} : vector<8x22xf32> to vector<7x7xf32>
    %4 = vector.extract_strided_slice %0 {offsets = [0, 13], sizes = [7, 1], strides = [1, 1]} : vector<8x22xf32> to vector<7x1xf32>
    %5 = vector.extract_strided_slice %0 {offsets = [0, 14], sizes = [1, 7], strides = [1, 1]} : vector<8x22xf32> to vector<1x7xf32>
    %6 = vector.extract_strided_slice %0 {offsets = [0, 21], sizes = [1, 1], strides = [1, 1]} : vector<8x22xf32> to vector<1x1xf32>
    %c0_i32 = arith.constant 0 : i32
    %c512_i32 = arith.constant 512 : i32
    %7 = arith.muli %c0_i32, %c512_i32 : i32
    %8 = tpu.assume_multiple %7, 512 : i32
    %c0_1 = arith.constant 0 : index
    %c0_2 = arith.constant 0 : index
    %9 = arith.index_cast %8 : i32 to index
    %10 = vector.load %arg3[%c0_1, %c0_2, %9] : memref<1x5x4096xf32, #tpu.memory_space<vmem>>, vector<1x5x512xf32>
    %11 = vector.shape_cast %10 : vector<1x5x512xf32> to vector<5x512xf32>
    %cst = arith.constant dense<0.000000e+00> : vector<7x512xf32>
    %12 = tpu.matmul %1, %11, %cst {dimension_numbers = #tpu.dot_dimension_numbers<[1], [0], [0], [1], [0, 0, 1, 1], [], []>} : vector<7x5xf32>, vector<5x512xf32>, vector<7x512xf32> -> vector<7x512xf32>
    %13 = vector.broadcast %2 : vector<7x1xf32> to vector<7x512xf32>
    %14 = arith.addf %12, %13 : vector<7x512xf32>
    %cst_3 = arith.constant 5.000000e-01 : f32
    %15 = vector.broadcast %cst_3 : f32 to vector<7x512xf32>
    %16 = arith.mulf %14, %15 : vector<7x512xf32>
    %cst_4 = arith.constant 0.707106769 : f32
    %17 = vector.broadcast %cst_4 : f32 to vector<7x512xf32>
    %18 = arith.mulf %14, %17 : vector<7x512xf32>
    %19 = math.erf %18 : vector<7x512xf32>
    %cst_5 = arith.constant 1.000000e+00 : f32
    %20 = vector.broadcast %cst_5 : f32 to vector<7x512xf32>
    %21 = arith.addf %19, %20 : vector<7x512xf32>
    %22 = arith.mulf %16, %21 : vector<7x512xf32>
    %cst_6 = arith.constant dense<0.000000e+00> : vector<7x512xf32>
    %23 = tpu.matmul %3, %22, %cst_6 {dimension_numbers = #tpu.dot_dimension_numbers<[1], [0], [0], [1], [0, 0, 1, 1], [], []>} : vector<7x7xf32>, vector<7x512xf32>, vector<7x512xf32> -> vector<7x512xf32>
    %24 = vector.broadcast %4 : vector<7x1xf32> to vector<7x512xf32>
    %25 = arith.addf %23, %24 : vector<7x512xf32>
    %cst_7 = arith.constant 5.000000e-01 : f32
    %26 = vector.broadcast %cst_7 : f32 to vector<7x512xf32>
    %27 = arith.mulf %25, %26 : vector<7x512xf32>
    %cst_8 = arith.constant 0.707106769 : f32
    %28 = vector.broadcast %cst_8 : f32 to vector<7x512xf32>
    %29 = arith.mulf %25, %28 : vector<7x512xf32>
    %30 = math.erf %29 : vector<7x512xf32>
    %cst_9 = arith.constant 1.000000e+00 : f32
    %31 = vector.broadcast %cst_9 : f32 to vector<7x512xf32>
    %32 = arith.addf %30, %31 : vector<7x512xf32>
    %33 = arith.mulf %27, %32 : vector<7x512xf32>
    %cst_10 = arith.constant dense<0.000000e+00> : vector<1x512xf32>
    %34 = tpu.matmul %5, %33, %cst_10 {dimension_numbers = #tpu.dot_dimension_numbers<[1], [0], [0], [1], [0, 0, 1, 1], [], []>} : vector<1x7xf32>, vector<7x512xf32>, vector<1x512xf32> -> vector<1x512xf32>
    %35 = vector.broadcast %6 : vector<1x1xf32> to vector<1x512xf32>
    %36 = arith.addf %34, %35 : vector<1x512xf32>
    %c0_11 = arith.constant 0 : index
    %c0_12 = arith.constant 0 : index
    %37 = arith.index_cast %8 : i32 to index
    %38 = vector.load %arg4[%c0_11, %c0_12, %37] : memref<1x1x4096xf32, #tpu.memory_space<vmem>>, vector<1x1x512xf32>
    %39 = vector.shape_cast %38 : vector<1x1x512xf32> to vector<1x512xf32>
    %40 = vector.shape_cast %36 : vector<1x512xf32> to vector<1x1x512xf32>
    tpu.vector_store %arg4[%c0_11, %c0_12, %37], %40 {strides = array<i32>} : memref<1x1x4096xf32, #tpu.memory_space<vmem>>, vector<1x1x512xf32>,
    %c1_i32 = arith.constant 1 : i32
    %c512_i32_13 = arith.constant 512 : i32
    %41 = arith.muli %c1_i32, %c512_i32_13 : i32
    %42 = tpu.assume_multiple %41, 512 : i32
    %c0_14 = arith.constant 0 : index
    %c0_15 = arith.constant 0 : index
    %43 = arith.index_cast %42 : i32 to index
    %44 = vector.load %arg3[%c0_14, %c0_15, %43] : memref<1x5x4096xf32, #tpu.memory_space<vmem>>, vector<1x5x512xf32>
    %45 = vector.shape_cast %44 : vector<1x5x512xf32> to vector<5x512xf32>
    %cst_16 = arith.constant dense<0.000000e+00> : vector<7x512xf32>
    %46 = tpu.matmul %1, %45, %cst_16 {dimension_numbers = #tpu.dot_dimension_numbers<[1], [0], [0], [1], [0, 0, 1, 1], [], []>} : vector<7x5xf32>, vector<5x512xf32>, vector<7x512xf32> -> vector<7x512xf32>
    %47 = vector.broadcast %2 : vector<7x1xf32> to vector<7x512xf32>
    %48 = arith.addf %46, %47 : vector<7x512xf32>
    %cst_17 = arith.constant 5.000000e-01 : f32
    %49 = vector.broadcast %cst_17 : f32 to vector<7x512xf32>
    %50 = arith.mulf %48, %49 : vector<7x512xf32>
    %cst_18 = arith.constant 0.707106769 : f32
    %51 = vector.broadcast %cst_18 : f32 to vector<7x512xf32>
    %52 = arith.mulf %48, %51 : vector<7x512xf32>
    %53 = math.erf %52 : vector<7x512xf32>
    %cst_19 = arith.constant 1.000000e+00 : f32
    %54 = vector.broadcast %cst_19 : f32 to vector<7x512xf32>
    %55 = arith.addf %53, %54 : vector<7x512xf32>
    %56 = arith.mulf %50, %55 : vector<7x512xf32>
    %cst_20 = arith.constant dense<0.000000e+00> : vector<7x512xf32>
    %57 = tpu.matmul %3, %56, %cst_20 {dimension_numbers = #tpu.dot_dimension_numbers<[1], [0], [0], [1], [0, 0, 1, 1], [], []>} : vector<7x7xf32>, vector<7x512xf32>, vector<7x512xf32> -> vector<7x512xf32>
    %58 = vector.broadcast %4 : vector<7x1xf32> to vector<7x512xf32>
    %59 = arith.addf %57, %58 : vector<7x512xf32>
    %cst_21 = arith.constant 5.000000e-01 : f32
    %60 = vector.broadcast %cst_21 : f32 to vector<7x512xf32>
    %61 = arith.mulf %59, %60 : vector<7x512xf32>
    %cst_22 = arith.constant 0.707106769 : f32
    %62 = vector.broadcast %cst_22 : f32 to vector<7x512xf32>
    %63 = arith.mulf %59, %62 : vector<7x512xf32>
    %64 = math.erf %63 : vector<7x512xf32>
    %cst_23 = arith.constant 1.000000e+00 : f32
    %65 = vector.broadcast %cst_23 : f32 to vector<7x512xf32>
    %66 = arith.addf %64, %65 : vector<7x512xf32>
    %67 = arith.mulf %61, %66 : vector<7x512xf32>
    %cst_24 = arith.constant dense<0.000000e+00> : vector<1x512xf32>
    %68 = tpu.matmul %5, %67, %cst_24 {dimension_numbers = #tpu.dot_dimension_numbers<[1], [0], [0], [1], [0, 0, 1, 1], [], []>} : vector<1x7xf32>, vector<7x512xf32>, vector<1x512xf32> -> vector<1x512xf32>
    %69 = vector.broadcast %6 : vector<1x1xf32> to vector<1x512xf32>
    %70 = arith.addf %68, %69 : vector<1x512xf32>
    %c0_25 = arith.constant 0 : index
    %c0_26 = arith.constant 0 : index
    %71 = arith.index_cast %42 : i32 to index
    %72 = vector.load %arg4[%c0_25, %c0_26, %71] : memref<1x1x4096xf32, #tpu.memory_space<vmem>>, vector<1x1x512xf32>
    %73 = vector.shape_cast %72 : vector<1x1x512xf32> to vector<1x512xf32>
    %74 = vector.shape_cast %70 : vector<1x512xf32> to vector<1x1x512xf32>
    tpu.vector_store %arg4[%c0_25, %c0_26, %71], %74 {strides = array<i32>} : memref<1x1x4096xf32, #tpu.memory_space<vmem>>, vector<1x1x512xf32>,
    %c2_i32 = arith.constant 2 : i32
    %c512_i32_27 = arith.constant 512 : i32
    %75 = arith.muli %c2_i32, %c512_i32_27 : i32
    %76 = tpu.assume_multiple %75, 512 : i32
    %c0_28 = arith.constant 0 : index
    %c0_29 = arith.constant 0 : index
    %77 = arith.index_cast %76 : i32 to index
    %78 = vector.load %arg3[%c0_28, %c0_29, %77] : memref<1x5x4096xf32, #tpu.memory_space<vmem>>, vector<1x5x512xf32>
    %79 = vector.shape_cast %78 : vector<1x5x512xf32> to vector<5x512xf32>
    %cst_30 = arith.constant dense<0.000000e+00> : vector<7x512xf32>
    %80 = tpu.matmul %1, %79, %cst_30 {dimension_numbers = #tpu.dot_dimension_numbers<[1], [0], [0], [1], [0, 0, 1, 1], [], []>} : vector<7x5xf32>, vector<5x512xf32>, vector<7x512xf32> -> vector<7x512xf32>
    %81 = vector.broadcast %2 : vector<7x1xf32> to vector<7x512xf32>
    %82 = arith.addf %80, %81 : vector<7x512xf32>
    %cst_31 = arith.constant 5.000000e-01 : f32
    %83 = vector.broadcast %cst_31 : f32 to vector<7x512xf32>
    %84 = arith.mulf %82, %83 : vector<7x512xf32>
    %cst_32 = arith.constant 0.707106769 : f32
    %85 = vector.broadcast %cst_32 : f32 to vector<7x512xf32>
    %86 = arith.mulf %82, %85 : vector<7x512xf32>
    %87 = math.erf %86 : vector<7x512xf32>
    %cst_33 = arith.constant 1.000000e+00 : f32
    %88 = vector.broadcast %cst_33 : f32 to vector<7x512xf32>
    %89 = arith.addf %87, %88 : vector<7x512xf32>
    %90 = arith.mulf %84, %89 : vector<7x512xf32>
    %cst_34 = arith.constant dense<0.000000e+00> : vector<7x512xf32>
    %91 = tpu.matmul %3, %90, %cst_34 {dimension_numbers = #tpu.dot_dimension_numbers<[1], [0], [0], [1], [0, 0, 1, 1], [], []>} : vector<7x7xf32>, vector<7x512xf32>, vector<7x512xf32> -> vector<7x512xf32>
    %92 = vector.broadcast %4 : vector<7x1xf32> to vector<7x512xf32>
    %93 = arith.addf %91, %92 : vector<7x512xf32>
    %cst_35 = arith.constant 5.000000e-01 : f32
    %94 = vector.broadcast %cst_35 : f32 to vector<7x512xf32>
    %95 = arith.mulf %93, %94 : vector<7x512xf32>
    %cst_36 = arith.constant 0.707106769 : f32
    %96 = vector.broadcast %cst_36 : f32 to vector<7x512xf32>
    %97 = arith.mulf %93, %96 : vector<7x512xf32>
    %98 = math.erf %97 : vector<7x512xf32>
    %cst_37 = arith.constant 1.000000e+00 : f32
    %99 = vector.broadcast %cst_37 : f32 to vector<7x512xf32>
    %100 = arith.addf %98, %99 : vector<7x512xf32>
    %101 = arith.mulf %95, %100 : vector<7x512xf32>
    %cst_38 = arith.constant dense<0.000000e+00> : vector<1x512xf32>
    %102 = tpu.matmul %5, %101, %cst_38 {dimension_numbers = #tpu.dot_dimension_numbers<[1], [0], [0], [1], [0, 0, 1, 1], [], []>} : vector<1x7xf32>, vector<7x512xf32>, vector<1x512xf32> -> vector<1x512xf32>
    %103 = vector.broadcast %6 : vector<1x1xf32> to vector<1x512xf32>
    %104 = arith.addf %102, %103 : vector<1x512xf32>
    %c0_39 = arith.constant 0 : index
    %c0_40 = arith.constant 0 : index
    %105 = arith.index_cast %76 : i32 to index
    %106 = vector.load %arg4[%c0_39, %c0_40, %105] : memref<1x1x4096xf32, #tpu.memory_space<vmem>>, vector<1x1x512xf32>
    %107 = vector.shape_cast %106 : vector<1x1x512xf32> to vector<1x512xf32>
    %108 = vector.shape_cast %104 : vector<1x512xf32> to vector<1x1x512xf32>
    tpu.vector_store %arg4[%c0_39, %c0_40, %105], %108 {strides = array<i32>} : memref<1x1x4096xf32, #tpu.memory_space<vmem>>, vector<1x1x512xf32>,
    %c3_i32 = arith.constant 3 : i32
    %c512_i32_41 = arith.constant 512 : i32
    %109 = arith.muli %c3_i32, %c512_i32_41 : i32
    %110 = tpu.assume_multiple %109, 512 : i32
    %c0_42 = arith.constant 0 : index
    %c0_43 = arith.constant 0 : index
    %111 = arith.index_cast %110 : i32 to index
    %112 = vector.load %arg3[%c0_42, %c0_43, %111] : memref<1x5x4096xf32, #tpu.memory_space<vmem>>, vector<1x5x512xf32>
    %113 = vector.shape_cast %112 : vector<1x5x512xf32> to vector<5x512xf32>
    %cst_44 = arith.constant dense<0.000000e+00> : vector<7x512xf32>
    %114 = tpu.matmul %1, %113, %cst_44 {dimension_numbers = #tpu.dot_dimension_numbers<[1], [0], [0], [1], [0, 0, 1, 1], [], []>} : vector<7x5xf32>, vector<5x512xf32>, vector<7x512xf32> -> vector<7x512xf32>
    %115 = vector.broadcast %2 : vector<7x1xf32> to vector<7x512xf32>
    %116 = arith.addf %114, %115 : vector<7x512xf32>
    %cst_45 = arith.constant 5.000000e-01 : f32
    %117 = vector.broadcast %cst_45 : f32 to vector<7x512xf32>
    %118 = arith.mulf %116, %117 : vector<7x512xf32>
    %cst_46 = arith.constant 0.707106769 : f32
    %119 = vector.broadcast %cst_46 : f32 to vector<7x512xf32>
    %120 = arith.mulf %116, %119 : vector<7x512xf32>
    %121 = math.erf %120 : vector<7x512xf32>
    %cst_47 = arith.constant 1.000000e+00 : f32
    %122 = vector.broadcast %cst_47 : f32 to vector<7x512xf32>
    %123 = arith.addf %121, %122 : vector<7x512xf32>
    %124 = arith.mulf %118, %123 : vector<7x512xf32>
    %cst_48 = arith.constant dense<0.000000e+00> : vector<7x512xf32>
    %125 = tpu.matmul %3, %124, %cst_48 {dimension_numbers = #tpu.dot_dimension_numbers<[1], [0], [0], [1], [0, 0, 1, 1], [], []>} : vector<7x7xf32>, vector<7x512xf32>, vector<7x512xf32> -> vector<7x512xf32>
    %126 = vector.broadcast %4 : vector<7x1xf32> to vector<7x512xf32>
    %127 = arith.addf %125, %126 : vector<7x512xf32>
    %cst_49 = arith.constant 5.000000e-01 : f32
    %128 = vector.broadcast %cst_49 : f32 to vector<7x512xf32>
    %129 = arith.mulf %127, %128 : vector<7x512xf32>
    %cst_50 = arith.constant 0.707106769 : f32
    %130 = vector.broadcast %cst_50 : f32 to vector<7x512xf32>
    %131 = arith.mulf %127, %130 : vector<7x512xf32>
    %132 = math.erf %131 : vector<7x512xf32>
    %cst_51 = arith.constant 1.000000e+00 : f32
    %133 = vector.broadcast %cst_51 : f32 to vector<7x512xf32>
    %134 = arith.addf %132, %133 : vector<7x512xf32>
    %135 = arith.mulf %129, %134 : vector<7x512xf32>
    %cst_52 = arith.constant dense<0.000000e+00> : vector<1x512xf32>
    %136 = tpu.matmul %5, %135, %cst_52 {dimension_numbers = #tpu.dot_dimension_numbers<[1], [0], [0], [1], [0, 0, 1, 1], [], []>} : vector<1x7xf32>, vector<7x512xf32>, vector<1x512xf32> -> vector<1x512xf32>
    %137 = vector.broadcast %6 : vector<1x1xf32> to vector<1x512xf32>
    %138 = arith.addf %136, %137 : vector<1x512xf32>
    %c0_53 = arith.constant 0 : index
    %c0_54 = arith.constant 0 : index
    %139 = arith.index_cast %110 : i32 to index
    %140 = vector.load %arg4[%c0_53, %c0_54, %139] : memref<1x1x4096xf32, #tpu.memory_space<vmem>>, vector<1x1x512xf32>
    %141 = vector.shape_cast %140 : vector<1x1x512xf32> to vector<1x512xf32>
    %142 = vector.shape_cast %138 : vector<1x512xf32> to vector<1x1x512xf32>
    tpu.vector_store %arg4[%c0_53, %c0_54, %139], %142 {strides = array<i32>} : memref<1x1x4096xf32, #tpu.memory_space<vmem>>, vector<1x1x512xf32>,
    %c4_i32 = arith.constant 4 : i32
    %c512_i32_55 = arith.constant 512 : i32
    %143 = arith.muli %c4_i32, %c512_i32_55 : i32
    %144 = tpu.assume_multiple %143, 512 : i32
    %c0_56 = arith.constant 0 : index
    %c0_57 = arith.constant 0 : index
    %145 = arith.index_cast %144 : i32 to index
    %146 = vector.load %arg3[%c0_56, %c0_57, %145] : memref<1x5x4096xf32, #tpu.memory_space<vmem>>, vector<1x5x512xf32>
    %147 = vector.shape_cast %146 : vector<1x5x512xf32> to vector<5x512xf32>
    %cst_58 = arith.constant dense<0.000000e+00> : vector<7x512xf32>
    %148 = tpu.matmul %1, %147, %cst_58 {dimension_numbers = #tpu.dot_dimension_numbers<[1], [0], [0], [1], [0, 0, 1, 1], [], []>} : vector<7x5xf32>, vector<5x512xf32>, vector<7x512xf32> -> vector<7x512xf32>
    %149 = vector.broadcast %2 : vector<7x1xf32> to vector<7x512xf32>
    %150 = arith.addf %148, %149 : vector<7x512xf32>
    %cst_59 = arith.constant 5.000000e-01 : f32
    %151 = vector.broadcast %cst_59 : f32 to vector<7x512xf32>
    %152 = arith.mulf %150, %151 : vector<7x512xf32>
    %cst_60 = arith.constant 0.707106769 : f32
    %153 = vector.broadcast %cst_60 : f32 to vector<7x512xf32>
    %154 = arith.mulf %150, %153 : vector<7x512xf32>
    %155 = math.erf %154 : vector<7x512xf32>
    %cst_61 = arith.constant 1.000000e+00 : f32
    %156 = vector.broadcast %cst_61 : f32 to vector<7x512xf32>
    %157 = arith.addf %155, %156 : vector<7x512xf32>
    %158 = arith.mulf %152, %157 : vector<7x512xf32>
    %cst_62 = arith.constant dense<0.000000e+00> : vector<7x512xf32>
    %159 = tpu.matmul %3, %158, %cst_62 {dimension_numbers = #tpu.dot_dimension_numbers<[1], [0], [0], [1], [0, 0, 1, 1], [], []>} : vector<7x7xf32>, vector<7x512xf32>, vector<7x512xf32> -> vector<7x512xf32>
    %160 = vector.broadcast %4 : vector<7x1xf32> to vector<7x512xf32>
    %161 = arith.addf %159, %160 : vector<7x512xf32>
    %cst_63 = arith.constant 5.000000e-01 : f32
    %162 = vector.broadcast %cst_63 : f32 to vector<7x512xf32>
    %163 = arith.mulf %161, %162 : vector<7x512xf32>
    %cst_64 = arith.constant 0.707106769 : f32
    %164 = vector.broadcast %cst_64 : f32 to vector<7x512xf32>
    %165 = arith.mulf %161, %164 : vector<7x512xf32>
    %166 = math.erf %165 : vector<7x512xf32>
    %cst_65 = arith.constant 1.000000e+00 : f32
    %167 = vector.broadcast %cst_65 : f32 to vector<7x512xf32>
    %168 = arith.addf %166, %167 : vector<7x512xf32>
    %169 = arith.mulf %163, %168 : vector<7x512xf32>
    %cst_66 = arith.constant dense<0.000000e+00> : vector<1x512xf32>
    %170 = tpu.matmul %5, %169, %cst_66 {dimension_numbers = #tpu.dot_dimension_numbers<[1], [0], [0], [1], [0, 0, 1, 1], [], []>} : vector<1x7xf32>, vector<7x512xf32>, vector<1x512xf32> -> vector<1x512xf32>
    %171 = vector.broadcast %6 : vector<1x1xf32> to vector<1x512xf32>
    %172 = arith.addf %170, %171 : vector<1x512xf32>
    %c0_67 = arith.constant 0 : index
    %c0_68 = arith.constant 0 : index
    %173 = arith.index_cast %144 : i32 to index
    %174 = vector.load %arg4[%c0_67, %c0_68, %173] : memref<1x1x4096xf32, #tpu.memory_space<vmem>>, vector<1x1x512xf32>
    %175 = vector.shape_cast %174 : vector<1x1x512xf32> to vector<1x512xf32>
    %176 = vector.shape_cast %172 : vector<1x512xf32> to vector<1x1x512xf32>
    tpu.vector_store %arg4[%c0_67, %c0_68, %173], %176 {strides = array<i32>} : memref<1x1x4096xf32, #tpu.memory_space<vmem>>, vector<1x1x512xf32>,
    %c5_i32 = arith.constant 5 : i32
    %c512_i32_69 = arith.constant 512 : i32
    %177 = arith.muli %c5_i32, %c512_i32_69 : i32
    %178 = tpu.assume_multiple %177, 512 : i32
    %c0_70 = arith.constant 0 : index
    %c0_71 = arith.constant 0 : index
    %179 = arith.index_cast %178 : i32 to index
    %180 = vector.load %arg3[%c0_70, %c0_71, %179] : memref<1x5x4096xf32, #tpu.memory_space<vmem>>, vector<1x5x512xf32>
    %181 = vector.shape_cast %180 : vector<1x5x512xf32> to vector<5x512xf32>
    %cst_72 = arith.constant dense<0.000000e+00> : vector<7x512xf32>
    %182 = tpu.matmul %1, %181, %cst_72 {dimension_numbers = #tpu.dot_dimension_numbers<[1], [0], [0], [1], [0, 0, 1, 1], [], []>} : vector<7x5xf32>, vector<5x512xf32>, vector<7x512xf32> -> vector<7x512xf32>
    %183 = vector.broadcast %2 : vector<7x1xf32> to vector<7x512xf32>
    %184 = arith.addf %182, %183 : vector<7x512xf32>
    %cst_73 = arith.constant 5.000000e-01 : f32
    %185 = vector.broadcast %cst_73 : f32 to vector<7x512xf32>
    %186 = arith.mulf %184, %185 : vector<7x512xf32>
    %cst_74 = arith.constant 0.707106769 : f32
    %187 = vector.broadcast %cst_74 : f32 to vector<7x512xf32>
    %188 = arith.mulf %184, %187 : vector<7x512xf32>
    %189 = math.erf %188 : vector<7x512xf32>
    %cst_75 = arith.constant 1.000000e+00 : f32
    %190 = vector.broadcast %cst_75 : f32 to vector<7x512xf32>
    %191 = arith.addf %189, %190 : vector<7x512xf32>
    %192 = arith.mulf %186, %191 : vector<7x512xf32>
    %cst_76 = arith.constant dense<0.000000e+00> : vector<7x512xf32>
    %193 = tpu.matmul %3, %192, %cst_76 {dimension_numbers = #tpu.dot_dimension_numbers<[1], [0], [0], [1], [0, 0, 1, 1], [], []>} : vector<7x7xf32>, vector<7x512xf32>, vector<7x512xf32> -> vector<7x512xf32>
    %194 = vector.broadcast %4 : vector<7x1xf32> to vector<7x512xf32>
    %195 = arith.addf %193, %194 : vector<7x512xf32>
    %cst_77 = arith.constant 5.000000e-01 : f32
    %196 = vector.broadcast %cst_77 : f32 to vector<7x512xf32>
    %197 = arith.mulf %195, %196 : vector<7x512xf32>
    %cst_78 = arith.constant 0.707106769 : f32
    %198 = vector.broadcast %cst_78 : f32 to vector<7x512xf32>
    %199 = arith.mulf %195, %198 : vector<7x512xf32>
    %200 = math.erf %199 : vector<7x512xf32>
    %cst_79 = arith.constant 1.000000e+00 : f32
    %201 = vector.broadcast %cst_79 : f32 to vector<7x512xf32>
    %202 = arith.addf %200, %201 : vector<7x512xf32>
    %203 = arith.mulf %197, %202 : vector<7x512xf32>
    %cst_80 = arith.constant dense<0.000000e+00> : vector<1x512xf32>
    %204 = tpu.matmul %5, %203, %cst_80 {dimension_numbers = #tpu.dot_dimension_numbers<[1], [0], [0], [1], [0, 0, 1, 1], [], []>} : vector<1x7xf32>, vector<7x512xf32>, vector<1x512xf32> -> vector<1x512xf32>
    %205 = vector.broadcast %6 : vector<1x1xf32> to vector<1x512xf32>
    %206 = arith.addf %204, %205 : vector<1x512xf32>
    %c0_81 = arith.constant 0 : index
    %c0_82 = arith.constant 0 : index
    %207 = arith.index_cast %178 : i32 to index
    %208 = vector.load %arg4[%c0_81, %c0_82, %207] : memref<1x1x4096xf32, #tpu.memory_space<vmem>>, vector<1x1x512xf32>
    %209 = vector.shape_cast %208 : vector<1x1x512xf32> to vector<1x512xf32>
    %210 = vector.shape_cast %206 : vector<1x512xf32> to vector<1x1x512xf32>
    tpu.vector_store %arg4[%c0_81, %c0_82, %207], %210 {strides = array<i32>} : memref<1x1x4096xf32, #tpu.memory_space<vmem>>, vector<1x1x512xf32>,
    %c6_i32 = arith.constant 6 : i32
    %c512_i32_83 = arith.constant 512 : i32
    %211 = arith.muli %c6_i32, %c512_i32_83 : i32
    %212 = tpu.assume_multiple %211, 512 : i32
    %c0_84 = arith.constant 0 : index
    %c0_85 = arith.constant 0 : index
    %213 = arith.index_cast %212 : i32 to index
    %214 = vector.load %arg3[%c0_84, %c0_85, %213] : memref<1x5x4096xf32, #tpu.memory_space<vmem>>, vector<1x5x512xf32>
    %215 = vector.shape_cast %214 : vector<1x5x512xf32> to vector<5x512xf32>
    %cst_86 = arith.constant dense<0.000000e+00> : vector<7x512xf32>
    %216 = tpu.matmul %1, %215, %cst_86 {dimension_numbers = #tpu.dot_dimension_numbers<[1], [0], [0], [1], [0, 0, 1, 1], [], []>} : vector<7x5xf32>, vector<5x512xf32>, vector<7x512xf32> -> vector<7x512xf32>
    %217 = vector.broadcast %2 : vector<7x1xf32> to vector<7x512xf32>
    %218 = arith.addf %216, %217 : vector<7x512xf32>
    %cst_87 = arith.constant 5.000000e-01 : f32
    %219 = vector.broadcast %cst_87 : f32 to vector<7x512xf32>
    %220 = arith.mulf %218, %219 : vector<7x512xf32>
    %cst_88 = arith.constant 0.707106769 : f32
    %221 = vector.broadcast %cst_88 : f32 to vector<7x512xf32>
    %222 = arith.mulf %218, %221 : vector<7x512xf32>
    %223 = math.erf %222 : vector<7x512xf32>
    %cst_89 = arith.constant 1.000000e+00 : f32
    %224 = vector.broadcast %cst_89 : f32 to vector<7x512xf32>
    %225 = arith.addf %223, %224 : vector<7x512xf32>
    %226 = arith.mulf %220, %225 : vector<7x512xf32>
    %cst_90 = arith.constant dense<0.000000e+00> : vector<7x512xf32>
    %227 = tpu.matmul %3, %226, %cst_90 {dimension_numbers = #tpu.dot_dimension_numbers<[1], [0], [0], [1], [0, 0, 1, 1], [], []>} : vector<7x7xf32>, vector<7x512xf32>, vector<7x512xf32> -> vector<7x512xf32>
    %228 = vector.broadcast %4 : vector<7x1xf32> to vector<7x512xf32>
    %229 = arith.addf %227, %228 : vector<7x512xf32>
    %cst_91 = arith.constant 5.000000e-01 : f32
    %230 = vector.broadcast %cst_91 : f32 to vector<7x512xf32>
    %231 = arith.mulf %229, %230 : vector<7x512xf32>
    %cst_92 = arith.constant 0.707106769 : f32
    %232 = vector.broadcast %cst_92 : f32 to vector<7x512xf32>
    %233 = arith.mulf %229, %232 : vector<7x512xf32>
    %234 = math.erf %233 : vector<7x512xf32>
    %cst_93 = arith.constant 1.000000e+00 : f32
    %235 = vector.broadcast %cst_93 : f32 to vector<7x512xf32>
    %236 = arith.addf %234, %235 : vector<7x512xf32>
    %237 = arith.mulf %231, %236 : vector<7x512xf32>
    %cst_94 = arith.constant dense<0.000000e+00> : vector<1x512xf32>
    %238 = tpu.matmul %5, %237, %cst_94 {dimension_numbers = #tpu.dot_dimension_numbers<[1], [0], [0], [1], [0, 0, 1, 1], [], []>} : vector<1x7xf32>, vector<7x512xf32>, vector<1x512xf32> -> vector<1x512xf32>
    %239 = vector.broadcast %6 : vector<1x1xf32> to vector<1x512xf32>
    %240 = arith.addf %238, %239 : vector<1x512xf32>
    %c0_95 = arith.constant 0 : index
    %c0_96 = arith.constant 0 : index
    %241 = arith.index_cast %212 : i32 to index
    %242 = vector.load %arg4[%c0_95, %c0_96, %241] : memref<1x1x4096xf32, #tpu.memory_space<vmem>>, vector<1x1x512xf32>
    %243 = vector.shape_cast %242 : vector<1x1x512xf32> to vector<1x512xf32>
    %244 = vector.shape_cast %240 : vector<1x512xf32> to vector<1x1x512xf32>
    tpu.vector_store %arg4[%c0_95, %c0_96, %241], %244 {strides = array<i32>} : memref<1x1x4096xf32, #tpu.memory_space<vmem>>, vector<1x1x512xf32>,
    %c7_i32 = arith.constant 7 : i32
    %c512_i32_97 = arith.constant 512 : i32
    %245 = arith.muli %c7_i32, %c512_i32_97 : i32
    %246 = tpu.assume_multiple %245, 512 : i32
    %c0_98 = arith.constant 0 : index
    %c0_99 = arith.constant 0 : index
    %247 = arith.index_cast %246 : i32 to index
    %248 = vector.load %arg3[%c0_98, %c0_99, %247] : memref<1x5x4096xf32, #tpu.memory_space<vmem>>, vector<1x5x512xf32>
    %249 = vector.shape_cast %248 : vector<1x5x512xf32> to vector<5x512xf32>
    %cst_100 = arith.constant dense<0.000000e+00> : vector<7x512xf32>
    %250 = tpu.matmul %1, %249, %cst_100 {dimension_numbers = #tpu.dot_dimension_numbers<[1], [0], [0], [1], [0, 0, 1, 1], [], []>} : vector<7x5xf32>, vector<5x512xf32>, vector<7x512xf32> -> vector<7x512xf32>
    %251 = vector.broadcast %2 : vector<7x1xf32> to vector<7x512xf32>
    %252 = arith.addf %250, %251 : vector<7x512xf32>
    %cst_101 = arith.constant 5.000000e-01 : f32
    %253 = vector.broadcast %cst_101 : f32 to vector<7x512xf32>
    %254 = arith.mulf %252, %253 : vector<7x512xf32>
    %cst_102 = arith.constant 0.707106769 : f32
    %255 = vector.broadcast %cst_102 : f32 to vector<7x512xf32>
    %256 = arith.mulf %252, %255 : vector<7x512xf32>
    %257 = math.erf %256 : vector<7x512xf32>
    %cst_103 = arith.constant 1.000000e+00 : f32
    %258 = vector.broadcast %cst_103 : f32 to vector<7x512xf32>
    %259 = arith.addf %257, %258 : vector<7x512xf32>
    %260 = arith.mulf %254, %259 : vector<7x512xf32>
    %cst_104 = arith.constant dense<0.000000e+00> : vector<7x512xf32>
    %261 = tpu.matmul %3, %260, %cst_104 {dimension_numbers = #tpu.dot_dimension_numbers<[1], [0], [0], [1], [0, 0, 1, 1], [], []>} : vector<7x7xf32>, vector<7x512xf32>, vector<7x512xf32> -> vector<7x512xf32>
    %262 = vector.broadcast %4 : vector<7x1xf32> to vector<7x512xf32>
    %263 = arith.addf %261, %262 : vector<7x512xf32>
    %cst_105 = arith.constant 5.000000e-01 : f32
    %264 = vector.broadcast %cst_105 : f32 to vector<7x512xf32>
    %265 = arith.mulf %263, %264 : vector<7x512xf32>
    %cst_106 = arith.constant 0.707106769 : f32
    %266 = vector.broadcast %cst_106 : f32 to vector<7x512xf32>
    %267 = arith.mulf %263, %266 : vector<7x512xf32>
    %268 = math.erf %267 : vector<7x512xf32>
    %cst_107 = arith.constant 1.000000e+00 : f32
    %269 = vector.broadcast %cst_107 : f32 to vector<7x512xf32>
    %270 = arith.addf %268, %269 : vector<7x512xf32>
    %271 = arith.mulf %265, %270 : vector<7x512xf32>
    %cst_108 = arith.constant dense<0.000000e+00> : vector<1x512xf32>
    %272 = tpu.matmul %5, %271, %cst_108 {dimension_numbers = #tpu.dot_dimension_numbers<[1], [0], [0], [1], [0, 0, 1, 1], [], []>} : vector<1x7xf32>, vector<7x512xf32>, vector<1x512xf32> -> vector<1x512xf32>
    %273 = vector.broadcast %6 : vector<1x1xf32> to vector<1x512xf32>
    %274 = arith.addf %272, %273 : vector<1x512xf32>
    %c0_109 = arith.constant 0 : index
    %c0_110 = arith.constant 0 : index
    %275 = arith.index_cast %246 : i32 to index
    %276 = vector.load %arg4[%c0_109, %c0_110, %275] : memref<1x1x4096xf32, #tpu.memory_space<vmem>>, vector<1x1x512xf32>
    %277 = vector.shape_cast %276 : vector<1x1x512xf32> to vector<1x512xf32>
    %278 = vector.shape_cast %274 : vector<1x512xf32> to vector<1x1x512xf32>
    tpu.vector_store %arg4[%c0_109, %c0_110, %275], %278 {strides = array<i32>} : memref<1x1x4096xf32, #tpu.memory_space<vmem>>, vector<1x1x512xf32>,
    %c8_i32 = arith.constant 8 : i32
    return
  }
  func.func @transform_0(%arg0: i32, %arg1: i32) -> (i32, i32) {
    %c0_i32 = arith.constant 0 : i32
    %c0_i32_0 = arith.constant 0 : i32
    %c0_i32_1 = arith.constant 0 : i32
    return %c0_i32, %c0_i32_0 : i32, i32
  }
  func.func @transform_1(%arg0: i32, %arg1: i32) -> (i32, i32, i32) {
    %c0_i32 = arith.constant 0 : i32
    %c0_i32_0 = arith.constant 0 : i32
    return %arg0, %c0_i32, %arg1 : i32, i32, i32
  }
  func.func @transform_2(%arg0: i32, %arg1: i32) -> (i32, i32, i32) {
    %c0_i32 = arith.constant 0 : i32
    %c0_i32_0 = arith.constant 0 : i32
    return %arg0, %c0_i32, %arg1 : i32, i32, i32
  }
}

</mosaic_0001>

<llo_original>
// kernel: model_forward.1
$region0: #{model_forward.1}
  #allocation0 [shape = 'u32[]', space=smem, size = 0x4, offset = 0x4, fixed_abs, tag = 'smem constant byte address 0x4 - core index']
  #allocation1 [shape = 'u32[144,128]{1,0:T(1,128)}', space=vmem, size = 0x12000, scoped, tag = 'internal scratch']
  %s0 = inlined_call_operand.vmem [shape: f32[8,22], index: 0, kind: input, shape index: {}]
  %s1 = inlined_call_operand.vmem [shape: f32[1,5,4096], index: 1, kind: input, shape index: {}]
  %s2 = inlined_call_operand.vmem [shape: f32[1,1,4096], index: 2, kind: output, shape index: {}]
  %s3 = sld [smem:[#allocation0]]
  $region18: #{model_forward.1} parent=0
    _
  %s5 = ssub.s32 1, %s3
  %s6 = scalar_select 0, %s5, %s3
  // Predicated region
  $region2: #{model_forward.1} parent=0 // pred_check
    _
  $region3: #{model_forward.1} parent=0 // pred_check_branch
    %8 = sbr.rel (0) target = $region5
  $region4: #{model_forward.1} parent=0 // pred_region
    _
  $region5: #{model_forward.1} parent=0 // pred_fallthru
    _
  // Predicated region
  $region6: #{model_forward.1} parent=0 // pred_check
    _
  $region7: #{model_forward.1} parent=0 // pred_check_branch
    %10 = sbr.rel (0) target = $region9
  $region8: #{model_forward.1} parent=0 // pred_region
    _
  $region9: #{model_forward.1} parent=0 // pred_fallthru
    _
  %v11 = vld [vmem:[%s0] sm:$0xff]
  %v12 = vld [vmem:[%s1] sm:$0x1f]
  %v13 = vld [vmem:[%s1 + $0x8] sm:$0x1f]
  %v14 = vld [vmem:[%s1 + $0x10] sm:$0x1f]
  %v15 = vld [vmem:[%s1 + $0x18] sm:$0x1f]
  %17 = vset.pattern.permute.xlu0 5
  %18 = vperm.xlu0 %17, %v11
  %v19 = vpop.permute.xlu0 %18
  %vm21 = vcmask 39936
  %v22 = vsel %vm21, %v11, 0
  %vm24 = vcmask 1044480
  %v26 = vsel %vm24, %v12, 0
  %v29 = vsel %vm24, %v13, 0
  %v32 = vsel %vm24, %v14, 0
  %v35 = vsel %vm24, %v15, 0
  %37 = vmatprep.subr.mxu0 %v29
  %38 = vmatpush1.msra.mxu0 %v26
  %39 = vmatprep.subr.mxu0 0.0
  %40 = vmatpush1.msra.mxu0 0.0
  %41 = vmatprep.subr.mxu0 0.0
  %42 = vmatpush1.msra.mxu0 0.0
  %43 = vmatprep.subr.mxu0 0.0
  %44 = vmatpush1.msra.mxu0 0.0
  %45 = vmatprep.subr.mxu0 0.0
  %46 = vmatpush1.msra.mxu0 0.0
  %47 = vmatprep.subr.mxu0 0.0
  %48 = vmatpush1.msra.mxu0 0.0
  %49 = vmatprep.subr.mxu0 0.0
  %50 = vmatpush1.msra.mxu0 0.0
  %51 = vmatprep.subr.mxu0 0.0
  %52 = vmatpush1.msra.mxu0 0.0
  %53 = vmatprep.subr.mxu0 0.0
  %54 = vmatpush1.msra.mxu0 0.0
  %55 = vmatprep.subr.mxu0 0.0
  %56 = vmatpush1.msra.mxu0 0.0
  %57 = vmatprep.subr.mxu0 0.0
  %58 = vmatpush1.msra.mxu0 0.0
  %59 = vmatprep.subr.mxu0 0.0
  %60 = vmatpush1.msra.mxu0 0.0
  %61 = vmatprep.subr.mxu0 0.0
  %62 = vmatpush1.msra.mxu0 0.0
  %63 = vmatprep.subr.mxu0 0.0
  %64 = vmatpush1.msra.mxu0 0.0
  %65 = vmatprep.subr.mxu0 0.0
  %66 = vmatpush1.msra.mxu0 0.0
  %67 = vmatprep.subr.mxu0 0.0
  %68 = vmatpush1.msra.mxu0 0.0
  %69 = vmatprep.subr.mxu0 0.0
  %70 = vmatpush1.msra.mxu0 0.0
  %71 = vmatprep.subr.mxu0 0.0
  %72 = vmatpush1.msra.mxu0 0.0
  %73 = vmatprep.subr.mxu0 0.0
  %74 = vmatpush1.msra.mxu0 0.0
  %75 = vmatprep.subr.mxu0 0.0
  %76 = vmatpush1.msra.mxu0 0.0
  %77 = vmatprep.subr.mxu0 0.0
  %78 = vmatpush1.msra.mxu0 0.0
  %79 = vmatprep.subr.mxu0 0.0
  %80 = vmatpush1.msra.mxu0 0.0
  %81 = vmatprep.subr.mxu0 0.0
  %82 = vmatpush1.msra.mxu0 0.0
  %83 = vmatprep.subr.mxu0 0.0
  %84 = vmatpush1.msra.mxu0 0.0
  %85 = vmatprep.subr.mxu0 0.0
  %86 = vmatpush1.msra.mxu0 0.0
  %87 = vmatprep.subr.mxu0 0.0
  %88 = vmatpush1.msra.mxu0 0.0
  %89 = vmatprep.subr.mxu0 0.0
  %90 = vmatpush1.msra.mxu0 0.0
  %91 = vmatprep.subr.mxu0 0.0
  %92 = vmatpush1.msra.mxu0 0.0
  %93 = vmatprep.subr.mxu0 0.0
  %94 = vmatpush1.msra.mxu0 0.0
  %95 = vmatprep.subr.mxu0 0.0
  %96 = vmatpush1.msra.mxu0 0.0
  %97 = vmatprep.subr.mxu0 0.0
  %98 = vmatpush1.msra.mxu0 0.0
  %99 = vmatprep.subr.mxu0 0.0
  %100 = vmatpush1.msra.mxu0 0.0
  %101 = vmatprep.mubr.f32.mxu0 0.0
  %102 = vmatmul.mubr.f32.gmra.mrb[0].mxu0 %v22
  %v103 = vpop.f32.mrb[0].mxu0
  %v104 = vadd.f32 %v19, %v103
  %v105 = vpop.f32.mrb[0].mxu0
  %v106 = vadd.f32 %v19, %v105
  %107 = vdwg.mxu0
  %108 = vmatprep.subr.mxu0 %v35
  %109 = vmatpush1.msra.mxu0 %v32
  %110 = vmatprep.subr.mxu0 0.0
  %111 = vmatpush1.msra.mxu0 0.0
  %112 = vmatprep.subr.mxu0 0.0
  %113 = vmatpush1.msra.mxu0 0.0
  %114 = vmatprep.subr.mxu0 0.0
  %115 = vmatpush1.msra.mxu0 0.0
  %116 = vmatprep.subr.mxu0 0.0
  %117 = vmatpush1.msra.mxu0 0.0
  %118 = vmatprep.subr.mxu0 0.0
  %119 = vmatpush1.msra.mxu0 0.0
  %120 = vmatprep.subr.mxu0 0.0
  %121 = vmatpush1.msra.mxu0 0.0
  %122 = vmatprep.subr.mxu0 0.0
  %123 = vmatpush1.msra.mxu0 0.0
  %124 = vmatprep.subr.mxu0 0.0
  %125 = vmatpush1.msra.mxu0 0.0
  %126 = vmatprep.subr.mxu0 0.0
  %127 = vmatpush1.msra.mxu0 0.0
  %128 = vmatprep.subr.mxu0 0.0
  %129 = vmatpush1.msra.mxu0 0.0
  %130 = vmatprep.subr.mxu0 0.0
  %131 = vmatpush1.msra.mxu0 0.0
  %132 = vmatprep.subr.mxu0 0.0
  %133 = vmatpush1.msra.mxu0 0.0
  %134 = vmatprep.subr.mxu0 0.0
  %135 = vmatpush1.msra.mxu0 0.0
  %136 = vmatprep.subr.mxu0 0.0
  %137 = vmatpush1.msra.mxu0 0.0
  %138 = vmatprep.subr.mxu0 0.0
  %139 = vmatpush1.msra.mxu0 0.0
  %140 = vmatprep.subr.mxu0 0.0
  %141 = vmatpush1.msra.mxu0 0.0
  %142 = vmatprep.subr.mxu0 0.0
  %143 = vmatpush1.msra.mxu0 0.0
  %144 = vmatprep.subr.mxu0 0.0
  %145 = vmatpush1.msra.mxu0 0.0
  %146 = vmatprep.subr.mxu0 0.0
  %147 = vmatpush1.msra.mxu0 0.0
  %148 = vmatprep.subr.mxu0 0.0
  %149 = vmatpush1.msra.mxu0 0.0
  %150 = vmatprep.subr.mxu0 0.0
  %151 = vmatpush1.msra.mxu0 0.0
  %152 = vmatprep.subr.mxu0 0.0
  %153 = vmatpush1.msra.mxu0 0.0
  %154 = vmatprep.subr.mxu0 0.0
  %155 = vmatpush1.msra.mxu0 0.0
  %156 = vmatprep.subr.mxu0 0.0
  %157 = vmatpush1.msra.mxu0 0.0
  %158 = vmatprep.subr.mxu0 0.0
  %159 = vmatpush1.msra.mxu0 0.0
  %160 = vmatprep.subr.mxu0 0.0
  %161 = vmatpush1.msra.mxu0 0.0
  %162 = vmatprep.subr.mxu0 0.0
  %163 = vmatpush1.msra.mxu0 0.0
  %164 = vmatprep.subr.mxu0 0.0
  %165 = vmatpush1.msra.mxu0 0.0
  %166 = vmatprep.subr.mxu0 0.0
  %167 = vmatpush1.msra.mxu0 0.0
  %168 = vmatprep.subr.mxu0 0.0
  %169 = vmatpush1.msra.mxu0 0.0
  %170 = vmatprep.subr.mxu0 0.0
  %171 = vmatpush1.msra.mxu0 0.0
  %172 = vmatprep.mubr.f32.mxu0 0.0
  %173 = vmatmul.mubr.f32.gmra.mrb[0].mxu0 %v22
  %v174 = vpop.f32.mrb[0].mxu0
  %v175 = vadd.f32 %v19, %v174
  %v176 = vpop.f32.mrb[0].mxu0
  %v177 = vadd.f32 %v19, %v176
  %178 = vdwg.mxu0
  %v179 = vmul.f32 %v104, 0.5
  %v180 = vmul.f32 %v106, 0.5
  %v181 = vmul.f32 %v175, 0.5
  %v182 = vmul.f32 %v177, 0.5
  %v183 = vmul.f32 %v104, 0.70710677
  %v184 = vmul.f32 %v106, 0.70710677
  %v185 = vmul.f32 %v175, 0.70710677
  %v186 = vmul.f32 %v177, 0.70710677
  %v187 = verf.f32.pop %v183
  %v188 = verf.f32.pop %v184
  %v189 = verf.f32.pop %v185
  %v190 = verf.f32.pop %v186
  %v191 = vadd.f32 %v187, 1.0
  %v192 = vadd.f32 %v188, 1.0
  %v193 = vadd.f32 %v189, 1.0
  %v194 = vadd.f32 %v190, 1.0
  %v195 = vmul.f32 %v179, %v191
  %v196 = vmul.f32 %v180, %v192
  %v197 = vmul.f32 %v181, %v193
  %v198 = vmul.f32 %v182, %v194
  %199 = vset.pattern.permute.xlu0 13
  %200 = vperm.xlu0 %199, %v11
  %v201 = vpop.permute.xlu0 %200
  %203 = vrot.lane.b32.xlu0 %v11, 122
  %v204 = vpop.permute.xlu0 %203
  %vm205 = vcmask 56320
  %v206 = vsel %vm205, %v204, 0
  %vm208 = vcmask 1046528
  %v210 = vsel %vm208, %v195, 0
  %v213 = vsel %vm208, %v196, 0
  %v216 = vsel %vm208, %v197, 0
  %v219 = vsel %vm208, %v198, 0
  %221 = vmatprep.subr.mxu0 %v213
  %222 = vmatpush1.msra.mxu0 %v210
  %223 = vmatprep.subr.mxu0 0.0
  %224 = vmatpush1.msra.mxu0 0.0
  %225 = vmatprep.subr.mxu0 0.0
  %226 = vmatpush1.msra.mxu0 0.0
  %227 = vmatprep.subr.mxu0 0.0
  %228 = vmatpush1.msra.mxu0 0.0
  %229 = vmatprep.subr.mxu0 0.0
  %230 = vmatpush1.msra.mxu0 0.0
  %231 = vmatprep.subr.mxu0 0.0
  %232 = vmatpush1.msra.mxu0 0.0
  %233 = vmatprep.subr.mxu0 0.0
  %234 = vmatpush1.msra.mxu0 0.0
  %235 = vmatprep.subr.mxu0 0.0
  %236 = vmatpush1.msra.mxu0 0.0
  %237 = vmatprep.subr.mxu0 0.0
  %238 = vmatpush1.msra.mxu0 0.0
  %239 = vmatprep.subr.mxu0 0.0
  %240 = vmatpush1.msra.mxu0 0.0
  %241 = vmatprep.subr.mxu0 0.0
  %242 = vmatpush1.msra.mxu0 0.0
  %243 = vmatprep.subr.mxu0 0.0
  %244 = vmatpush1.msra.mxu0 0.0
  %245 = vmatprep.subr.mxu0 0.0
  %246 = vmatpush1.msra.mxu0 0.0
  %247 = vmatprep.subr.mxu0 0.0
  %248 = vmatpush1.msra.mxu0 0.0
  %249 = vmatprep.subr.mxu0 0.0
  %250 = vmatpush1.msra.mxu0 0.0
  %251 = vmatprep.subr.mxu0 0.0
  %252 = vmatpush1.msra.mxu0 0.0
  %253 = vmatprep.subr.mxu0 0.0
  %254 = vmatpush1.msra.mxu0 0.0
  %255 = vmatprep.subr.mxu0 0.0
  %256 = vmatpush1.msra.mxu0 0.0
  %257 = vmatprep.subr.mxu0 0.0
  %258 = vmatpush1.msra.mxu0 0.0
  %259 = vmatprep.subr.mxu0 0.0
  %260 = vmatpush1.msra.mxu0 0.0
  %261 = vmatprep.subr.mxu0 0.0
  %262 = vmatpush1.msra.mxu0 0.0
  %263 = vmatprep.subr.mxu0 0.0
  %264 = vmatpush1.msra.mxu0 0.0
  %265 = vmatprep.subr.mxu0 0.0
  %266 = vmatpush1.msra.mxu0 0.0
  %267 = vmatprep.subr.mxu0 0.0
  %268 = vmatpush1.msra.mxu0 0.0
  %269 = vmatprep.subr.mxu0 0.0
  %270 = vmatpush1.msra.mxu0 0.0
  %271 = vmatprep.subr.mxu0 0.0
  %272 = vmatpush1.msra.mxu0 0.0
  %273 = vmatprep.subr.mxu0 0.0
  %274 = vmatpush1.msra.mxu0 0.0
  %275 = vmatprep.subr.mxu0 0.0
  %276 = vmatpush1.msra.mxu0 0.0
  %277 = vmatprep.subr.mxu0 0.0
  %278 = vmatpush1.msra.mxu0 0.0
  %279 = vmatprep.subr.mxu0 0.0
  %280 = vmatpush1.msra.mxu0 0.0
  %281 = vmatprep.subr.mxu0 0.0
  %282 = vmatpush1.msra.mxu0 0.0
  %283 = vmatprep.subr.mxu0 0.0
  %284 = vmatpush1.msra.mxu0 0.0
  %285 = vmatprep.mubr.f32.mxu0 0.0
  %286 = vmatmul.mubr.f32.gmra.mrb[0].mxu0 %v206
  %v287 = vpop.f32.mrb[0].mxu0
  %v288 = vadd.f32 %v201, %v287
  %v289 = vpop.f32.mrb[0].mxu0
  %v290 = vadd.f32 %v201, %v289
  %291 = vdwg.mxu0
  %292 = vmatprep.subr.mxu0 %v219
  %293 = vmatpush1.msra.mxu0 %v216
  %294 = vmatprep.subr.mxu0 0.0
  %295 = vmatpush1.msra.mxu0 0.0
  %296 = vmatprep.subr.mxu0 0.0
  %297 = vmatpush1.msra.mxu0 0.0
  %298 = vmatprep.subr.mxu0 0.0
  %299 = vmatpush1.msra.mxu0 0.0
  %300 = vmatprep.subr.mxu0 0.0
  %301 = vmatpush1.msra.mxu0 0.0
  %302 = vmatprep.subr.mxu0 0.0
  %303 = vmatpush1.msra.mxu0 0.0
  %304 = vmatprep.subr.mxu0 0.0
  %305 = vmatpush1.msra.mxu0 0.0
  %306 = vmatprep.subr.mxu0 0.0
  %307 = vmatpush1.msra.mxu0 0.0
  %308 = vmatprep.subr.mxu0 0.0
  %309 = vmatpush1.msra.mxu0 0.0
  %310 = vmatprep.subr.mxu0 0.0
  %311 = vmatpush1.msra.mxu0 0.0
  %312 = vmatprep.subr.mxu0 0.0
  %313 = vmatpush1.msra.mxu0 0.0
  %314 = vmatprep.subr.mxu0 0.0
  %315 = vmatpush1.msra.mxu0 0.0
  %316 = vmatprep.subr.mxu0 0.0
  %317 = vmatpush1.msra.mxu0 0.0
  %318 = vmatprep.subr.mxu0 0.0
  %319 = vmatpush1.msra.mxu0 0.0
  %320 = vmatprep.subr.mxu0 0.0
  %321 = vmatpush1.msra.mxu0 0.0
  %322 = vmatprep.subr.mxu0 0.0
  %323 = vmatpush1.msra.mxu0 0.0
  %324 = vmatprep.subr.mxu0 0.0
  %325 = vmatpush1.msra.mxu0 0.0
  %326 = vmatprep.subr.mxu0 0.0
  %327 = vmatpush1.msra.mxu0 0.0
  %328 = vmatprep.subr.mxu0 0.0
  %329 = vmatpush1.msra.mxu0 0.0
  %330 = vmatprep.subr.mxu0 0.0
  %331 = vmatpush1.msra.mxu0 0.0
  %332 = vmatprep.subr.mxu0 0.0
  %333 = vmatpush1.msra.mxu0 0.0
  %334 = vmatprep.subr.mxu0 0.0
  %335 = vmatpush1.msra.mxu0 0.0
  %336 = vmatprep.subr.mxu0 0.0
  %337 = vmatpush1.msra.mxu0 0.0
  %338 = vmatprep.subr.mxu0 0.0
  %339 = vmatpush1.msra.mxu0 0.0
  %340 = vmatprep.subr.mxu0 0.0
  %341 = vmatpush1.msra.mxu0 0.0
  %342 = vmatprep.subr.mxu0 0.0
  %343 = vmatpush1.msra.mxu0 0.0
  %344 = vmatprep.subr.mxu0 0.0
  %345 = vmatpush1.msra.mxu0 0.0
  %346 = vmatprep.subr.mxu0 0.0
  %347 = vmatpush1.msra.mxu0 0.0
  %348 = vmatprep.subr.mxu0 0.0
  %349 = vmatpush1.msra.mxu0 0.0
  %350 = vmatprep.subr.mxu0 0.0
  %351 = vmatpush1.msra.mxu0 0.0
  %352 = vmatprep.subr.mxu0 0.0
  %353 = vmatpush1.msra.mxu0 0.0
  %354 = vmatprep.subr.mxu0 0.0
  %355 = vmatpush1.msra.mxu0 0.0
  %356 = vmatprep.mubr.f32.mxu0 0.0
  %357 = vmatmul.mubr.f32.gmra.mrb[0].mxu0 %v206
  %v358 = vpop.f32.mrb[0].mxu0
  %v359 = vadd.f32 %v201, %v358
  %v360 = vpop.f32.mrb[0].mxu0
  %v361 = vadd.f32 %v201, %v360
  %362 = vdwg.mxu0
  %v363 = vmul.f32 %v288, 0.5
  %v364 = vmul.f32 %v290, 0.5
  %v365 = vmul.f32 %v359, 0.5
  %v366 = vmul.f32 %v361, 0.5
  %v367 = vmul.f32 %v288, 0.70710677
  %v368 = vmul.f32 %v290, 0.70710677
  %v369 = vmul.f32 %v359, 0.70710677
  %v370 = vmul.f32 %v361, 0.70710677
  %v371 = verf.f32.pop %v367
  %v372 = verf.f32.pop %v368
  %v373 = verf.f32.pop %v369
  %v374 = verf.f32.pop %v370
  %v375 = vadd.f32 %v371, 1.0
  %v376 = vadd.f32 %v372, 1.0
  %v377 = vadd.f32 %v373, 1.0
  %v378 = vadd.f32 %v374, 1.0
  %v379 = vmul.f32 %v363, %v375
  %v380 = vmul.f32 %v364, %v376
  %v381 = vmul.f32 %v365, %v377
  %v382 = vmul.f32 %v366, %v378
  %383 = vset.pattern.permute.xlu0 21
  %384 = vperm.xlu0 %383, %v11
  %v385 = vpop.permute.xlu0 %384
  %387 = vrot.lane.b32.xlu0 %v11, 114
  %v388 = vpop.permute.xlu0 %387
  %v389 = vsel %vm205, %v388, 0
  %v392 = vsel %vm208, %v379, 0
  %v395 = vsel %vm208, %v380, 0
  %v398 = vsel %vm208, %v381, 0
  %v401 = vsel %vm208, %v382, 0
  %403 = vmatprep.subr.mxu0 %v395
  %404 = vmatpush1.msra.mxu0 %v392
  %405 = vmatprep.subr.mxu0 0.0
  %406 = vmatpush1.msra.mxu0 0.0
  %407 = vmatprep.subr.mxu0 0.0
  %408 = vmatpush1.msra.mxu0 0.0
  %409 = vmatprep.subr.mxu0 0.0
  %410 = vmatpush1.msra.mxu0 0.0
  %411 = vmatprep.subr.mxu0 0.0
  %412 = vmatpush1.msra.mxu0 0.0
  %413 = vmatprep.subr.mxu0 0.0
  %414 = vmatpush1.msra.mxu0 0.0
  %415 = vmatprep.subr.mxu0 0.0
  %416 = vmatpush1.msra.mxu0 0.0
  %417 = vmatprep.subr.mxu0 0.0
  %418 = vmatpush1.msra.mxu0 0.0
  %419 = vmatprep.subr.mxu0 0.0
  %420 = vmatpush1.msra.mxu0 0.0
  %421 = vmatprep.subr.mxu0 0.0
  %422 = vmatpush1.msra.mxu0 0.0
  %423 = vmatprep.subr.mxu0 0.0
  %424 = vmatpush1.msra.mxu0 0.0
  %425 = vmatprep.subr.mxu0 0.0
  %426 = vmatpush1.msra.mxu0 0.0
  %427 = vmatprep.subr.mxu0 0.0
  %428 = vmatpush1.msra.mxu0 0.0
  %429 = vmatprep.subr.mxu0 0.0
  %430 = vmatpush1.msra.mxu0 0.0
  %431 = vmatprep.subr.mxu0 0.0
  %432 = vmatpush1.msra.mxu0 0.0
  %433 = vmatprep.subr.mxu0 0.0
  %434 = vmatpush1.msra.mxu0 0.0
  %435 = vmatprep.subr.mxu0 0.0
  %436 = vmatpush1.msra.mxu0 0.0
  %437 = vmatprep.subr.mxu0 0.0
  %438 = vmatpush1.msra.mxu0 0.0
  %439 = vmatprep.subr.mxu0 0.0
  %440 = vmatpush1.msra.mxu0 0.0
  %441 = vmatprep.subr.mxu0 0.0
  %442 = vmatpush1.msra.mxu0 0.0
  %443 = vmatprep.subr.mxu0 0.0
  %444 = vmatpush1.msra.mxu0 0.0
  %445 = vmatprep.subr.mxu0 0.0
  %446 = vmatpush1.msra.mxu0 0.0
  %447 = vmatprep.subr.mxu0 0.0
  %448 = vmatpush1.msra.mxu0 0.0
  %449 = vmatprep.subr.mxu0 0.0
  %450 = vmatpush1.msra.mxu0 0.0
  %451 = vmatprep.subr.mxu0 0.0
  %452 = vmatpush1.msra.mxu0 0.0
  %453 = vmatprep.subr.mxu0 0.0
  %454 = vmatpush1.msra.mxu0 0.0
  %455 = vmatprep.subr.mxu0 0.0
  %456 = vmatpush1.msra.mxu0 0.0
  %457 = vmatprep.subr.mxu0 0.0
  %458 = vmatpush1.msra.mxu0 0.0
  %459 = vmatprep.subr.mxu0 0.0
  %460 = vmatpush1.msra.mxu0 0.0
  %461 = vmatprep.subr.mxu0 0.0
  %462 = vmatpush1.msra.mxu0 0.0
  %463 = vmatprep.subr.mxu0 0.0
  %464 = vmatpush1.msra.mxu0 0.0
  %465 = vmatprep.subr.mxu0 0.0
  %466 = vmatpush1.msra.mxu0 0.0
  %467 = vmatprep.mubr.f32.mxu0 0.0
  %468 = vmatmul.mubr.f32.gmra.mrb[0].mxu0 %v389
  %v469 = vpop.f32.mrb[0].mxu0
  %v470 = vadd.f32 %v385, %v469
  %v471 = vpop.f32.mrb[0].mxu0
  %v472 = vadd.f32 %v385, %v471
  %473 = vdwg.mxu0
  %474 = vmatprep.subr.mxu0 %v401
  %475 = vmatpush1.msra.mxu0 %v398
  %476 = vmatprep.subr.mxu0 0.0
  %477 = vmatpush1.msra.mxu0 0.0
  %478 = vmatprep.subr.mxu0 0.0
  %479 = vmatpush1.msra.mxu0 0.0
  %480 = vmatprep.subr.mxu0 0.0
  %481 = vmatpush1.msra.mxu0 0.0
  %482 = vmatprep.subr.mxu0 0.0
  %483 = vmatpush1.msra.mxu0 0.0
  %484 = vmatprep.subr.mxu0 0.0
  %485 = vmatpush1.msra.mxu0 0.0
  %486 = vmatprep.subr.mxu0 0.0
  %487 = vmatpush1.msra.mxu0 0.0
  %488 = vmatprep.subr.mxu0 0.0
  %489 = vmatpush1.msra.mxu0 0.0
  %490 = vmatprep.subr.mxu0 0.0
  %491 = vmatpush1.msra.mxu0 0.0
  %492 = vmatprep.subr.mxu0 0.0
  %493 = vmatpush1.msra.mxu0 0.0
  %494 = vmatprep.subr.mxu0 0.0
  %495 = vmatpush1.msra.mxu0 0.0
  %496 = vmatprep.subr.mxu0 0.0
  %497 = vmatpush1.msra.mxu0 0.0
  %498 = vmatprep.subr.mxu0 0.0
  %499 = vmatpush1.msra.mxu0 0.0
  %500 = vmatprep.subr.mxu0 0.0
  %501 = vmatpush1.msra.mxu0 0.0
  %502 = vmatprep.subr.mxu0 0.0
  %503 = vmatpush1.msra.mxu0 0.0
  %504 = vmatprep.subr.mxu0 0.0
  %505 = vmatpush1.msra.mxu0 0.0
  %506 = vmatprep.subr.mxu0 0.0
  %507 = vmatpush1.msra.mxu0 0.0
  %508 = vmatprep.subr.mxu0 0.0
  %509 = vmatpush1.msra.mxu0 0.0
  %510 = vmatprep.subr.mxu0 0.0
  %511 = vmatpush1.msra.mxu0 0.0
  %512 = vmatprep.subr.mxu0 0.0
  %513 = vmatpush1.msra.mxu0 0.0
  %514 = vmatprep.subr.mxu0 0.0
  %515 = vmatpush1.msra.mxu0 0.0
  %516 = vmatprep.subr.mxu0 0.0
  %517 = vmatpush1.msra.mxu0 0.0
  %518 = vmatprep.subr.mxu0 0.0
  %519 = vmatpush1.msra.mxu0 0.0
  %520 = vmatprep.subr.mxu0 0.0
  %521 = vmatpush1.msra.mxu0 0.0
  %522 = vmatprep.subr.mxu0 0.0
  %523 = vmatpush1.msra.mxu0 0.0
  %524 = vmatprep.subr.mxu0 0.0
  %525 = vmatpush1.msra.mxu0 0.0
  %526 = vmatprep.subr.mxu0 0.0
  %527 = vmatpush1.msra.mxu0 0.0
  %528 = vmatprep.subr.mxu0 0.0
  %529 = vmatpush1.msra.mxu0 0.0
  %530 = vmatprep.subr.mxu0 0.0
  %531 = vmatpush1.msra.mxu0 0.0
  %532 = vmatprep.subr.mxu0 0.0
  %533 = vmatpush1.msra.mxu0 0.0
  %534 = vmatprep.subr.mxu0 0.0
  %535 = vmatpush1.msra.mxu0 0.0
  %536 = vmatprep.subr.mxu0 0.0
  %537 = vmatpush1.msra.mxu0 0.0
  %538 = vmatprep.mubr.f32.mxu0 0.0
  %539 = vmatmul.mubr.f32.gmra.mrb[0].mxu0 %v389
  %v540 = vpop.f32.mrb[0].mxu0
  %v541 = vadd.f32 %v385, %v540
  %v542 = vpop.f32.mrb[0].mxu0
  %v543 = vadd.f32 %v385, %v542
  %544 = vdwg.mxu0
  %v549 = vcombine.low %v470, %v472
  %v550 = vcombine.low %v541, %v543
  %v552 = vunpack.c.l.s4 1966171168
  %v553 = vunpack.c.0.s8 %v552
  %v554 = vlaneseq
  %v555 = vshrl.u32 %v554, 7
  %v556 = vsub.s32 %v553, %v555
  %v557 = vrot.slane %v549, %v556
  %v559 = vunpack.c.l.s4 1966171168
  %v560 = vunpack.c.0.s8 %v559
  %v561 = vlaneseq
  %v562 = vshrl.u32 %v561, 7
  %v563 = vsub.s32 %v560, %v562
  %v564 = vrot.slane %v550, %v563
  %v565 = vcombine.low %v557, %v564
  %v567 = vunpack.c.l.s4 1966171168
  %v568 = vunpack.c.0.s8 %v567
  %v569 = vlaneseq
  %v570 = vshrl.u32 %v569, 7
  %v571 = vsub.s32 %v568, %v570
  %v572 = vrot.slane %v565, %v571
  %v574 = vlaneseq
  %vm575 = vcmp.ge.s32.totalorder %v574, 0
  %vm576 = vcmp.lt.s32.totalorder %v574, 512
  %vm577 = vmand %vm575, %vm576
  %578 = vst.msk [vmem:[%s2] sm:$0xf] %vm577, %v572
  %s579 = scalar_lea.vmem %s1, 32
  %v580 = vld [vmem:[%s579] sm:$0x1f]
  %v581 = vld [vmem:[%s579 + $0x8] sm:$0x1f]
  %v582 = vld [vmem:[%s579 + $0x10] sm:$0x1f]
  %v583 = vld [vmem:[%s579 + $0x18] sm:$0x1f]
  %v585 = vsel %vm24, %v580, 0
  %v588 = vsel %vm24, %v581, 0
  %v591 = vsel %vm24, %v582, 0
  %v594 = vsel %vm24, %v583, 0
  %596 = vmatprep.subr.mxu0 %v588
  %597 = vmatpush1.msra.mxu0 %v585
  %598 = vmatprep.subr.mxu0 0.0
  %599 = vmatpush1.msra.mxu0 0.0
  %600 = vmatprep.subr.mxu0 0.0
  %601 = vmatpush1.msra.mxu0 0.0
  %602 = vmatprep.subr.mxu0 0.0
  %603 = vmatpush1.msra.mxu0 0.0
  %604 = vmatprep.subr.mxu0 0.0
  %605 = vmatpush1.msra.mxu0 0.0
  %606 = vmatprep.subr.mxu0 0.0
  %607 = vmatpush1.msra.mxu0 0.0
  %608 = vmatprep.subr.mxu0 0.0
  %609 = vmatpush1.msra.mxu0 0.0
  %610 = vmatprep.subr.mxu0 0.0
  %611 = vmatpush1.msra.mxu0 0.0
  %612 = vmatprep.subr.mxu0 0.0
  %613 = vmatpush1.msra.mxu0 0.0
  %614 = vmatprep.subr.mxu0 0.0
  %615 = vmatpush1.msra.mxu0 0.0
  %616 = vmatprep.subr.mxu0 0.0
  %617 = vmatpush1.msra.mxu0 0.0
  %618 = vmatprep.subr.mxu0 0.0
  %619 = vmatpush1.msra.mxu0 0.0
  %620 = vmatprep.subr.mxu0 0.0
  %621 = vmatpush1.msra.mxu0 0.0
  %622 = vmatprep.subr.mxu0 0.0
  %623 = vmatpush1.msra.mxu0 0.0
  %624 = vmatprep.subr.mxu0 0.0
  %625 = vmatpush1.msra.mxu0 0.0
  %626 = vmatprep.subr.mxu0 0.0
  %627 = vmatpush1.msra.mxu0 0.0
  %628 = vmatprep.subr.mxu0 0.0
  %629 = vmatpush1.msra.mxu0 0.0
  %630 = vmatprep.subr.mxu0 0.0
  %631 = vmatpush1.msra.mxu0 0.0
  %632 = vmatprep.subr.mxu0 0.0
  %633 = vmatpush1.msra.mxu0 0.0
  %634 = vmatprep.subr.mxu0 0.0
  %635 = vmatpush1.msra.mxu0 0.0
  %636 = vmatprep.subr.mxu0 0.0
  %637 = vmatpush1.msra.mxu0 0.0
  %638 = vmatprep.subr.mxu0 0.0
  %639 = vmatpush1.msra.mxu0 0.0
  %640 = vmatprep.subr.mxu0 0.0
  %641 = vmatpush1.msra.mxu0 0.0
  %642 = vmatprep.subr.mxu0 0.0
  %643 = vmatpush1.msra.mxu0 0.0
  %644 = vmatprep.subr.mxu0 0.0
  %645 = vmatpush1.msra.mxu0 0.0
  %646 = vmatprep.subr.mxu0 0.0
  %647 = vmatpush1.msra.mxu0 0.0
  %648 = vmatprep.subr.mxu0 0.0
  %649 = vmatpush1.msra.mxu0 0.0
  %650 = vmatprep.subr.mxu0 0.0
  %651 = vmatpush1.msra.mxu0 0.0
  %652 = vmatprep.subr.mxu0 0.0
  %653 = vmatpush1.msra.mxu0 0.0
  %654 = vmatprep.subr.mxu0 0.0
  %655 = vmatpush1.msra.mxu0 0.0
  %656 = vmatprep.subr.mxu0 0.0
  %657 = vmatpush1.msra.mxu0 0.0
  %658 = vmatprep.subr.mxu0 0.0
  %659 = vmatpush1.msra.mxu0 0.0
  %660 = vmatprep.mubr.f32.mxu0 0.0
  %661 = vmatmul.mubr.f32.gmra.mrb[0].mxu0 %v22
  %v662 = vpop.f32.mrb[0].mxu0
  %v663 = vadd.f32 %v19, %v662
  %v664 = vpop.f32.mrb[0].mxu0
  %v665 = vadd.f32 %v19, %v664
  %666 = vdwg.mxu0
  %667 = vmatprep.subr.mxu0 %v594
  %668 = vmatpush1.msra.mxu0 %v591
  %669 = vmatprep.subr.mxu0 0.0
  %670 = vmatpush1.msra.mxu0 0.0
  %671 = vmatprep.subr.mxu0 0.0
  %672 = vmatpush1.msra.mxu0 0.0
  %673 = vmatprep.subr.mxu0 0.0
  %674 = vmatpush1.msra.mxu0 0.0
  %675 = vmatprep.subr.mxu0 0.0
  %676 = vmatpush1.msra.mxu0 0.0
  %677 = vmatprep.subr.mxu0 0.0
  %678 = vmatpush1.msra.mxu0 0.0
  %679 = vmatprep.subr.mxu0 0.0
  %680 = vmatpush1.msra.mxu0 0.0
  %681 = vmatprep.subr.mxu0 0.0
  %682 = vmatpush1.msra.mxu0 0.0
  %683 = vmatprep.subr.mxu0 0.0
  %684 = vmatpush1.msra.mxu0 0.0
  %685 = vmatprep.subr.mxu0 0.0
  %686 = vmatpush1.msra.mxu0 0.0
  %687 = vmatprep.subr.mxu0 0.0
  %688 = vmatpush1.msra.mxu0 0.0
  %689 = vmatprep.subr.mxu0 0.0
  %690 = vmatpush1.msra.mxu0 0.0
  %691 = vmatprep.subr.mxu0 0.0
  %692 = vmatpush1.msra.mxu0 0.0
  %693 = vmatprep.subr.mxu0 0.0
  %694 = vmatpush1.msra.mxu0 0.0
  %695 = vmatprep.subr.mxu0 0.0
  %696 = vmatpush1.msra.mxu0 0.0
  %697 = vmatprep.subr.mxu0 0.0
  %698 = vmatpush1.msra.mxu0 0.0
  %699 = vmatprep.subr.mxu0 0.0
  %700 = vmatpush1.msra.mxu0 0.0
  %701 = vmatprep.subr.mxu0 0.0
  %702 = vmatpush1.msra.mxu0 0.0
  %703 = vmatprep.subr.mxu0 0.0
  %704 = vmatpush1.msra.mxu0 0.0
  %705 = vmatprep.subr.mxu0 0.0
  %706 = vmatpush1.msra.mxu0 0.0
  %707 = vmatprep.subr.mxu0 0.0
  %708 = vmatpush1.msra.mxu0 0.0
  %709 = vmatprep.subr.mxu0 0.0
  %710 = vmatpush1.msra.mxu0 0.0
  %711 = vmatprep.subr.mxu0 0.0
  %712 = vmatpush1.msra.mxu0 0.0
  %713 = vmatprep.subr.mxu0 0.0
  %714 = vmatpush1.msra.mxu0 0.0
  %715 = vmatprep.subr.mxu0 0.0
  %716 = vmatpush1.msra.mxu0 0.0
  %717 = vmatprep.subr.mxu0 0.0
  %718 = vmatpush1.msra.mxu0 0.0
  %719 = vmatprep.subr.mxu0 0.0
  %720 = vmatpush1.msra.mxu0 0.0
  %721 = vmatprep.subr.mxu0 0.0
  %722 = vmatpush1.msra.mxu0 0.0
  %723 = vmatprep.subr.mxu0 0.0
  %724 = vmatpush1.msra.mxu0 0.0
  %725 = vmatprep.subr.mxu0 0.0
  %726 = vmatpush1.msra.mxu0 0.0
  %727 = vmatprep.subr.mxu0 0.0
  %728 = vmatpush1.msra.mxu0 0.0
  %729 = vmatprep.subr.mxu0 0.0
  %730 = vmatpush1.msra.mxu0 0.0
  %731 = vmatprep.mubr.f32.mxu0 0.0
  %732 = vmatmul.mubr.f32.gmra.mrb[0].mxu0 %v22
  %v733 = vpop.f32.mrb[0].mxu0
  %v734 = vadd.f32 %v19, %v733
  %v735 = vpop.f32.mrb[0].mxu0
  %v736 = vadd.f32 %v19, %v735
  %737 = vdwg.mxu0
  %v738 = vmul.f32 %v663, 0.5
  %v739 = vmul.f32 %v665, 0.5
  %v740 = vmul.f32 %v734, 0.5
  %v741 = vmul.f32 %v736, 0.5
  %v742 = vmul.f32 %v663, 0.70710677
  %v743 = vmul.f32 %v665, 0.70710677
  %v744 = vmul.f32 %v734, 0.70710677
  %v745 = vmul.f32 %v736, 0.70710677
  %v746 = verf.f32.pop %v742
  %v747 = verf.f32.pop %v743
  %v748 = verf.f32.pop %v744
  %v749 = verf.f32.pop %v745
  %v750 = vadd.f32 %v746, 1.0
  %v751 = vadd.f32 %v747, 1.0
  %v752 = vadd.f32 %v748, 1.0
  %v753 = vadd.f32 %v749, 1.0
  %v754 = vmul.f32 %v738, %v750
  %v755 = vmul.f32 %v739, %v751
  %v756 = vmul.f32 %v740, %v752
  %v757 = vmul.f32 %v741, %v753
  %v759 = vsel %vm208, %v754, 0
  %v762 = vsel %vm208, %v755, 0
  %v765 = vsel %vm208, %v756, 0
  %v768 = vsel %vm208, %v757, 0
  %770 = vmatprep.subr.mxu0 %v762
  %771 = vmatpush1.msra.mxu0 %v759
  %772 = vmatprep.subr.mxu0 0.0
  %773 = vmatpush1.msra.mxu0 0.0
  %774 = vmatprep.subr.mxu0 0.0
  %775 = vmatpush1.msra.mxu0 0.0
  %776 = vmatprep.subr.mxu0 0.0
  %777 = vmatpush1.msra.mxu0 0.0
  %778 = vmatprep.subr.mxu0 0.0
  %779 = vmatpush1.msra.mxu0 0.0
  %780 = vmatprep.subr.mxu0 0.0
  %781 = vmatpush1.msra.mxu0 0.0
  %782 = vmatprep.subr.mxu0 0.0
  %783 = vmatpush1.msra.mxu0 0.0
  %784 = vmatprep.subr.mxu0 0.0
  %785 = vmatpush1.msra.mxu0 0.0
  %786 = vmatprep.subr.mxu0 0.0
  %787 = vmatpush1.msra.mxu0 0.0
  %788 = vmatprep.subr.mxu0 0.0
  %789 = vmatpush1.msra.mxu0 0.0
  %790 = vmatprep.subr.mxu0 0.0
  %791 = vmatpush1.msra.mxu0 0.0
  %792 = vmatprep.subr.mxu0 0.0
  %793 = vmatpush1.msra.mxu0 0.0
  %794 = vmatprep.subr.mxu0 0.0
  %795 = vmatpush1.msra.mxu0 0.0
  %796 = vmatprep.subr.mxu0 0.0
  %797 = vmatpush1.msra.mxu0 0.0
  %798 = vmatprep.subr.mxu0 0.0
  %799 = vmatpush1.msra.mxu0 0.0
  %800 = vmatprep.subr.mxu0 0.0
  %801 = vmatpush1.msra.mxu0 0.0
  %802 = vmatprep.subr.mxu0 0.0
  %803 = vmatpush1.msra.mxu0 0.0
  %804 = vmatprep.subr.mxu0 0.0
  %805 = vmatpush1.msra.mxu0 0.0
  %806 = vmatprep.subr.mxu0 0.0
  %807 = vmatpush1.msra.mxu0 0.0
  %808 = vmatprep.subr.mxu0 0.0
  %809 = vmatpush1.msra.mxu0 0.0
  %810 = vmatprep.subr.mxu0 0.0
  %811 = vmatpush1.msra.mxu0 0.0
  %812 = vmatprep.subr.mxu0 0.0
  %813 = vmatpush1.msra.mxu0 0.0
  %814 = vmatprep.subr.mxu0 0.0
  %815 = vmatpush1.msra.mxu0 0.0
  %816 = vmatprep.subr.mxu0 0.0
  %817 = vmatpush1.msra.mxu0 0.0
  %818 = vmatprep.subr.mxu0 0.0
  %819 = vmatpush1.msra.mxu0 0.0
  %820 = vmatprep.subr.mxu0 0.0
  %821 = vmatpush1.msra.mxu0 0.0
  %822 = vmatprep.subr.mxu0 0.0
  %823 = vmatpush1.msra.mxu0 0.0
  %824 = vmatprep.subr.mxu0 0.0
  %825 = vmatpush1.msra.mxu0 0.0
  %826 = vmatprep.subr.mxu0 0.0
  %827 = vmatpush1.msra.mxu0 0.0
  %828 = vmatprep.subr.mxu0 0.0
  %829 = vmatpush1.msra.mxu0 0.0
  %830 = vmatprep.subr.mxu0 0.0
  %831 = vmatpush1.msra.mxu0 0.0
  %832 = vmatprep.subr.mxu0 0.0
  %833 = vmatpush1.msra.mxu0 0.0
  %834 = vmatprep.mubr.f32.mxu0 0.0
  %835 = vmatmul.mubr.f32.gmra.mrb[0].mxu0 %v206
  %v836 = vpop.f32.mrb[0].mxu0
  %v837 = vadd.f32 %v201, %v836
  %v838 = vpop.f32.mrb[0].mxu0
  %v839 = vadd.f32 %v201, %v838
  %840 = vdwg.mxu0
  %841 = vmatprep.subr.mxu0 %v768
  %842 = vmatpush1.msra.mxu0 %v765
  %843 = vmatprep.subr.mxu0 0.0
  %844 = vmatpush1.msra.mxu0 0.0
  %845 = vmatprep.subr.mxu0 0.0
  %846 = vmatpush1.msra.mxu0 0.0
  %847 = vmatprep.subr.mxu0 0.0
  %848 = vmatpush1.msra.mxu0 0.0
  %849 = vmatprep.subr.mxu0 0.0
  %850 = vmatpush1.msra.mxu0 0.0
  %851 = vmatprep.subr.mxu0 0.0
  %852 = vmatpush1.msra.mxu0 0.0
  %853 = vmatprep.subr.mxu0 0.0
  %854 = vmatpush1.msra.mxu0 0.0
  %855 = vmatprep.subr.mxu0 0.0
  %856 = vmatpush1.msra.mxu0 0.0
  %857 = vmatprep.subr.mxu0 0.0
  %858 = vmatpush1.msra.mxu0 0.0
  %859 = vmatprep.subr.mxu0 0.0
  %860 = vmatpush1.msra.mxu0 0.0
  %861 = vmatprep.subr.mxu0 0.0
  %862 = vmatpush1.msra.mxu0 0.0
  %863 = vmatprep.subr.mxu0 0.0
  %864 = vmatpush1.msra.mxu0 0.0
  %865 = vmatprep.subr.mxu0 0.0
  %866 = vmatpush1.msra.mxu0 0.0
  %867 = vmatprep.subr.mxu0 0.0
  %868 = vmatpush1.msra.mxu0 0.0
  %869 = vmatprep.subr.mxu0 0.0
  %870 = vmatpush1.msra.mxu0 0.0
  %871 = vmatprep.subr.mxu0 0.0
  %872 = vmatpush1.msra.mxu0 0.0
  %873 = vmatprep.subr.mxu0 0.0
  %874 = vmatpush1.msra.mxu0 0.0
  %875 = vmatprep.subr.mxu0 0.0
  %876 = vmatpush1.msra.mxu0 0.0
  %877 = vmatprep.subr.mxu0 0.0
  %878 = vmatpush1.msra.mxu0 0.0
  %879 = vmatprep.subr.mxu0 0.0
  %880 = vmatpush1.msra.mxu0 0.0
  %881 = vmatprep.subr.mxu0 0.0
  %882 = vmatpush1.msra.mxu0 0.0
  %883 = vmatprep.subr.mxu0 0.0
  %884 = vmatpush1.msra.mxu0 0.0
  %885 = vmatprep.subr.mxu0 0.0
  %886 = vmatpush1.msra.mxu0 0.0
  %887 = vmatprep.subr.mxu0 0.0
  %888 = vmatpush1.msra.mxu0 0.0
  %889 = vmatprep.subr.mxu0 0.0
  %890 = vmatpush1.msra.mxu0 0.0
  %891 = vmatprep.subr.mxu0 0.0
  %892 = vmatpush1.msra.mxu0 0.0
  %893 = vmatprep.subr.mxu0 0.0
  %894 = vmatpush1.msra.mxu0 0.0
  %895 = vmatprep.subr.mxu0 0.0
  %896 = vmatpush1.msra.mxu0 0.0
  %897 = vmatprep.subr.mxu0 0.0
  %898 = vmatpush1.msra.mxu0 0.0
  %899 = vmatprep.subr.mxu0 0.0
  %900 = vmatpush1.msra.mxu0 0.0
  %901 = vmatprep.subr.mxu0 0.0
  %902 = vmatpush1.msra.mxu0 0.0
  %903 = vmatprep.subr.mxu0 0.0
  %904 = vmatpush1.msra.mxu0 0.0
  %905 = vmatprep.mubr.f32.mxu0 0.0
  %906 = vmatmul.mubr.f32.gmra.mrb[0].mxu0 %v206
  %v907 = vpop.f32.mrb[0].mxu0
  %v908 = vadd.f32 %v201, %v907
  %v909 = vpop.f32.mrb[0].mxu0
  %v910 = vadd.f32 %v201, %v909
  %911 = vdwg.mxu0
  %v912 = vmul.f32 %v837, 0.5
  %v913 = vmul.f32 %v839, 0.5
  %v914 = vmul.f32 %v908, 0.5
  %v915 = vmul.f32 %v910, 0.5
  %v916 = vmul.f32 %v837, 0.70710677
  %v917 = vmul.f32 %v839, 0.70710677
  %v918 = vmul.f32 %v908, 0.70710677
  %v919 = vmul.f32 %v910, 0.70710677
  %v920 = verf.f32.pop %v916
  %v921 = verf.f32.pop %v917
  %v922 = verf.f32.pop %v918
  %v923 = verf.f32.pop %v919
  %v924 = vadd.f32 %v920, 1.0
  %v925 = vadd.f32 %v921, 1.0
  %v926 = vadd.f32 %v922, 1.0
  %v927 = vadd.f32 %v923, 1.0
  %v928 = vmul.f32 %v912, %v924
  %v929 = vmul.f32 %v913, %v925
  %v930 = vmul.f32 %v914, %v926
  %v931 = vmul.f32 %v915, %v927
  %v933 = vsel %vm208, %v928, 0
  %v936 = vsel %vm208, %v929, 0
  %v939 = vsel %vm208, %v930, 0
  %v942 = vsel %vm208, %v931, 0
  %944 = vmatprep.subr.mxu0 %v936
  %945 = vmatpush1.msra.mxu0 %v933
  %946 = vmatprep.subr.mxu0 0.0
  %947 = vmatpush1.msra.mxu0 0.0
  %948 = vmatprep.subr.mxu0 0.0
  %949 = vmatpush1.msra.mxu0 0.0
  %950 = vmatprep.subr.mxu0 0.0
  %951 = vmatpush1.msra.mxu0 0.0
  %952 = vmatprep.subr.mxu0 0.0
  %953 = vmatpush1.msra.mxu0 0.0
  %954 = vmatprep.subr.mxu0 0.0
  %955 = vmatpush1.msra.mxu0 0.0
  %956 = vmatprep.subr.mxu0 0.0
  %957 = vmatpush1.msra.mxu0 0.0
  %958 = vmatprep.subr.mxu0 0.0
  %959 = vmatpush1.msra.mxu0 0.0
  %960 = vmatprep.subr.mxu0 0.0
  %961 = vmatpush1.msra.mxu0 0.0
  %962 = vmatprep.subr.mxu0 0.0
  %963 = vmatpush1.msra.mxu0 0.0
  %964 = vmatprep.subr.mxu0 0.0
  %965 = vmatpush1.msra.mxu0 0.0
  %966 = vmatprep.subr.mxu0 0.0
  %967 = vmatpush1.msra.mxu0 0.0
  %968 = vmatprep.subr.mxu0 0.0
  %969 = vmatpush1.msra.mxu0 0.0
  %970 = vmatprep.subr.mxu0 0.0
  %971 = vmatpush1.msra.mxu0 0.0
  %972 = vmatprep.subr.mxu0 0.0
  %973 = vmatpush1.msra.mxu0 0.0
  %974 = vmatprep.subr.mxu0 0.0
  %975 = vmatpush1.msra.mxu0 0.0
  %976 = vmatprep.subr.mxu0 0.0
  %977 = vmatpush1.msra.mxu0 0.0
  %978 = vmatprep.subr.mxu0 0.0
  %979 = vmatpush1.msra.mxu0 0.0
  %980 = vmatprep.subr.mxu0 0.0
  %981 = vmatpush1.msra.mxu0 0.0
  %982 = vmatprep.subr.mxu0 0.0
  %983 = vmatpush1.msra.mxu0 0.0
  %984 = vmatprep.subr.mxu0 0.0
  %985 = vmatpush1.msra.mxu0 0.0
  %986 = vmatprep.subr.mxu0 0.0
  %987 = vmatpush1.msra.mxu0 0.0
  %988 = vmatprep.subr.mxu0 0.0
  %989 = vmatpush1.msra.mxu0 0.0
  %990 = vmatprep.subr.mxu0 0.0
  %991 = vmatpush1.msra.mxu0 0.0
  %992 = vmatprep.subr.mxu0 0.0
  %993 = vmatpush1.msra.mxu0 0.0
  %994 = vmatprep.subr.mxu0 0.0
  %995 = vmatpush1.msra.mxu0 0.0
  %996 = vmatprep.subr.mxu0 0.0
  %997 = vmatpush1.msra.mxu0 0.0
  %998 = vmatprep.subr.mxu0 0.0
  %999 = vmatpush1.msra.mxu0 0.0
  %1000 = vmatprep.subr.mxu0 0.0
  %1001 = vmatpush1.msra.mxu0 0.0
  %1002 = vmatprep.subr.mxu0 0.0
  %1003 = vmatpush1.msra.mxu0 0.0
  %1004 = vmatprep.subr.mxu0 0.0
  %1005 = vmatpush1.msra.mxu0 0.0
  %1006 = vmatprep.subr.mxu0 0.0
  %1007 = vmatpush1.msra.mxu0 0.0
  %1008 = vmatprep.mubr.f32.mxu0 0.0
  %1009 = vmatmul.mubr.f32.gmra.mrb[0].mxu0 %v389
  %v1010 = vpop.f32.mrb[0].mxu0
  %v1011 = vadd.f32 %v385, %v1010
  %v1012 = vpop.f32.mrb[0].mxu0
  %v1013 = vadd.f32 %v385, %v1012
  %1014 = vdwg.mxu0
  %1015 = vmatprep.subr.mxu0 %v942
  %1016 = vmatpush1.msra.mxu0 %v939
  %1017 = vmatprep.subr.mxu0 0.0
  %1018 = vmatpush1.msra.mxu0 0.0
  %1019 = vmatprep.subr.mxu0 0.0
  %1020 = vmatpush1.msra.mxu0 0.0
  %1021 = vmatprep.subr.mxu0 0.0
  %1022 = vmatpush1.msra.mxu0 0.0
  %1023 = vmatprep.subr.mxu0 0.0
  %1024 = vmatpush1.msra.mxu0 0.0
  %1025 = vmatprep.subr.mxu0 0.0
  %1026 = vmatpush1.msra.mxu0 0.0
  %1027 = vmatprep.subr.mxu0 0.0
  %1028 = vmatpush1.msra.mxu0 0.0
  %1029 = vmatprep.subr.mxu0 0.0
  %1030 = vmatpush1.msra.mxu0 0.0
  %1031 = vmatprep.subr.mxu0 0.0
  %1032 = vmatpush1.msra.mxu0 0.0
  %1033 = vmatprep.subr.mxu0 0.0
  %1034 = vmatpush1.msra.mxu0 0.0
  %1035 = vmatprep.subr.mxu0 0.0
  %1036 = vmatpush1.msra.mxu0 0.0
  %1037 = vmatprep.subr.mxu0 0.0
  %1038 = vmatpush1.msra.mxu0 0.0
  %1039 = vmatprep.subr.mxu0 0.0
  %1040 = vmatpush1.msra.mxu0 0.0
  %1041 = vmatprep.subr.mxu0 0.0
  %1042 = vmatpush1.msra.mxu0 0.0
  %1043 = vmatprep.subr.mxu0 0.0
  %1044 = vmatpush1.msra.mxu0 0.0
  %1045 = vmatprep.subr.mxu0 0.0
  %1046 = vmatpush1.msra.mxu0 0.0
  %1047 = vmatprep.subr.mxu0 0.0
  %1048 = vmatpush1.msra.mxu0 0.0
  %1049 = vmatprep.subr.mxu0 0.0
  %1050 = vmatpush1.msra.mxu0 0.0
  %1051 = vmatprep.subr.mxu0 0.0
  %1052 = vmatpush1.msra.mxu0 0.0
  %1053 = vmatprep.subr.mxu0 0.0
  %1054 = vmatpush1.msra.mxu0 0.0
  %1055 = vmatprep.subr.mxu0 0.0
  %1056 = vmatpush1.msra.mxu0 0.0
  %1057 = vmatprep.subr.mxu0 0.0
  %1058 = vmatpush1.msra.mxu0 0.0
  %1059 = vmatprep.subr.mxu0 0.0
  %1060 = vmatpush1.msra.mxu0 0.0
  %1061 = vmatprep.subr.mxu0 0.0
  %1062 = vmatpush1.msra.mxu0 0.0
  %1063 = vmatprep.subr.mxu0 0.0
  %1064 = vmatpush1.msra.mxu0 0.0
  %1065 = vmatprep.subr.mxu0 0.0
  %1066 = vmatpush1.msra.mxu0 0.0
  %1067 = vmatprep.subr.mxu0 0.0
  %1068 = vmatpush1.msra.mxu0 0.0
  %1069 = vmatprep.subr.mxu0 0.0
  %1070 = vmatpush1.msra.mxu0 0.0
  %1071 = vmatprep.subr.mxu0 0.0
  %1072 = vmatpush1.msra.mxu0 0.0
  %1073 = vmatprep.subr.mxu0 0.0
  %1074 = vmatpush1.msra.mxu0 0.0
  %1075 = vmatprep.subr.mxu0 0.0
  %1076 = vmatpush1.msra.mxu0 0.0
  %1077 = vmatprep.subr.mxu0 0.0
  %1078 = vmatpush1.msra.mxu0 0.0
  %1079 = vmatprep.mubr.f32.mxu0 0.0
  %1080 = vmatmul.mubr.f32.gmra.mrb[0].mxu0 %v389
  %v1081 = vpop.f32.mrb[0].mxu0
  %v1082 = vadd.f32 %v385, %v1081
  %v1083 = vpop.f32.mrb[0].mxu0
  %v1084 = vadd.f32 %v385, %v1083
  %1085 = vdwg.mxu0
  %v1090 = vcombine.low %v1011, %v1013
  %v1091 = vcombine.low %v1082, %v1084
  %v1093 = vunpack.c.l.s4 1966171168
  %v1094 = vunpack.c.0.s8 %v1093
  %v1095 = vlaneseq
  %v1096 = vshrl.u32 %v1095, 7
  %v1097 = vsub.s32 %v1094, %v1096
  %v1098 = vrot.slane %v1090, %v1097
  %v1100 = vunpack.c.l.s4 1966171168
  %v1101 = vunpack.c.0.s8 %v1100
  %v1102 = vlaneseq
  %v1103 = vshrl.u32 %v1102, 7
  %v1104 = vsub.s32 %v1101, %v1103
  %v1105 = vrot.slane %v1091, %v1104
  %v1106 = vcombine.low %v1098, %v1105
  %v1108 = vunpack.c.l.s4 1966171168
  %v1109 = vunpack.c.0.s8 %v1108
  %v1110 = vlaneseq
  %v1111 = vshrl.u32 %v1110, 7
  %v1112 = vsub.s32 %v1109, %v1111
  %v1113 = vrot.slane %v1106, %v1112
  %s1115 = scalar_lea.vmem %s2, 4
  %1116 = vst.msk [vmem:[%s1115] sm:$0xf] %vm577, %v1113
  %s1117 = scalar_lea.vmem %s1, 64
  %v1118 = vld [vmem:[%s1117] sm:$0x1f]
  %v1119 = vld [vmem:[%s1117 + $0x8] sm:$0x1f]
  %v1120 = vld [vmem:[%s1117 + $0x10] sm:$0x1f]
  %v1121 = vld [vmem:[%s1117 + $0x18] sm:$0x1f]
  %v1123 = vsel %vm24, %v1118, 0
  %v1126 = vsel %vm24, %v1119, 0
  %v1129 = vsel %vm24, %v1120, 0
  %v1132 = vsel %vm24, %v1121, 0
  %1134 = vmatprep.subr.mxu0 %v1126
  %1135 = vmatpush1.msra.mxu0 %v1123
  %1136 = vmatprep.subr.mxu0 0.0
  %1137 = vmatpush1.msra.mxu0 0.0
  %1138 = vmatprep.subr.mxu0 0.0
  %1139 = vmatpush1.msra.mxu0 0.0
  %1140 = vmatprep.subr.mxu0 0.0
  %1141 = vmatpush1.msra.mxu0 0.0
  %1142 = vmatprep.subr.mxu0 0.0
  %1143 = vmatpush1.msra.mxu0 0.0
  %1144 = vmatprep.subr.mxu0 0.0
  %1145 = vmatpush1.msra.mxu0 0.0
  %1146 = vmatprep.subr.mxu0 0.0
  %1147 = vmatpush1.msra.mxu0 0.0
  %1148 = vmatprep.subr.mxu0 0.0
  %1149 = vmatpush1.msra.mxu0 0.0
  %1150 = vmatprep.subr.mxu0 0.0
  %1151 = vmatpush1.msra.mxu0 0.0
  %1152 = vmatprep.subr.mxu0 0.0
  %1153 = vmatpush1.msra.mxu0 0.0
  %1154 = vmatprep.subr.mxu0 0.0
  %1155 = vmatpush1.msra.mxu0 0.0
  %1156 = vmatprep.subr.mxu0 0.0
  %1157 = vmatpush1.msra.mxu0 0.0
  %1158 = vmatprep.subr.mxu0 0.0
  %1159 = vmatpush1.msra.mxu0 0.0
  %1160 = vmatprep.subr.mxu0 0.0
  %1161 = vmatpush1.msra.mxu0 0.0
  %1162 = vmatprep.subr.mxu0 0.0
  %1163 = vmatpush1.msra.mxu0 0.0
  %1164 = vmatprep.subr.mxu0 0.0
  %1165 = vmatpush1.msra.mxu0 0.0
  %1166 = vmatprep.subr.mxu0 0.0
  %1167 = vmatpush1.msra.mxu0 0.0
  %1168 = vmatprep.subr.mxu0 0.0
  %1169 = vmatpush1.msra.mxu0 0.0
  %1170 = vmatprep.subr.mxu0 0.0
  %1171 = vmatpush1.msra.mxu0 0.0
  %1172 = vmatprep.subr.mxu0 0.0
  %1173 = vmatpush1.msra.mxu0 0.0
  %1174 = vmatprep.subr.mxu0 0.0
  %1175 = vmatpush1.msra.mxu0 0.0
  %1176 = vmatprep.subr.mxu0 0.0
  %1177 = vmatpush1.msra.mxu0 0.0
  %1178 = vmatprep.subr.mxu0 0.0
  %1179 = vmatpush1.msra.mxu0 0.0
  %1180 = vmatprep.subr.mxu0 0.0
  %1181 = vmatpush1.msra.mxu0 0.0
  %1182 = vmatprep.subr.mxu0 0.0
  %1183 = vmatpush1.msra.mxu0 0.0
  %1184 = vmatprep.subr.mxu0 0.0
  %1185 = vmatpush1.msra.mxu0 0.0
  %1186 = vmatprep.subr.mxu0 0.0
  %1187 = vmatpush1.msra.mxu0 0.0
  %1188 = vmatprep.subr.mxu0 0.0
  %1189 = vmatpush1.msra.mxu0 0.0
  %1190 = vmatprep.subr.mxu0 0.0
  %1191 = vmatpush1.msra.mxu0 0.0
  %1192 = vmatprep.subr.mxu0 0.0
  %1193 = vmatpush1.msra.mxu0 0.0
  %1194 = vmatprep.subr.mxu0 0.0
  %1195 = vmatpush1.msra.mxu0 0.0
  %1196 = vmatprep.subr.mxu0 0.0
  %1197 = vmatpush1.msra.mxu0 0.0
  %1198 = vmatprep.mubr.f32.mxu0 0.0
  %1199 = vmatmul.mubr.f32.gmra.mrb[0].mxu0 %v22
  %v1200 = vpop.f32.mrb[0].mxu0
  %v1201 = vadd.f32 %v19, %v1200
  %v1202 = vpop.f32.mrb[0].mxu0
  %v1203 = vadd.f32 %v19, %v1202
  %1204 = vdwg.mxu0
  %1205 = vmatprep.subr.mxu0 %v1132
  %1206 = vmatpush1.msra.mxu0 %v1129
  %1207 = vmatprep.subr.mxu0 0.0
  %1208 = vmatpush1.msra.mxu0 0.0
  %1209 = vmatprep.subr.mxu0 0.0
  %1210 = vmatpush1.msra.mxu0 0.0
  %1211 = vmatprep.subr.mxu0 0.0
  %1212 = vmatpush1.msra.mxu0 0.0
  %1213 = vmatprep.subr.mxu0 0.0
  %1214 = vmatpush1.msra.mxu0 0.0
  %1215 = vmatprep.subr.mxu0 0.0
  %1216 = vmatpush1.msra.mxu0 0.0
  %1217 = vmatprep.subr.mxu0 0.0
  %1218 = vmatpush1.msra.mxu0 0.0
  %1219 = vmatprep.subr.mxu0 0.0
  %1220 = vmatpush1.msra.mxu0 0.0
  %1221 = vmatprep.subr.mxu0 0.0
  %1222 = vmatpush1.msra.mxu0 0.0
  %1223 = vmatprep.subr.mxu0 0.0
  %1224 = vmatpush1.msra.mxu0 0.0
  %1225 = vmatprep.subr.mxu0 0.0
  %1226 = vmatpush1.msra.mxu0 0.0
  %1227 = vmatprep.subr.mxu0 0.0
  %1228 = vmatpush1.msra.mxu0 0.0
  %1229 = vmatprep.subr.mxu0 0.0
  %1230 = vmatpush1.msra.mxu0 0.0
  %1231 = vmatprep.subr.mxu0 0.0
  %1232 = vmatpush1.msra.mxu0 0.0
  %1233 = vmatprep.subr.mxu0 0.0
  %1234 = vmatpush1.msra.mxu0 0.0
  %1235 = vmatprep.subr.mxu0 0.0
  %1236 = vmatpush1.msra.mxu0 0.0
  %1237 = vmatprep.subr.mxu0 0.0
  %1238 = vmatpush1.msra.mxu0 0.0
  %1239 = vmatprep.subr.mxu0 0.0
  %1240 = vmatpush1.msra.mxu0 0.0
  %1241 = vmatprep.subr.mxu0 0.0
  %1242 = vmatpush1.msra.mxu0 0.0
  %1243 = vmatprep.subr.mxu0 0.0
  %1244 = vmatpush1.msra.mxu0 0.0
  %1245 = vmatprep.subr.mxu0 0.0
  %1246 = vmatpush1.msra.mxu0 0.0
  %1247 = vmatprep.subr.mxu0 0.0
  %1248 = vmatpush1.msra.mxu0 0.0
  %1249 = vmatprep.subr.mxu0 0.0
  %1250 = vmatpush1.msra.mxu0 0.0
  %1251 = vmatprep.subr.mxu0 0.0
  %1252 = vmatpush1.msra.mxu0 0.0
  %1253 = vmatprep.subr.mxu0 0.0
  %1254 = vmatpush1.msra.mxu0 0.0
  %1255 = vmatprep.subr.mxu0 0.0
  %1256 = vmatpush1.msra.mxu0 0.0
  %1257 = vmatprep.subr.mxu0 0.0
  %1258 = vmatpush1.msra.mxu0 0.0
  %1259 = vmatprep.subr.mxu0 0.0
  %1260 = vmatpush1.msra.mxu0 0.0
  %1261 = vmatprep.subr.mxu0 0.0
  %1262 = vmatpush1.msra.mxu0 0.0
  %1263 = vmatprep.subr.mxu0 0.0
  %1264 = vmatpush1.msra.mxu0 0.0
  %1265 = vmatprep.subr.mxu0 0.0
  %1266 = vmatpush1.msra.mxu0 0.0
  %1267 = vmatprep.subr.mxu0 0.0
  %1268 = vmatpush1.msra.mxu0 0.0
  %1269 = vmatprep.mubr.f32.mxu0 0.0
  %1270 = vmatmul.mubr.f32.gmra.mrb[0].mxu0 %v22
  %v1271 = vpop.f32.mrb[0].mxu0
  %v1272 = vadd.f32 %v19, %v1271
  %v1273 = vpop.f32.mrb[0].mxu0
  %v1274 = vadd.f32 %v19, %v1273
  %1275 = vdwg.mxu0
  %v1276 = vmul.f32 %v1201, 0.5
  %v1277 = vmul.f32 %v1203, 0.5
  %v1278 = vmul.f32 %v1272, 0.5
  %v1279 = vmul.f32 %v1274, 0.5
  %v1280 = vmul.f32 %v1201, 0.70710677
  %v1281 = vmul.f32 %v1203, 0.70710677
  %v1282 = vmul.f32 %v1272, 0.70710677
  %v1283 = vmul.f32 %v1274, 0.70710677
  %v1284 = verf.f32.pop %v1280
  %v1285 = verf.f32.pop %v1281
  %v1286 = verf.f32.pop %v1282
  %v1287 = verf.f32.pop %v1283
  %v1288 = vadd.f32 %v1284, 1.0
  %v1289 = vadd.f32 %v1285, 1.0
  %v1290 = vadd.f32 %v1286, 1.0
  %v1291 = vadd.f32 %v1287, 1.0
  %v1292 = vmul.f32 %v1276, %v1288
  %v1293 = vmul.f32 %v1277, %v1289
  %v1294 = vmul.f32 %v1278, %v1290
  %v1295 = vmul.f32 %v1279, %v1291
  %v1297 = vsel %vm208, %v1292, 0
  %v1300 = vsel %vm208, %v1293, 0
  %v1303 = vsel %vm208, %v1294, 0
  %v1306 = vsel %vm208, %v1295, 0
  %1308 = vmatprep.subr.mxu0 %v1300
  %1309 = vmatpush1.msra.mxu0 %v1297
  %1310 = vmatprep.subr.mxu0 0.0
  %1311 = vmatpush1.msra.mxu0 0.0
  %1312 = vmatprep.subr.mxu0 0.0
  %1313 = vmatpush1.msra.mxu0 0.0
  %1314 = vmatprep.subr.mxu0 0.0
  %1315 = vmatpush1.msra.mxu0 0.0
  %1316 = vmatprep.subr.mxu0 0.0
  %1317 = vmatpush1.msra.mxu0 0.0
  %1318 = vmatprep.subr.mxu0 0.0
  %1319 = vmatpush1.msra.mxu0 0.0
  %1320 = vmatprep.subr.mxu0 0.0
  %1321 = vmatpush1.msra.mxu0 0.0
  %1322 = vmatprep.subr.mxu0 0.0
  %1323 = vmatpush1.msra.mxu0 0.0
  %1324 = vmatprep.subr.mxu0 0.0
  %1325 = vmatpush1.msra.mxu0 0.0
  %1326 = vmatprep.subr.mxu0 0.0
  %1327 = vmatpush1.msra.mxu0 0.0
  %1328 = vmatprep.subr.mxu0 0.0
  %1329 = vmatpush1.msra.mxu0 0.0
  %1330 = vmatprep.subr.mxu0 0.0
  %1331 = vmatpush1.msra.mxu0 0.0
  %1332 = vmatprep.subr.mxu0 0.0
  %1333 = vmatpush1.msra.mxu0 0.0
  %1334 = vmatprep.subr.mxu0 0.0
  %1335 = vmatpush1.msra.mxu0 0.0
  %1336 = vmatprep.subr.mxu0 0.0
  %1337 = vmatpush1.msra.mxu0 0.0
  %1338 = vmatprep.subr.mxu0 0.0
  %1339 = vmatpush1.msra.mxu0 0.0
  %1340 = vmatprep.subr.mxu0 0.0
  %1341 = vmatpush1.msra.mxu0 0.0
  %1342 = vmatprep.subr.mxu0 0.0
  %1343 = vmatpush1.msra.mxu0 0.0
  %1344 = vmatprep.subr.mxu0 0.0
  %1345 = vmatpush1.msra.mxu0 0.0
  %1346 = vmatprep.subr.mxu0 0.0
  %1347 = vmatpush1.msra.mxu0 0.0
  %1348 = vmatprep.subr.mxu0 0.0
  %1349 = vmatpush1.msra.mxu0 0.0
  %1350 = vmatprep.subr.mxu0 0.0
  %1351 = vmatpush1.msra.mxu0 0.0
  %1352 = vmatprep.subr.mxu0 0.0
  %1353 = vmatpush1.msra.mxu0 0.0
  %1354 = vmatprep.subr.mxu0 0.0
  %1355 = vmatpush1.msra.mxu0 0.0
  %1356 = vmatprep.subr.mxu0 0.0
  %1357 = vmatpush1.msra.mxu0 0.0
  %1358 = vmatprep.subr.mxu0 0.0
  %1359 = vmatpush1.msra.mxu0 0.0
  %1360 = vmatprep.subr.mxu0 0.0
  %1361 = vmatpush1.msra.mxu0 0.0
  %1362 = vmatprep.subr.mxu0 0.0
  %1363 = vmatpush1.msra.mxu0 0.0
  %1364 = vmatprep.subr.mxu0 0.0
  %1365 = vmatpush1.msra.mxu0 0.0
  %1366 = vmatprep.subr.mxu0 0.0
  %1367 = vmatpush1.msra.mxu0 0.0
  %1368 = vmatprep.subr.mxu0 0.0
  %1369 = vmatpush1.msra.mxu0 0.0
  %1370 = vmatprep.subr.mxu0 0.0
  %1371 = vmatpush1.msra.mxu0 0.0
  %1372 = vmatprep.mubr.f32.mxu0 0.0
  %1373 = vmatmul.mubr.f32.gmra.mrb[0].mxu0 %v206
  %v1374 = vpop.f32.mrb[0].mxu0
  %v1375 = vadd.f32 %v201, %v1374
  %v1376 = vpop.f32.mrb[0].mxu0
  %v1377 = vadd.f32 %v201, %v1376
  %1378 = vdwg.mxu0
  %1379 = vmatprep.subr.mxu0 %v1306
  %1380 = vmatpush1.msra.mxu0 %v1303
  %1381 = vmatprep.subr.mxu0 0.0
  %1382 = vmatpush1.msra.mxu0 0.0
  %1383 = vmatprep.subr.mxu0 0.0
  %1384 = vmatpush1.msra.mxu0 0.0
  %1385 = vmatprep.subr.mxu0 0.0
  %1386 = vmatpush1.msra.mxu0 0.0
  %1387 = vmatprep.subr.mxu0 0.0
  %1388 = vmatpush1.msra.mxu0 0.0
  %1389 = vmatprep.subr.mxu0 0.0
  %1390 = vmatpush1.msra.mxu0 0.0
  %1391 = vmatprep.subr.mxu0 0.0
  %1392 = vmatpush1.msra.mxu0 0.0
  %1393 = vmatprep.subr.mxu0 0.0
  %1394 = vmatpush1.msra.mxu0 0.0
  %1395 = vmatprep.subr.mxu0 0.0
  %1396 = vmatpush1.msra.mxu0 0.0
  %1397 = vmatprep.subr.mxu0 0.0
  %1398 = vmatpush1.msra.mxu0 0.0
  %1399 = vmatprep.subr.mxu0 0.0
  %1400 = vmatpush1.msra.mxu0 0.0
  %1401 = vmatprep.subr.mxu0 0.0
  %1402 = vmatpush1.msra.mxu0 0.0
  %1403 = vmatprep.subr.mxu0 0.0
  %1404 = vmatpush1.msra.mxu0 0.0
  %1405 = vmatprep.subr.mxu0 0.0
  %1406 = vmatpush1.msra.mxu0 0.0
  %1407 = vmatprep.subr.mxu0 0.0
  %1408 = vmatpush1.msra.mxu0 0.0
  %1409 = vmatprep.subr.mxu0 0.0
  %1410 = vmatpush1.msra.mxu0 0.0
  %1411 = vmatprep.subr.mxu0 0.0
  %1412 = vmatpush1.msra.mxu0 0.0
  %1413 = vmatprep.subr.mxu0 0.0
  %1414 = vmatpush1.msra.mxu0 0.0
  %1415 = vmatprep.subr.mxu0 0.0
  %1416 = vmatpush1.msra.mxu0 0.0
  %1417 = vmatprep.subr.mxu0 0.0
  %1418 = vmatpush1.msra.mxu0 0.0
  %1419 = vmatprep.subr.mxu0 0.0
  %1420 = vmatpush1.msra.mxu0 0.0
  %1421 = vmatprep.subr.mxu0 0.0
  %1422 = vmatpush1.msra.mxu0 0.0
  %1423 = vmatprep.subr.mxu0 0.0
  %1424 = vmatpush1.msra.mxu0 0.0
  %1425 = vmatprep.subr.mxu0 0.0
  %1426 = vmatpush1.msra.mxu0 0.0
  %1427 = vmatprep.subr.mxu0 0.0
  %1428 = vmatpush1.msra.mxu0 0.0
  %1429 = vmatprep.subr.mxu0 0.0
  %1430 = vmatpush1.msra.mxu0 0.0
  %1431 = vmatprep.subr.mxu0 0.0
  %1432 = vmatpush1.msra.mxu0 0.0
  %1433 = vmatprep.subr.mxu0 0.0
  %1434 = vmatpush1.msra.mxu0 0.0
  %1435 = vmatprep.subr.mxu0 0.0
  %1436 = vmatpush1.msra.mxu0 0.0
  %1437 = vmatprep.subr.mxu0 0.0
  %1438 = vmatpush1.msra.mxu0 0.0
  %1439 = vmatprep.subr.mxu0 0.0
  %1440 = vmatpush1.msra.mxu0 0.0
  %1441 = vmatprep.subr.mxu0 0.0
  %1442 = vmatpush1.msra.mxu0 0.0
  %1443 = vmatprep.mubr.f32.mxu0 0.0
  %1444 = vmatmul.mubr.f32.gmra.mrb[0].mxu0 %v206
  %v1445 = vpop.f32.mrb[0].mxu0
  %v1446 = vadd.f32 %v201, %v1445
  %v1447 = vpop.f32.mrb[0].mxu0
  %v1448 = vadd.f32 %v201, %v1447
  %1449 = vdwg.mxu0
  %v1450 = vmul.f32 %v1375, 0.5
  %v1451 = vmul.f32 %v1377, 0.5
  %v1452 = vmul.f32 %v1446, 0.5
  %v1453 = vmul.f32 %v1448, 0.5
  %v1454 = vmul.f32 %v1375, 0.70710677
  %v1455 = vmul.f32 %v1377, 0.70710677
  %v1456 = vmul.f32 %v1446, 0.70710677
  %v1457 = vmul.f32 %v1448, 0.70710677
  %v1458 = verf.f32.pop %v1454
  %v1459 = verf.f32.pop %v1455
  %v1460 = verf.f32.pop %v1456
  %v1461 = verf.f32.pop %v1457
  %v1462 = vadd.f32 %v1458, 1.0
  %v1463 = vadd.f32 %v1459, 1.0
  %v1464 = vadd.f32 %v1460, 1.0
  %v1465 = vadd.f32 %v1461, 1.0
  %v1466 = vmul.f32 %v1450, %v1462
  %v1467 = vmul.f32 %v1451, %v1463
  %v1468 = vmul.f32 %v1452, %v1464
  %v1469 = vmul.f32 %v1453, %v1465
  %v1471 = vsel %vm208, %v1466, 0
  %v1474 = vsel %vm208, %v1467, 0
  %v1477 = vsel %vm208, %v1468, 0
  %v1480 = vsel %vm208, %v1469, 0
  %1482 = vmatprep.subr.mxu0 %v1474
  %1483 = vmatpush1.msra.mxu0 %v1471
  %1484 = vmatprep.subr.mxu0 0.0
  %1485 = vmatpush1.msra.mxu0 0.0
  %1486 = vmatprep.subr.mxu0 0.0
  %1487 = vmatpush1.msra.mxu0 0.0
  %1488 = vmatprep.subr.mxu0 0.0
  %1489 = vmatpush1.msra.mxu0 0.0
  %1490 = vmatprep.subr.mxu0 0.0
  %1491 = vmatpush1.msra.mxu0 0.0
  %1492 = vmatprep.subr.mxu0 0.0
  %1493 = vmatpush1.msra.mxu0 0.0
  %1494 = vmatprep.subr.mxu0 0.0
  %1495 = vmatpush1.msra.mxu0 0.0
  %1496 = vmatprep.subr.mxu0 0.0
  %1497 = vmatpush1.msra.mxu0 0.0
  %1498 = vmatprep.subr.mxu0 0.0
  %1499 = vmatpush1.msra.mxu0 0.0
  %1500 = vmatprep.subr.mxu0 0.0
  %1501 = vmatpush1.msra.mxu0 0.0
  %1502 = vmatprep.subr.mxu0 0.0
  %1503 = vmatpush1.msra.mxu0 0.0
  %1504 = vmatprep.subr.mxu0 0.0
  %1505 = vmatpush1.msra.mxu0 0.0
  %1506 = vmatprep.subr.mxu0 0.0
  %1507 = vmatpush1.msra.mxu0 0.0
  %1508 = vmatprep.subr.mxu0 0.0
  %1509 = vmatpush1.msra.mxu0 0.0
  %1510 = vmatprep.subr.mxu0 0.0
  %1511 = vmatpush1.msra.mxu0 0.0
  %1512 = vmatprep.subr.mxu0 0.0
  %1513 = vmatpush1.msra.mxu0 0.0
  %1514 = vmatprep.subr.mxu0 0.0
  %1515 = vmatpush1.msra.mxu0 0.0
  %1516 = vmatprep.subr.mxu0 0.0
  %1517 = vmatpush1.msra.mxu0 0.0
  %1518 = vmatprep.subr.mxu0 0.0
  %1519 = vmatpush1.msra.mxu0 0.0
  %1520 = vmatprep.subr.mxu0 0.0
  %1521 = vmatpush1.msra.mxu0 0.0
  %1522 = vmatprep.subr.mxu0 0.0
  %1523 = vmatpush1.msra.mxu0 0.0
  %1524 = vmatprep.subr.mxu0 0.0
  %1525 = vmatpush1.msra.mxu0 0.0
  %1526 = vmatprep.subr.mxu0 0.0
  %1527 = vmatpush1.msra.mxu0 0.0
  %1528 = vmatprep.subr.mxu0 0.0
  %1529 = vmatpush1.msra.mxu0 0.0
  %1530 = vmatprep.subr.mxu0 0.0
  %1531 = vmatpush1.msra.mxu0 0.0
  %1532 = vmatprep.subr.mxu0 0.0
  %1533 = vmatpush1.msra.mxu0 0.0
  %1534 = vmatprep.subr.mxu0 0.0
  %1535 = vmatpush1.msra.mxu0 0.0
  %1536 = vmatprep.subr.mxu0 0.0
  %1537 = vmatpush1.msra.mxu0 0.0
  %1538 = vmatprep.subr.mxu0 0.0
  %1539 = vmatpush1.msra.mxu0 0.0
  %1540 = vmatprep.subr.mxu0 0.0
  %1541 = vmatpush1.msra.mxu0 0.0
  %1542 = vmatprep.subr.mxu0 0.0
  %1543 = vmatpush1.msra.mxu0 0.0
  %1544 = vmatprep.subr.mxu0 0.0
  %1545 = vmatpush1.msra.mxu0 0.0
  %1546 = vmatprep.mubr.f32.mxu0 0.0
  %1547 = vmatmul.mubr.f32.gmra.mrb[0].mxu0 %v389
  %v1548 = vpop.f32.mrb[0].mxu0
  %v1549 = vadd.f32 %v385, %v1548
  %v1550 = vpop.f32.mrb[0].mxu0
  %v1551 = vadd.f32 %v385, %v1550
  %1552 = vdwg.mxu0
  %1553 = vmatprep.subr.mxu0 %v1480
  %1554 = vmatpush1.msra.mxu0 %v1477
  %1555 = vmatprep.subr.mxu0 0.0
  %1556 = vmatpush1.msra.mxu0 0.0
  %1557 = vmatprep.subr.mxu0 0.0
  %1558 = vmatpush1.msra.mxu0 0.0
  %1559 = vmatprep.subr.mxu0 0.0
  %1560 = vmatpush1.msra.mxu0 0.0
  %1561 = vmatprep.subr.mxu0 0.0
  %1562 = vmatpush1.msra.mxu0 0.0
  %1563 = vmatprep.subr.mxu0 0.0
  %1564 = vmatpush1.msra.mxu0 0.0
  %1565 = vmatprep.subr.mxu0 0.0
  %1566 = vmatpush1.msra.mxu0 0.0
  %1567 = vmatprep.subr.mxu0 0.0
  %1568 = vmatpush1.msra.mxu0 0.0
  %1569 = vmatprep.subr.mxu0 0.0
  %1570 = vmatpush1.msra.mxu0 0.0
  %1571 = vmatprep.subr.mxu0 0.0
  %1572 = vmatpush1.msra.mxu0 0.0
  %1573 = vmatprep.subr.mxu0 0.0
  %1574 = vmatpush1.msra.mxu0 0.0
  %1575 = vmatprep.subr.mxu0 0.0
  %1576 = vmatpush1.msra.mxu0 0.0
  %1577 = vmatprep.subr.mxu0 0.0
  %1578 = vmatpush1.msra.mxu0 0.0
  %1579 = vmatprep.subr.mxu0 0.0
  %1580 = vmatpush1.msra.mxu0 0.0
  %1581 = vmatprep.subr.mxu0 0.0
  %1582 = vmatpush1.msra.mxu0 0.0
  %1583 = vmatprep.subr.mxu0 0.0
  %1584 = vmatpush1.msra.mxu0 0.0
  %1585 = vmatprep.subr.mxu0 0.0
  %1586 = vmatpush1.msra.mxu0 0.0
  %1587 = vmatprep.subr.mxu0 0.0
  %1588 = vmatpush1.msra.mxu0 0.0
  %1589 = vmatprep.subr.mxu0 0.0
  %1590 = vmatpush1.msra.mxu0 0.0
  %1591 = vmatprep.subr.mxu0 0.0
  %1592 = vmatpush1.msra.mxu0 0.0
  %1593 = vmatprep.subr.mxu0 0.0
  %1594 = vmatpush1.msra.mxu0 0.0
  %1595 = vmatprep.subr.mxu0 0.0
  %1596 = vmatpush1.msra.mxu0 0.0
  %1597 = vmatprep.subr.mxu0 0.0
  %1598 = vmatpush1.msra.mxu0 0.0
  %1599 = vmatprep.subr.mxu0 0.0
  %1600 = vmatpush1.msra.mxu0 0.0
  %1601 = vmatprep.subr.mxu0 0.0
  %1602 = vmatpush1.msra.mxu0 0.0
  %1603 = vmatprep.subr.mxu0 0.0
  %1604 = vmatpush1.msra.mxu0 0.0
  %1605 = vmatprep.subr.mxu0 0.0
  %1606 = vmatpush1.msra.mxu0 0.0
  %1607 = vmatprep.subr.mxu0 0.0
  %1608 = vmatpush1.msra.mxu0 0.0
  %1609 = vmatprep.subr.mxu0 0.0
  %1610 = vmatpush1.msra.mxu0 0.0
  %1611 = vmatprep.subr.mxu0 0.0
  %1612 = vmatpush1.msra.mxu0 0.0
  %1613 = vmatprep.subr.mxu0 0.0
  %1614 = vmatpush1.msra.mxu0 0.0
  %1615 = vmatprep.subr.mxu0 0.0
  %1616 = vmatpush1.msra.mxu0 0.0
  %1617 = vmatprep.mubr.f32.mxu0 0.0
  %1618 = vmatmul.mubr.f32.gmra.mrb[0].mxu0 %v389
  %v1619 = vpop.f32.mrb[0].mxu0
  %v1620 = vadd.f32 %v385, %v1619
  %v1621 = vpop.f32.mrb[0].mxu0
  %v1622 = vadd.f32 %v385, %v1621
  %1623 = vdwg.mxu0
  %v1628 = vcombine.low %v1549, %v1551
  %v1629 = vcombine.low %v1620, %v1622
  %v1631 = vunpack.c.l.s4 1966171168
  %v1632 = vunpack.c.0.s8 %v1631
  %v1633 = vlaneseq
  %v1634 = vshrl.u32 %v1633, 7
  %v1635 = vsub.s32 %v1632, %v1634
  %v1636 = vrot.slane %v1628, %v1635
  %v1638 = vunpack.c.l.s4 1966171168
  %v1639 = vunpack.c.0.s8 %v1638
  %v1640 = vlaneseq
  %v1641 = vshrl.u32 %v1640, 7
  %v1642 = vsub.s32 %v1639, %v1641
  %v1643 = vrot.slane %v1629, %v1642
  %v1644 = vcombine.low %v1636, %v1643
  %v1646 = vunpack.c.l.s4 1966171168
  %v1647 = vunpack.c.0.s8 %v1646
  %v1648 = vlaneseq
  %v1649 = vshrl.u32 %v1648, 7
  %v1650 = vsub.s32 %v1647, %v1649
  %v1651 = vrot.slane %v1644, %v1650
  %s1653 = scalar_lea.vmem %s2, 8
  %1654 = vst.msk [vmem:[%s1653] sm:$0xf] %vm577, %v1651
  %s1655 = scalar_lea.vmem %s1, 96
  %v1656 = vld [vmem:[%s1655] sm:$0x1f]
  %v1657 = vld [vmem:[%s1655 + $0x8] sm:$0x1f]
  %v1658 = vld [vmem:[%s1655 + $0x10] sm:$0x1f]
  %v1659 = vld [vmem:[%s1655 + $0x18] sm:$0x1f]
  %v1661 = vsel %vm24, %v1656, 0
  %v1664 = vsel %vm24, %v1657, 0
  %v1667 = vsel %vm24, %v1658, 0
  %v1670 = vsel %vm24, %v1659, 0
  %1672 = vmatprep.subr.mxu0 %v1664
  %1673 = vmatpush1.msra.mxu0 %v1661
  %1674 = vmatprep.subr.mxu0 0.0
  %1675 = vmatpush1.msra.mxu0 0.0
  %1676 = vmatprep.subr.mxu0 0.0
  %1677 = vmatpush1.msra.mxu0 0.0
  %1678 = vmatprep.subr.mxu0 0.0
  %1679 = vmatpush1.msra.mxu0 0.0
  %1680 = vmatprep.subr.mxu0 0.0
  %1681 = vmatpush1.msra.mxu0 0.0
  %1682 = vmatprep.subr.mxu0 0.0
  %1683 = vmatpush1.msra.mxu0 0.0
  %1684 = vmatprep.subr.mxu0 0.0
  %1685 = vmatpush1.msra.mxu0 0.0
  %1686 = vmatprep.subr.mxu0 0.0
  %1687 = vmatpush1.msra.mxu0 0.0
  %1688 = vmatprep.subr.mxu0 0.0
  %1689 = vmatpush1.msra.mxu0 0.0
  %1690 = vmatprep.subr.mxu0 0.0
  %1691 = vmatpush1.msra.mxu0 0.0
  %1692 = vmatprep.subr.mxu0 0.0
  %1693 = vmatpush1.msra.mxu0 0.0
  %1694 = vmatprep.subr.mxu0 0.0
  %1695 = vmatpush1.msra.mxu0 0.0
  %1696 = vmatprep.subr.mxu0 0.0
  %1697 = vmatpush1.msra.mxu0 0.0
  %1698 = vmatprep.subr.mxu0 0.0
  %1699 = vmatpush1.msra.mxu0 0.0
  %1700 = vmatprep.subr.mxu0 0.0
  %1701 = vmatpush1.msra.mxu0 0.0
  %1702 = vmatprep.subr.mxu0 0.0
  %1703 = vmatpush1.msra.mxu0 0.0
  %1704 = vmatprep.subr.mxu0 0.0
  %1705 = vmatpush1.msra.mxu0 0.0
  %1706 = vmatprep.subr.mxu0 0.0
  %1707 = vmatpush1.msra.mxu0 0.0
  %1708 = vmatprep.subr.mxu0 0.0
  %1709 = vmatpush1.msra.mxu0 0.0
  %1710 = vmatprep.subr.mxu0 0.0
  %1711 = vmatpush1.msra.mxu0 0.0
  %1712 = vmatprep.subr.mxu0 0.0
  %1713 = vmatpush1.msra.mxu0 0.0
  %1714 = vmatprep.subr.mxu0 0.0
  %1715 = vmatpush1.msra.mxu0 0.0
  %1716 = vmatprep.subr.mxu0 0.0
  %1717 = vmatpush1.msra.mxu0 0.0
  %1718 = vmatprep.subr.mxu0 0.0
  %1719 = vmatpush1.msra.mxu0 0.0
  %1720 = vmatprep.subr.mxu0 0.0
  %1721 = vmatpush1.msra.mxu0 0.0
  %1722 = vmatprep.subr.mxu0 0.0
  %1723 = vmatpush1.msra.mxu0 0.0
  %1724 = vmatprep.subr.mxu0 0.0
  %1725 = vmatpush1.msra.mxu0 0.0
  %1726 = vmatprep.subr.mxu0 0.0
  %1727 = vmatpush1.msra.mxu0 0.0
  %1728 = vmatprep.subr.mxu0 0.0
  %1729 = vmatpush1.msra.mxu0 0.0
  %1730 = vmatprep.subr.mxu0 0.0
  %1731 = vmatpush1.msra.mxu0 0.0
  %1732 = vmatprep.subr.mxu0 0.0
  %1733 = vmatpush1.msra.mxu0 0.0
  %1734 = vmatprep.subr.mxu0 0.0
  %1735 = vmatpush1.msra.mxu0 0.0
  %1736 = vmatprep.mubr.f32.mxu0 0.0
  %1737 = vmatmul.mubr.f32.gmra.mrb[0].mxu0 %v22
  %v1738 = vpop.f32.mrb[0].mxu0
  %v1739 = vadd.f32 %v19, %v1738
  %v1740 = vpop.f32.mrb[0].mxu0
  %v1741 = vadd.f32 %v19, %v1740
  %1742 = vdwg.mxu0
  %1743 = vmatprep.subr.mxu0 %v1670
  %1744 = vmatpush1.msra.mxu0 %v1667
  %1745 = vmatprep.subr.mxu0 0.0
  %1746 = vmatpush1.msra.mxu0 0.0
  %1747 = vmatprep.subr.mxu0 0.0
  %1748 = vmatpush1.msra.mxu0 0.0
  %1749 = vmatprep.subr.mxu0 0.0
  %1750 = vmatpush1.msra.mxu0 0.0
  %1751 = vmatprep.subr.mxu0 0.0
  %1752 = vmatpush1.msra.mxu0 0.0
  %1753 = vmatprep.subr.mxu0 0.0
  %1754 = vmatpush1.msra.mxu0 0.0
  %1755 = vmatprep.subr.mxu0 0.0
  %1756 = vmatpush1.msra.mxu0 0.0
  %1757 = vmatprep.subr.mxu0 0.0
  %1758 = vmatpush1.msra.mxu0 0.0
  %1759 = vmatprep.subr.mxu0 0.0
  %1760 = vmatpush1.msra.mxu0 0.0
  %1761 = vmatprep.subr.mxu0 0.0
  %1762 = vmatpush1.msra.mxu0 0.0
  %1763 = vmatprep.subr.mxu0 0.0
  %1764 = vmatpush1.msra.mxu0 0.0
  %1765 = vmatprep.subr.mxu0 0.0
  %1766 = vmatpush1.msra.mxu0 0.0
  %1767 = vmatprep.subr.mxu0 0.0
  %1768 = vmatpush1.msra.mxu0 0.0
  %1769 = vmatprep.subr.mxu0 0.0
  %1770 = vmatpush1.msra.mxu0 0.0
  %1771 = vmatprep.subr.mxu0 0.0
  %1772 = vmatpush1.msra.mxu0 0.0
  %1773 = vmatprep.subr.mxu0 0.0
  %1774 = vmatpush1.msra.mxu0 0.0
  %1775 = vmatprep.subr.mxu0 0.0
  %1776 = vmatpush1.msra.mxu0 0.0
  %1777 = vmatprep.subr.mxu0 0.0
  %1778 = vmatpush1.msra.mxu0 0.0
  %1779 = vmatprep.subr.mxu0 0.0
  %1780 = vmatpush1.msra.mxu0 0.0
  %1781 = vmatprep.subr.mxu0 0.0
  %1782 = vmatpush1.msra.mxu0 0.0
  %1783 = vmatprep.subr.mxu0 0.0
  %1784 = vmatpush1.msra.mxu0 0.0
  %1785 = vmatprep.subr.mxu0 0.0
  %1786 = vmatpush1.msra.mxu0 0.0
  %1787 = vmatprep.subr.mxu0 0.0
  %1788 = vmatpush1.msra.mxu0 0.0
  %1789 = vmatprep.subr.mxu0 0.0
  %1790 = vmatpush1.msra.mxu0 0.0
  %1791 = vmatprep.subr.mxu0 0.0
  %1792 = vmatpush1.msra.mxu0 0.0
  %1793 = vmatprep.subr.mxu0 0.0
  %1794 = vmatpush1.msra.mxu0 0.0
  %1795 = vmatprep.subr.mxu0 0.0
  %1796 = vmatpush1.msra.mxu0 0.0
  %1797 = vmatprep.subr.mxu0 0.0
  %1798 = vmatpush1.msra.mxu0 0.0
  %1799 = vmatprep.subr.mxu0 0.0
  %1800 = vmatpush1.msra.mxu0 0.0
  %1801 = vmatprep.subr.mxu0 0.0
  %1802 = vmatpush1.msra.mxu0 0.0
  %1803 = vmatprep.subr.mxu0 0.0
  %1804 = vmatpush1.msra.mxu0 0.0
  %1805 = vmatprep.subr.mxu0 0.0
  %1806 = vmatpush1.msra.mxu0 0.0
  %1807 = vmatprep.mubr.f32.mxu0 0.0
  %1808 = vmatmul.mubr.f32.gmra.mrb[0].mxu0 %v22
  %v1809 = vpop.f32.mrb[0].mxu0
  %v1810 = vadd.f32 %v19, %v1809
  %v1811 = vpop.f32.mrb[0].mxu0
  %v1812 = vadd.f32 %v19, %v1811
  %1813 = vdwg.mxu0
  %v1814 = vmul.f32 %v1739, 0.5
  %v1815 = vmul.f32 %v1741, 0.5
  %v1816 = vmul.f32 %v1810, 0.5
  %v1817 = vmul.f32 %v1812, 0.5
  %v1818 = vmul.f32 %v1739, 0.70710677
  %v1819 = vmul.f32 %v1741, 0.70710677
  %v1820 = vmul.f32 %v1810, 0.70710677
  %v1821 = vmul.f32 %v1812, 0.70710677
  %v1822 = verf.f32.pop %v1818
  %v1823 = verf.f32.pop %v1819
  %v1824 = verf.f32.pop %v1820
  %v1825 = verf.f32.pop %v1821
  %v1826 = vadd.f32 %v1822, 1.0
  %v1827 = vadd.f32 %v1823, 1.0
  %v1828 = vadd.f32 %v1824, 1.0
  %v1829 = vadd.f32 %v1825, 1.0
  %v1830 = vmul.f32 %v1814, %v1826
  %v1831 = vmul.f32 %v1815, %v1827
  %v1832 = vmul.f32 %v1816, %v1828
  %v1833 = vmul.f32 %v1817, %v1829
  %v1835 = vsel %vm208, %v1830, 0
  %v1838 = vsel %vm208, %v1831, 0
  %v1841 = vsel %vm208, %v1832, 0
  %v1844 = vsel %vm208, %v1833, 0
  %1846 = vmatprep.subr.mxu0 %v1838
  %1847 = vmatpush1.msra.mxu0 %v1835
  %1848 = vmatprep.subr.mxu0 0.0
  %1849 = vmatpush1.msra.mxu0 0.0
  %1850 = vmatprep.subr.mxu0 0.0
  %1851 = vmatpush1.msra.mxu0 0.0
  %1852 = vmatprep.subr.mxu0 0.0
  %1853 = vmatpush1.msra.mxu0 0.0
  %1854 = vmatprep.subr.mxu0 0.0
  %1855 = vmatpush1.msra.mxu0 0.0
  %1856 = vmatprep.subr.mxu0 0.0
  %1857 = vmatpush1.msra.mxu0 0.0
  %1858 = vmatprep.subr.mxu0 0.0
  %1859 = vmatpush1.msra.mxu0 0.0
  %1860 = vmatprep.subr.mxu0 0.0
  %1861 = vmatpush1.msra.mxu0 0.0
  %1862 = vmatprep.subr.mxu0 0.0
  %1863 = vmatpush1.msra.mxu0 0.0
  %1864 = vmatprep.subr.mxu0 0.0
  %1865 = vmatpush1.msra.mxu0 0.0
  %1866 = vmatprep.subr.mxu0 0.0
  %1867 = vmatpush1.msra.mxu0 0.0
  %1868 = vmatprep.subr.mxu0 0.0
  %1869 = vmatpush1.msra.mxu0 0.0
  %1870 = vmatprep.subr.mxu0 0.0
  %1871 = vmatpush1.msra.mxu0 0.0
  %1872 = vmatprep.subr.mxu0 0.0
  %1873 = vmatpush1.msra.mxu0 0.0
  %1874 = vmatprep.subr.mxu0 0.0
  %1875 = vmatpush1.msra.mxu0 0.0
  %1876 = vmatprep.subr.mxu0 0.0
  %1877 = vmatpush1.msra.mxu0 0.0
  %1878 = vmatprep.subr.mxu0 0.0
  %1879 = vmatpush1.msra.mxu0 0.0
  %1880 = vmatprep.subr.mxu0 0.0
  %1881 = vmatpush1.msra.mxu0 0.0
  %1882 = vmatprep.subr.mxu0 0.0
  %1883 = vmatpush1.msra.mxu0 0.0
  %1884 = vmatprep.subr.mxu0 0.0
  %1885 = vmatpush1.msra.mxu0 0.0
  %1886 = vmatprep.subr.mxu0 0.0
  %1887 = vmatpush1.msra.mxu0 0.0
  %1888 = vmatprep.subr.mxu0 0.0
  %1889 = vmatpush1.msra.mxu0 0.0
  %1890 = vmatprep.subr.mxu0 0.0
  %1891 = vmatpush1.msra.mxu0 0.0
  %1892 = vmatprep.subr.mxu0 0.0
  %1893 = vmatpush1.msra.mxu0 0.0
  %1894 = vmatprep.subr.mxu0 0.0
  %1895 = vmatpush1.msra.mxu0 0.0
  %1896 = vmatprep.subr.mxu0 0.0
  %1897 = vmatpush1.msra.mxu0 0.0
  %1898 = vmatprep.subr.mxu0 0.0
  %1899 = vmatpush1.msra.mxu0 0.0
  %1900 = vmatprep.subr.mxu0 0.0
  %1901 = vmatpush1.msra.mxu0 0.0
  %1902 = vmatprep.subr.mxu0 0.0
  %1903 = vmatpush1.msra.mxu0 0.0
  %1904 = vmatprep.subr.mxu0 0.0
  %1905 = vmatpush1.msra.mxu0 0.0
  %1906 = vmatprep.subr.mxu0 0.0
  %1907 = vmatpush1.msra.mxu0 0.0
  %1908 = vmatprep.subr.mxu0 0.0
  %1909 = vmatpush1.msra.mxu0 0.0
  %1910 = vmatprep.mubr.f32.mxu0 0.0
  %1911 = vmatmul.mubr.f32.gmra.mrb[0].mxu0 %v206
  %v1912 = vpop.f32.mrb[0].mxu0
  %v1913 = vadd.f32 %v201, %v1912
  %v1914 = vpop.f32.mrb[0].mxu0
  %v1915 = vadd.f32 %v201, %v1914
  %1916 = vdwg.mxu0
  %1917 = vmatprep.subr.mxu0 %v1844
  %1918 = vmatpush1.msra.mxu0 %v1841
  %1919 = vmatprep.subr.mxu0 0.0
  %1920 = vmatpush1.msra.mxu0 0.0
  %1921 = vmatprep.subr.mxu0 0.0
  %1922 = vmatpush1.msra.mxu0 0.0
  %1923 = vmatprep.subr.mxu0 0.0
  %1924 = vmatpush1.msra.mxu0 0.0
  %1925 = vmatprep.subr.mxu0 0.0
  %1926 = vmatpush1.msra.mxu0 0.0
  %1927 = vmatprep.subr.mxu0 0.0
  %1928 = vmatpush1.msra.mxu0 0.0
  %1929 = vmatprep.subr.mxu0 0.0
  %1930 = vmatpush1.msra.mxu0 0.0
  %1931 = vmatprep.subr.mxu0 0.0
  %1932 = vmatpush1.msra.mxu0 0.0
  %1933 = vmatprep.subr.mxu0 0.0
  %1934 = vmatpush1.msra.mxu0 0.0
  %1935 = vmatprep.subr.mxu0 0.0
  %1936 = vmatpush1.msra.mxu0 0.0
  %1937 = vmatprep.subr.mxu0 0.0
  %1938 = vmatpush1.msra.mxu0 0.0
  %1939 = vmatprep.subr.mxu0 0.0
  %1940 = vmatpush1.msra.mxu0 0.0
  %1941 = vmatprep.subr.mxu0 0.0
  %1942 = vmatpush1.msra.mxu0 0.0
  %1943 = vmatprep.subr.mxu0 0.0
  %1944 = vmatpush1.msra.mxu0 0.0
  %1945 = vmatprep.subr.mxu0 0.0
  %1946 = vmatpush1.msra.mxu0 0.0
  %1947 = vmatprep.subr.mxu0 0.0
  %1948 = vmatpush1.msra.mxu0 0.0
  %1949 = vmatprep.subr.mxu0 0.0
  %1950 = vmatpush1.msra.mxu0 0.0
  %1951 = vmatprep.subr.mxu0 0.0
  %1952 = vmatpush1.msra.mxu0 0.0
  %1953 = vmatprep.subr.mxu0 0.0
  %1954 = vmatpush1.msra.mxu0 0.0
  %1955 = vmatprep.subr.mxu0 0.0
  %1956 = vmatpush1.msra.mxu0 0.0
  %1957 = vmatprep.subr.mxu0 0.0
  %1958 = vmatpush1.msra.mxu0 0.0
  %1959 = vmatprep.subr.mxu0 0.0
  %1960 = vmatpush1.msra.mxu0 0.0
  %1961 = vmatprep.subr.mxu0 0.0
  %1962 = vmatpush1.msra.mxu0 0.0
  %1963 = vmatprep.subr.mxu0 0.0
  %1964 = vmatpush1.msra.mxu0 0.0
  %1965 = vmatprep.subr.mxu0 0.0
  %1966 = vmatpush1.msra.mxu0 0.0
  %1967 = vmatprep.subr.mxu0 0.0
  %1968 = vmatpush1.msra.mxu0 0.0
  %1969 = vmatprep.subr.mxu0 0.0
  %1970 = vmatpush1.msra.mxu0 0.0
  %1971 = vmatprep.subr.mxu0 0.0
  %1972 = vmatpush1.msra.mxu0 0.0
  %1973 = vmatprep.subr.mxu0 0.0
  %1974 = vmatpush1.msra.mxu0 0.0
  %1975 = vmatprep.subr.mxu0 0.0
  %1976 = vmatpush1.msra.mxu0 0.0
  %1977 = vmatprep.subr.mxu0 0.0
  %1978 = vmatpush1.msra.mxu0 0.0
  %1979 = vmatprep.subr.mxu0 0.0
  %1980 = vmatpush1.msra.mxu0 0.0
  %1981 = vmatprep.mubr.f32.mxu0 0.0
  %1982 = vmatmul.mubr.f32.gmra.mrb[0].mxu0 %v206
  %v1983 = vpop.f32.mrb[0].mxu0
  %v1984 = vadd.f32 %v201, %v1983
  %v1985 = vpop.f32.mrb[0].mxu0
  %v1986 = vadd.f32 %v201, %v1985
  %1987 = vdwg.mxu0
  %v1988 = vmul.f32 %v1913, 0.5
  %v1989 = vmul.f32 %v1915, 0.5
  %v1990 = vmul.f32 %v1984, 0.5
  %v1991 = vmul.f32 %v1986, 0.5
  %v1992 = vmul.f32 %v1913, 0.70710677
  %v1993 = vmul.f32 %v1915, 0.70710677
  %v1994 = vmul.f32 %v1984, 0.70710677
  %v1995 = vmul.f32 %v1986, 0.70710677
  %v1996 = verf.f32.pop %v1992
  %v1997 = verf.f32.pop %v1993
  %v1998 = verf.f32.pop %v1994
  %v1999 = verf.f32.pop %v1995
  %v2000 = vadd.f32 %v1996, 1.0
  %v2001 = vadd.f32 %v1997, 1.0
  %v2002 = vadd.f32 %v1998, 1.0
  %v2003 = vadd.f32 %v1999, 1.0
  %v2004 = vmul.f32 %v1988, %v2000
  %v2005 = vmul.f32 %v1989, %v2001
  %v2006 = vmul.f32 %v1990, %v2002
  %v2007 = vmul.f32 %v1991, %v2003
  %v2009 = vsel %vm208, %v2004, 0
  %v2012 = vsel %vm208, %v2005, 0
  %v2015 = vsel %vm208, %v2006, 0
  %v2018 = vsel %vm208, %v2007, 0
  %2020 = vmatprep.subr.mxu0 %v2012
  %2021 = vmatpush1.msra.mxu0 %v2009
  %2022 = vmatprep.subr.mxu0 0.0
  %2023 = vmatpush1.msra.mxu0 0.0
  %2024 = vmatprep.subr.mxu0 0.0
  %2025 = vmatpush1.msra.mxu0 0.0
  %2026 = vmatprep.subr.mxu0 0.0
  %2027 = vmatpush1.msra.mxu0 0.0
  %2028 = vmatprep.subr.mxu0 0.0
  %2029 = vmatpush1.msra.mxu0 0.0
  %2030 = vmatprep.subr.mxu0 0.0
  %2031 = vmatpush1.msra.mxu0 0.0
  %2032 = vmatprep.subr.mxu0 0.0
  %2033 = vmatpush1.msra.mxu0 0.0
  %2034 = vmatprep.subr.mxu0 0.0
  %2035 = vmatpush1.msra.mxu0 0.0
  %2036 = vmatprep.subr.mxu0 0.0
  %2037 = vmatpush1.msra.mxu0 0.0
  %2038 = vmatprep.subr.mxu0 0.0
  %2039 = vmatpush1.msra.mxu0 0.0
  %2040 = vmatprep.subr.mxu0 0.0
  %2041 = vmatpush1.msra.mxu0 0.0
  %2042 = vmatprep.subr.mxu0 0.0
  %2043 = vmatpush1.msra.mxu0 0.0
  %2044 = vmatprep.subr.mxu0 0.0
  %2045 = vmatpush1.msra.mxu0 0.0
  %2046 = vmatprep.subr.mxu0 0.0
  %2047 = vmatpush1.msra.mxu0 0.0
  %2048 = vmatprep.subr.mxu0 0.0
  %2049 = vmatpush1.msra.mxu0 0.0
  %2050 = vmatprep.subr.mxu0 0.0
  %2051 = vmatpush1.msra.mxu0 0.0
  %2052 = vmatprep.subr.mxu0 0.0
  %2053 = vmatpush1.msra.mxu0 0.0
  %2054 = vmatprep.subr.mxu0 0.0
  %2055 = vmatpush1.msra.mxu0 0.0
  %2056 = vmatprep.subr.mxu0 0.0
  %2057 = vmatpush1.msra.mxu0 0.0
  %2058 = vmatprep.subr.mxu0 0.0
  %2059 = vmatpush1.msra.mxu0 0.0
  %2060 = vmatprep.subr.mxu0 0.0
  %2061 = vmatpush1.msra.mxu0 0.0
  %2062 = vmatprep.subr.mxu0 0.0
  %2063 = vmatpush1.msra.mxu0 0.0
  %2064 = vmatprep.subr.mxu0 0.0
  %2065 = vmatpush1.msra.mxu0 0.0
  %2066 = vmatprep.subr.mxu0 0.0
  %2067 = vmatpush1.msra.mxu0 0.0
  %2068 = vmatprep.subr.mxu0 0.0
  %2069 = vmatpush1.msra.mxu0 0.0
  %2070 = vmatprep.subr.mxu0 0.0
  %2071 = vmatpush1.msra.mxu0 0.0
  %2072 = vmatprep.subr.mxu0 0.0
  %2073 = vmatpush1.msra.mxu0 0.0
  %2074 = vmatprep.subr.mxu0 0.0
  %2075 = vmatpush1.msra.mxu0 0.0
  %2076 = vmatprep.subr.mxu0 0.0
  %2077 = vmatpush1.msra.mxu0 0.0
  %2078 = vmatprep.subr.mxu0 0.0
  %2079 = vmatpush1.msra.mxu0 0.0
  %2080 = vmatprep.subr.mxu0 0.0
  %2081 = vmatpush1.msra.mxu0 0.0
  %2082 = vmatprep.subr.mxu0 0.0
  %2083 = vmatpush1.msra.mxu0 0.0
  %2084 = vmatprep.mubr.f32.mxu0 0.0
  %2085 = vmatmul.mubr.f32.gmra.mrb[0].mxu0 %v389
  %v2086 = vpop.f32.mrb[0].mxu0
  %v2087 = vadd.f32 %v385, %v2086
  %v2088 = vpop.f32.mrb[0].mxu0
  %v2089 = vadd.f32 %v385, %v2088
  %2090 = vdwg.mxu0
  %2091 = vmatprep.subr.mxu0 %v2018
  %2092 = vmatpush1.msra.mxu0 %v2015
  %2093 = vmatprep.subr.mxu0 0.0
  %2094 = vmatpush1.msra.mxu0 0.0
  %2095 = vmatprep.subr.mxu0 0.0
  %2096 = vmatpush1.msra.mxu0 0.0
  %2097 = vmatprep.subr.mxu0 0.0
  %2098 = vmatpush1.msra.mxu0 0.0
  %2099 = vmatprep.subr.mxu0 0.0
  %2100 = vmatpush1.msra.mxu0 0.0
  %2101 = vmatprep.subr.mxu0 0.0
  %2102 = vmatpush1.msra.mxu0 0.0
  %2103 = vmatprep.subr.mxu0 0.0
  %2104 = vmatpush1.msra.mxu0 0.0
  %2105 = vmatprep.subr.mxu0 0.0
  %2106 = vmatpush1.msra.mxu0 0.0
  %2107 = vmatprep.subr.mxu0 0.0
  %2108 = vmatpush1.msra.mxu0 0.0
  %2109 = vmatprep.subr.mxu0 0.0
  %2110 = vmatpush1.msra.mxu0 0.0
  %2111 = vmatprep.subr.mxu0 0.0
  %2112 = vmatpush1.msra.mxu0 0.0
  %2113 = vmatprep.subr.mxu0 0.0
  %2114 = vmatpush1.msra.mxu0 0.0
  %2115 = vmatprep.subr.mxu0 0.0
  %2116 = vmatpush1.msra.mxu0 0.0
  %2117 = vmatprep.subr.mxu0 0.0
  %2118 = vmatpush1.msra.mxu0 0.0
  %2119 = vmatprep.subr.mxu0 0.0
  %2120 = vmatpush1.msra.mxu0 0.0
  %2121 = vmatprep.subr.mxu0 0.0
  %2122 = vmatpush1.msra.mxu0 0.0
  %2123 = vmatprep.subr.mxu0 0.0
  %2124 = vmatpush1.msra.mxu0 0.0
  %2125 = vmatprep.subr.mxu0 0.0
  %2126 = vmatpush1.msra.mxu0 0.0
  %2127 = vmatprep.subr.mxu0 0.0
  %2128 = vmatpush1.msra.mxu0 0.0
  %2129 = vmatprep.subr.mxu0 0.0
  %2130 = vmatpush1.msra.mxu0 0.0
  %2131 = vmatprep.subr.mxu0 0.0
  %2132 = vmatpush1.msra.mxu0 0.0
  %2133 = vmatprep.subr.mxu0 0.0
  %2134 = vmatpush1.msra.mxu0 0.0
  %2135 = vmatprep.subr.mxu0 0.0
  %2136 = vmatpush1.msra.mxu0 0.0
  %2137 = vmatprep.subr.mxu0 0.0
  %2138 = vmatpush1.msra.mxu0 0.0
  %2139 = vmatprep.subr.mxu0 0.0
  %2140 = vmatpush1.msra.mxu0 0.0
  %2141 = vmatprep.subr.mxu0 0.0
  %2142 = vmatpush1.msra.mxu0 0.0
  %2143 = vmatprep.subr.mxu0 0.0
  %2144 = vmatpush1.msra.mxu0 0.0
  %2145 = vmatprep.subr.mxu0 0.0
  %2146 = vmatpush1.msra.mxu0 0.0
  %2147 = vmatprep.subr.mxu0 0.0
  %2148 = vmatpush1.msra.mxu0 0.0
  %2149 = vmatprep.subr.mxu0 0.0
  %2150 = vmatpush1.msra.mxu0 0.0
  %2151 = vmatprep.subr.mxu0 0.0
  %2152 = vmatpush1.msra.mxu0 0.0
  %2153 = vmatprep.subr.mxu0 0.0
  %2154 = vmatpush1.msra.mxu0 0.0
  %2155 = vmatprep.mubr.f32.mxu0 0.0
  %2156 = vmatmul.mubr.f32.gmra.mrb[0].mxu0 %v389
  %v2157 = vpop.f32.mrb[0].mxu0
  %v2158 = vadd.f32 %v385, %v2157
  %v2159 = vpop.f32.mrb[0].mxu0
  %v2160 = vadd.f32 %v385, %v2159
  %2161 = vdwg.mxu0
  %v2166 = vcombine.low %v2087, %v2089
  %v2167 = vcombine.low %v2158, %v2160
  %v2169 = vunpack.c.l.s4 1966171168
  %v2170 = vunpack.c.0.s8 %v2169
  %v2171 = vlaneseq
  %v2172 = vshrl.u32 %v2171, 7
  %v2173 = vsub.s32 %v2170, %v2172
  %v2174 = vrot.slane %v2166, %v2173
  %v2176 = vunpack.c.l.s4 1966171168
  %v2177 = vunpack.c.0.s8 %v2176
  %v2178 = vlaneseq
  %v2179 = vshrl.u32 %v2178, 7
  %v2180 = vsub.s32 %v2177, %v2179
  %v2181 = vrot.slane %v2167, %v2180
  %v2182 = vcombine.low %v2174, %v2181
  %v2184 = vunpack.c.l.s4 1966171168
  %v2185 = vunpack.c.0.s8 %v2184
  %v2186 = vlaneseq
  %v2187 = vshrl.u32 %v2186, 7
  %v2188 = vsub.s32 %v2185, %v2187
  %v2189 = vrot.slane %v2182, %v2188
  %s2191 = scalar_lea.vmem %s2, 12
  %2192 = vst.msk [vmem:[%s2191] sm:$0xf] %vm577, %v2189
  %s2193 = scalar_lea.vmem %s1, 128
  %v2194 = vld [vmem:[%s2193] sm:$0x1f]
  %v2195 = vld [vmem:[%s2193 + $0x8] sm:$0x1f]
  %v2196 = vld [vmem:[%s2193 + $0x10] sm:$0x1f]
  %v2197 = vld [vmem:[%s2193 + $0x18] sm:$0x1f]
  %v2199 = vsel %vm24, %v2194, 0
  %v2202 = vsel %vm24, %v2195, 0
  %v2205 = vsel %vm24, %v2196, 0
  %v2208 = vsel %vm24, %v2197, 0
  %2210 = vmatprep.subr.mxu0 %v2202
  %2211 = vmatpush1.msra.mxu0 %v2199
  %2212 = vmatprep.subr.mxu0 0.0
  %2213 = vmatpush1.msra.mxu0 0.0
  %2214 = vmatprep.subr.mxu0 0.0
  %2215 = vmatpush1.msra.mxu0 0.0
  %2216 = vmatprep.subr.mxu0 0.0
  %2217 = vmatpush1.msra.mxu0 0.0
  %2218 = vmatprep.subr.mxu0 0.0
  %2219 = vmatpush1.msra.mxu0 0.0
  %2220 = vmatprep.subr.mxu0 0.0
  %2221 = vmatpush1.msra.mxu0 0.0
  %2222 = vmatprep.subr.mxu0 0.0
  %2223 = vmatpush1.msra.mxu0 0.0
  %2224 = vmatprep.subr.mxu0 0.0
  %2225 = vmatpush1.msra.mxu0 0.0
  %2226 = vmatprep.subr.mxu0 0.0
  %2227 = vmatpush1.msra.mxu0 0.0
  %2228 = vmatprep.subr.mxu0 0.0
  %2229 = vmatpush1.msra.mxu0 0.0
  %2230 = vmatprep.subr.mxu0 0.0
  %2231 = vmatpush1.msra.mxu0 0.0
  %2232 = vmatprep.subr.mxu0 0.0
  %2233 = vmatpush1.msra.mxu0 0.0
  %2234 = vmatprep.subr.mxu0 0.0
  %2235 = vmatpush1.msra.mxu0 0.0
  %2236 = vmatprep.subr.mxu0 0.0
  %2237 = vmatpush1.msra.mxu0 0.0
  %2238 = vmatprep.subr.mxu0 0.0
  %2239 = vmatpush1.msra.mxu0 0.0
  %2240 = vmatprep.subr.mxu0 0.0
  %2241 = vmatpush1.msra.mxu0 0.0
  %2242 = vmatprep.subr.mxu0 0.0
  %2243 = vmatpush1.msra.mxu0 0.0
  %2244 = vmatprep.subr.mxu0 0.0
  %2245 = vmatpush1.msra.mxu0 0.0
  %2246 = vmatprep.subr.mxu0 0.0
  %2247 = vmatpush1.msra.mxu0 0.0
  %2248 = vmatprep.subr.mxu0 0.0
  %2249 = vmatpush1.msra.mxu0 0.0
  %2250 = vmatprep.subr.mxu0 0.0
  %2251 = vmatpush1.msra.mxu0 0.0
  %2252 = vmatprep.subr.mxu0 0.0
  %2253 = vmatpush1.msra.mxu0 0.0
  %2254 = vmatprep.subr.mxu0 0.0
  %2255 = vmatpush1.msra.mxu0 0.0
  %2256 = vmatprep.subr.mxu0 0.0
  %2257 = vmatpush1.msra.mxu0 0.0
  %2258 = vmatprep.subr.mxu0 0.0
  %2259 = vmatpush1.msra.mxu0 0.0
  %2260 = vmatprep.subr.mxu0 0.0
  %2261 = vmatpush1.msra.mxu0 0.0
  %2262 = vmatprep.subr.mxu0 0.0
  %2263 = vmatpush1.msra.mxu0 0.0
  %2264 = vmatprep.subr.mxu0 0.0
  %2265 = vmatpush1.msra.mxu0 0.0
  %2266 = vmatprep.subr.mxu0 0.0
  %2267 = vmatpush1.msra.mxu0 0.0
  %2268 = vmatprep.subr.mxu0 0.0
  %2269 = vmatpush1.msra.mxu0 0.0
  %2270 = vmatprep.subr.mxu0 0.0
  %2271 = vmatpush1.msra.mxu0 0.0
  %2272 = vmatprep.subr.mxu0 0.0
  %2273 = vmatpush1.msra.mxu0 0.0
  %2274 = vmatprep.mubr.f32.mxu0 0.0
  %2275 = vmatmul.mubr.f32.gmra.mrb[0].mxu0 %v22
  %v2276 = vpop.f32.mrb[0].mxu0
  %v2277 = vadd.f32 %v19, %v2276
  %v2278 = vpop.f32.mrb[0].mxu0
  %v2279 = vadd.f32 %v19, %v2278
  %2280 = vdwg.mxu0
  %2281 = vmatprep.subr.mxu0 %v2208
  %2282 = vmatpush1.msra.mxu0 %v2205
  %2283 = vmatprep.subr.mxu0 0.0
  %2284 = vmatpush1.msra.mxu0 0.0
  %2285 = vmatprep.subr.mxu0 0.0
  %2286 = vmatpush1.msra.mxu0 0.0
  %2287 = vmatprep.subr.mxu0 0.0
  %2288 = vmatpush1.msra.mxu0 0.0
  %2289 = vmatprep.subr.mxu0 0.0
  %2290 = vmatpush1.msra.mxu0 0.0
  %2291 = vmatprep.subr.mxu0 0.0
  %2292 = vmatpush1.msra.mxu0 0.0
  %2293 = vmatprep.subr.mxu0 0.0
  %2294 = vmatpush1.msra.mxu0 0.0
  %2295 = vmatprep.subr.mxu0 0.0
  %2296 = vmatpush1.msra.mxu0 0.0
  %2297 = vmatprep.subr.mxu0 0.0
  %2298 = vmatpush1.msra.mxu0 0.0
  %2299 = vmatprep.subr.mxu0 0.0
  %2300 = vmatpush1.msra.mxu0 0.0
  %2301 = vmatprep.subr.mxu0 0.0
  %2302 = vmatpush1.msra.mxu0 0.0
  %2303 = vmatprep.subr.mxu0 0.0
  %2304 = vmatpush1.msra.mxu0 0.0
  %2305 = vmatprep.subr.mxu0 0.0
  %2306 = vmatpush1.msra.mxu0 0.0
  %2307 = vmatprep.subr.mxu0 0.0
  %2308 = vmatpush1.msra.mxu0 0.0
  %2309 = vmatprep.subr.mxu0 0.0
  %2310 = vmatpush1.msra.mxu0 0.0
  %2311 = vmatprep.subr.mxu0 0.0
  %2312 = vmatpush1.msra.mxu0 0.0
  %2313 = vmatprep.subr.mxu0 0.0
  %2314 = vmatpush1.msra.mxu0 0.0
  %2315 = vmatprep.subr.mxu0 0.0
  %2316 = vmatpush1.msra.mxu0 0.0
  %2317 = vmatprep.subr.mxu0 0.0
  %2318 = vmatpush1.msra.mxu0 0.0
  %2319 = vmatprep.subr.mxu0 0.0
  %2320 = vmatpush1.msra.mxu0 0.0
  %2321 = vmatprep.subr.mxu0 0.0
  %2322 = vmatpush1.msra.mxu0 0.0
  %2323 = vmatprep.subr.mxu0 0.0
  %2324 = vmatpush1.msra.mxu0 0.0
  %2325 = vmatprep.subr.mxu0 0.0
  %2326 = vmatpush1.msra.mxu0 0.0
  %2327 = vmatprep.subr.mxu0 0.0
  %2328 = vmatpush1.msra.mxu0 0.0
  %2329 = vmatprep.subr.mxu0 0.0
  %2330 = vmatpush1.msra.mxu0 0.0
  %2331 = vmatprep.subr.mxu0 0.0
  %2332 = vmatpush1.msra.mxu0 0.0
  %2333 = vmatprep.subr.mxu0 0.0
  %2334 = vmatpush1.msra.mxu0 0.0
  %2335 = vmatprep.subr.mxu0 0.0
  %2336 = vmatpush1.msra.mxu0 0.0
  %2337 = vmatprep.subr.mxu0 0.0
  %2338 = vmatpush1.msra.mxu0 0.0
  %2339 = vmatprep.subr.mxu0 0.0
  %2340 = vmatpush1.msra.mxu0 0.0
  %2341 = vmatprep.subr.mxu0 0.0
  %2342 = vmatpush1.msra.mxu0 0.0
  %2343 = vmatprep.subr.mxu0 0.0
  %2344 = vmatpush1.msra.mxu0 0.0
  %2345 = vmatprep.mubr.f32.mxu0 0.0
  %2346 = vmatmul.mubr.f32.gmra.mrb[0].mxu0 %v22
  %v2347 = vpop.f32.mrb[0].mxu0
  %v2348 = vadd.f32 %v19, %v2347
  %v2349 = vpop.f32.mrb[0].mxu0
  %v2350 = vadd.f32 %v19, %v2349
  %2351 = vdwg.mxu0
  %v2352 = vmul.f32 %v2277, 0.5
  %v2353 = vmul.f32 %v2279, 0.5
  %v2354 = vmul.f32 %v2348, 0.5
  %v2355 = vmul.f32 %v2350, 0.5
  %v2356 = vmul.f32 %v2277, 0.70710677
  %v2357 = vmul.f32 %v2279, 0.70710677
  %v2358 = vmul.f32 %v2348, 0.70710677
  %v2359 = vmul.f32 %v2350, 0.70710677
  %v2360 = verf.f32.pop %v2356
  %v2361 = verf.f32.pop %v2357
  %v2362 = verf.f32.pop %v2358
  %v2363 = verf.f32.pop %v2359
  %v2364 = vadd.f32 %v2360, 1.0
  %v2365 = vadd.f32 %v2361, 1.0
  %v2366 = vadd.f32 %v2362, 1.0
  %v2367 = vadd.f32 %v2363, 1.0
  %v2368 = vmul.f32 %v2352, %v2364
  %v2369 = vmul.f32 %v2353, %v2365
  %v2370 = vmul.f32 %v2354, %v2366
  %v2371 = vmul.f32 %v2355, %v2367
  %v2373 = vsel %vm208, %v2368, 0
  %v2376 = vsel %vm208, %v2369, 0
  %v2379 = vsel %vm208, %v2370, 0
  %v2382 = vsel %vm208, %v2371, 0
  %2384 = vmatprep.subr.mxu0 %v2376
  %2385 = vmatpush1.msra.mxu0 %v2373
  %2386 = vmatprep.subr.mxu0 0.0
  %2387 = vmatpush1.msra.mxu0 0.0
  %2388 = vmatprep.subr.mxu0 0.0
  %2389 = vmatpush1.msra.mxu0 0.0
  %2390 = vmatprep.subr.mxu0 0.0
  %2391 = vmatpush1.msra.mxu0 0.0
  %2392 = vmatprep.subr.mxu0 0.0
  %2393 = vmatpush1.msra.mxu0 0.0
  %2394 = vmatprep.subr.mxu0 0.0
  %2395 = vmatpush1.msra.mxu0 0.0
  %2396 = vmatprep.subr.mxu0 0.0
  %2397 = vmatpush1.msra.mxu0 0.0
  %2398 = vmatprep.subr.mxu0 0.0
  %2399 = vmatpush1.msra.mxu0 0.0
  %2400 = vmatprep.subr.mxu0 0.0
  %2401 = vmatpush1.msra.mxu0 0.0
  %2402 = vmatprep.subr.mxu0 0.0
  %2403 = vmatpush1.msra.mxu0 0.0
  %2404 = vmatprep.subr.mxu0 0.0
  %2405 = vmatpush1.msra.mxu0 0.0
  %2406 = vmatprep.subr.mxu0 0.0
  %2407 = vmatpush1.msra.mxu0 0.0
  %2408 = vmatprep.subr.mxu0 0.0
  %2409 = vmatpush1.msra.mxu0 0.0
  %2410 = vmatprep.subr.mxu0 0.0
  %2411 = vmatpush1.msra.mxu0 0.0
  %2412 = vmatprep.subr.mxu0 0.0
  %2413 = vmatpush1.msra.mxu0 0.0
  %2414 = vmatprep.subr.mxu0 0.0
  %2415 = vmatpush1.msra.mxu0 0.0
  %2416 = vmatprep.subr.mxu0 0.0
  %2417 = vmatpush1.msra.mxu0 0.0
  %2418 = vmatprep.subr.mxu0 0.0
  %2419 = vmatpush1.msra.mxu0 0.0
  %2420 = vmatprep.subr.mxu0 0.0
  %2421 = vmatpush1.msra.mxu0 0.0
  %2422 = vmatprep.subr.mxu0 0.0
  %2423 = vmatpush1.msra.mxu0 0.0
  %2424 = vmatprep.subr.mxu0 0.0
  %2425 = vmatpush1.msra.mxu0 0.0
  %2426 = vmatprep.subr.mxu0 0.0
  %2427 = vmatpush1.msra.mxu0 0.0
  %2428 = vmatprep.subr.mxu0 0.0
  %2429 = vmatpush1.msra.mxu0 0.0
  %2430 = vmatprep.subr.mxu0 0.0
  %2431 = vmatpush1.msra.mxu0 0.0
  %2432 = vmatprep.subr.mxu0 0.0
  %2433 = vmatpush1.msra.mxu0 0.0
  %2434 = vmatprep.subr.mxu0 0.0
  %2435 = vmatpush1.msra.mxu0 0.0
  %2436 = vmatprep.subr.mxu0 0.0
  %2437 = vmatpush1.msra.mxu0 0.0
  %2438 = vmatprep.subr.mxu0 0.0
  %2439 = vmatpush1.msra.mxu0 0.0
  %2440 = vmatprep.subr.mxu0 0.0
  %2441 = vmatpush1.msra.mxu0 0.0
  %2442 = vmatprep.subr.mxu0 0.0
  %2443 = vmatpush1.msra.mxu0 0.0
  %2444 = vmatprep.subr.mxu0 0.0
  %2445 = vmatpush1.msra.mxu0 0.0
  %2446 = vmatprep.subr.mxu0 0.0
  %2447 = vmatpush1.msra.mxu0 0.0
  %2448 = vmatprep.mubr.f32.mxu0 0.0
  %2449 = vmatmul.mubr.f32.gmra.mrb[0].mxu0 %v206
  %v2450 = vpop.f32.mrb[0].mxu0
  %v2451 = vadd.f32 %v201, %v2450
  %v2452 = vpop.f32.mrb[0].mxu0
  %v2453 = vadd.f32 %v201, %v2452
  %2454 = vdwg.mxu0
  %2455 = vmatprep.subr.mxu0 %v2382
  %2456 = vmatpush1.msra.mxu0 %v2379
  %2457 = vmatprep.subr.mxu0 0.0
  %2458 = vmatpush1.msra.mxu0 0.0
  %2459 = vmatprep.subr.mxu0 0.0
  %2460 = vmatpush1.msra.mxu0 0.0
  %2461 = vmatprep.subr.mxu0 0.0
  %2462 = vmatpush1.msra.mxu0 0.0
  %2463 = vmatprep.subr.mxu0 0.0
  %2464 = vmatpush1.msra.mxu0 0.0
  %2465 = vmatprep.subr.mxu0 0.0
  %2466 = vmatpush1.msra.mxu0 0.0
  %2467 = vmatprep.subr.mxu0 0.0
  %2468 = vmatpush1.msra.mxu0 0.0
  %2469 = vmatprep.subr.mxu0 0.0
  %2470 = vmatpush1.msra.mxu0 0.0
  %2471 = vmatprep.subr.mxu0 0.0
  %2472 = vmatpush1.msra.mxu0 0.0
  %2473 = vmatprep.subr.mxu0 0.0
  %2474 = vmatpush1.msra.mxu0 0.0
  %2475 = vmatprep.subr.mxu0 0.0
  %2476 = vmatpush1.msra.mxu0 0.0
  %2477 = vmatprep.subr.mxu0 0.0
  %2478 = vmatpush1.msra.mxu0 0.0
  %2479 = vmatprep.subr.mxu0 0.0
  %2480 = vmatpush1.msra.mxu0 0.0
  %2481 = vmatprep.subr.mxu0 0.0
  %2482 = vmatpush1.msra.mxu0 0.0
  %2483 = vmatprep.subr.mxu0 0.0
  %2484 = vmatpush1.msra.mxu0 0.0
  %2485 = vmatprep.subr.mxu0 0.0
  %2486 = vmatpush1.msra.mxu0 0.0
  %2487 = vmatprep.subr.mxu0 0.0
  %2488 = vmatpush1.msra.mxu0 0.0
  %2489 = vmatprep.subr.mxu0 0.0
  %2490 = vmatpush1.msra.mxu0 0.0
  %2491 = vmatprep.subr.mxu0 0.0
  %2492 = vmatpush1.msra.mxu0 0.0
  %2493 = vmatprep.subr.mxu0 0.0
  %2494 = vmatpush1.msra.mxu0 0.0
  %2495 = vmatprep.subr.mxu0 0.0
  %2496 = vmatpush1.msra.mxu0 0.0
  %2497 = vmatprep.subr.mxu0 0.0
  %2498 = vmatpush1.msra.mxu0 0.0
  %2499 = vmatprep.subr.mxu0 0.0
  %2500 = vmatpush1.msra.mxu0 0.0
  %2501 = vmatprep.subr.mxu0 0.0
  %2502 = vmatpush1.msra.mxu0 0.0
  %2503 = vmatprep.subr.mxu0 0.0
  %2504 = vmatpush1.msra.mxu0 0.0
  %2505 = vmatprep.subr.mxu0 0.0
  %2506 = vmatpush1.msra.mxu0 0.0
  %2507 = vmatprep.subr.mxu0 0.0
  %2508 = vmatpush1.msra.mxu0 0.0
  %2509 = vmatprep.subr.mxu0 0.0
  %2510 = vmatpush1.msra.mxu0 0.0
  %2511 = vmatprep.subr.mxu0 0.0
  %2512 = vmatpush1.msra.mxu0 0.0
  %2513 = vmatprep.subr.mxu0 0.0
  %2514 = vmatpush1.msra.mxu0 0.0
  %2515 = vmatprep.subr.mxu0 0.0
  %2516 = vmatpush1.msra.mxu0 0.0
  %2517 = vmatprep.subr.mxu0 0.0
  %2518 = vmatpush1.msra.mxu0 0.0
  %2519 = vmatprep.mubr.f32.mxu0 0.0
  %2520 = vmatmul.mubr.f32.gmra.mrb[0].mxu0 %v206
  %v2521 = vpop.f32.mrb[0].mxu0
  %v2522 = vadd.f32 %v201, %v2521
  %v2523 = vpop.f32.mrb[0].mxu0
  %v2524 = vadd.f32 %v201, %v2523
  %2525 = vdwg.mxu0
  %v2526 = vmul.f32 %v2451, 0.5
  %v2527 = vmul.f32 %v2453, 0.5
  %v2528 = vmul.f32 %v2522, 0.5
  %v2529 = vmul.f32 %v2524, 0.5
  %v2530 = vmul.f32 %v2451, 0.70710677
  %v2531 = vmul.f32 %v2453, 0.70710677
  %v2532 = vmul.f32 %v2522, 0.70710677
  %v2533 = vmul.f32 %v2524, 0.70710677
  %v2534 = verf.f32.pop %v2530
  %v2535 = verf.f32.pop %v2531
  %v2536 = verf.f32.pop %v2532
  %v2537 = verf.f32.pop %v2533
  %v2538 = vadd.f32 %v2534, 1.0
  %v2539 = vadd.f32 %v2535, 1.0
  %v2540 = vadd.f32 %v2536, 1.0
  %v2541 = vadd.f32 %v2537, 1.0
  %v2542 = vmul.f32 %v2526, %v2538
  %v2543 = vmul.f32 %v2527, %v2539
  %v2544 = vmul.f32 %v2528, %v2540
  %v2545 = vmul.f32 %v2529, %v2541
  %v2547 = vsel %vm208, %v2542, 0
  %v2550 = vsel %vm208, %v2543, 0
  %v2553 = vsel %vm208, %v2544, 0
  %v2556 = vsel %vm208, %v2545, 0
  %2558 = vmatprep.subr.mxu0 %v2550
  %2559 = vmatpush1.msra.mxu0 %v2547
  %2560 = vmatprep.subr.mxu0 0.0
  %2561 = vmatpush1.msra.mxu0 0.0
  %2562 = vmatprep.subr.mxu0 0.0
  %2563 = vmatpush1.msra.mxu0 0.0
  %2564 = vmatprep.subr.mxu0 0.0
  %2565 = vmatpush1.msra.mxu0 0.0
  %2566 = vmatprep.subr.mxu0 0.0
  %2567 = vmatpush1.msra.mxu0 0.0
  %2568 = vmatprep.subr.mxu0 0.0
  %2569 = vmatpush1.msra.mxu0 0.0
  %2570 = vmatprep.subr.mxu0 0.0
  %2571 = vmatpush1.msra.mxu0 0.0
  %2572 = vmatprep.subr.mxu0 0.0
  %2573 = vmatpush1.msra.mxu0 0.0
  %2574 = vmatprep.subr.mxu0 0.0
  %2575 = vmatpush1.msra.mxu0 0.0
  %2576 = vmatprep.subr.mxu0 0.0
  %2577 = vmatpush1.msra.mxu0 0.0
  %2578 = vmatprep.subr.mxu0 0.0
  %2579 = vmatpush1.msra.mxu0 0.0
  %2580 = vmatprep.subr.mxu0 0.0
  %2581 = vmatpush1.msra.mxu0 0.0
  %2582 = vmatprep.subr.mxu0 0.0
  %2583 = vmatpush1.msra.mxu0 0.0
  %2584 = vmatprep.subr.mxu0 0.0
  %2585 = vmatpush1.msra.mxu0 0.0
  %2586 = vmatprep.subr.mxu0 0.0
  %2587 = vmatpush1.msra.mxu0 0.0
  %2588 = vmatprep.subr.mxu0 0.0
  %2589 = vmatpush1.msra.mxu0 0.0
  %2590 = vmatprep.subr.mxu0 0.0
  %2591 = vmatpush1.msra.mxu0 0.0
  %2592 = vmatprep.subr.mxu0 0.0
  %2593 = vmatpush1.msra.mxu0 0.0
  %2594 = vmatprep.subr.mxu0 0.0
  %2595 = vmatpush1.msra.mxu0 0.0
  %2596 = vmatprep.subr.mxu0 0.0
  %2597 = vmatpush1.msra.mxu0 0.0
  %2598 = vmatprep.subr.mxu0 0.0
  %2599 = vmatpush1.msra.mxu0 0.0
  %2600 = vmatprep.subr.mxu0 0.0
  %2601 = vmatpush1.msra.mxu0 0.0
  %2602 = vmatprep.subr.mxu0 0.0
  %2603 = vmatpush1.msra.mxu0 0.0
  %2604 = vmatprep.subr.mxu0 0.0
  %2605 = vmatpush1.msra.mxu0 0.0
  %2606 = vmatprep.subr.mxu0 0.0
  %2607 = vmatpush1.msra.mxu0 0.0
  %2608 = vmatprep.subr.mxu0 0.0
  %2609 = vmatpush1.msra.mxu0 0.0
  %2610 = vmatprep.subr.mxu0 0.0
  %2611 = vmatpush1.msra.mxu0 0.0
  %2612 = vmatprep.subr.mxu0 0.0
  %2613 = vmatpush1.msra.mxu0 0.0
  %2614 = vmatprep.subr.mxu0 0.0
  %2615 = vmatpush1.msra.mxu0 0.0
  %2616 = vmatprep.subr.mxu0 0.0
  %2617 = vmatpush1.msra.mxu0 0.0
  %2618 = vmatprep.subr.mxu0 0.0
  %2619 = vmatpush1.msra.mxu0 0.0
  %2620 = vmatprep.subr.mxu0 0.0
  %2621 = vmatpush1.msra.mxu0 0.0
  %2622 = vmatprep.mubr.f32.mxu0 0.0
  %2623 = vmatmul.mubr.f32.gmra.mrb[0].mxu0 %v389
  %v2624 = vpop.f32.mrb[0].mxu0
  %v2625 = vadd.f32 %v385, %v2624
  %v2626 = vpop.f32.mrb[0].mxu0
  %v2627 = vadd.f32 %v385, %v2626
  %2628 = vdwg.mxu0
  %2629 = vmatprep.subr.mxu0 %v2556
  %2630 = vmatpush1.msra.mxu0 %v2553
  %2631 = vmatprep.subr.mxu0 0.0
  %2632 = vmatpush1.msra.mxu0 0.0
  %2633 = vmatprep.subr.mxu0 0.0
  %2634 = vmatpush1.msra.mxu0 0.0
  %2635 = vmatprep.subr.mxu0 0.0
  %2636 = vmatpush1.msra.mxu0 0.0
  %2637 = vmatprep.subr.mxu0 0.0
  %2638 = vmatpush1.msra.mxu0 0.0
  %2639 = vmatprep.subr.mxu0 0.0
  %2640 = vmatpush1.msra.mxu0 0.0
  %2641 = vmatprep.subr.mxu0 0.0
  %2642 = vmatpush1.msra.mxu0 0.0
  %2643 = vmatprep.subr.mxu0 0.0
  %2644 = vmatpush1.msra.mxu0 0.0
  %2645 = vmatprep.subr.mxu0 0.0
  %2646 = vmatpush1.msra.mxu0 0.0
  %2647 = vmatprep.subr.mxu0 0.0
  %2648 = vmatpush1.msra.mxu0 0.0
  %2649 = vmatprep.subr.mxu0 0.0
  %2650 = vmatpush1.msra.mxu0 0.0
  %2651 = vmatprep.subr.mxu0 0.0
  %2652 = vmatpush1.msra.mxu0 0.0
  %2653 = vmatprep.subr.mxu0 0.0
  %2654 = vmatpush1.msra.mxu0 0.0
  %2655 = vmatprep.subr.mxu0 0.0
  %2656 = vmatpush1.msra.mxu0 0.0
  %2657 = vmatprep.subr.mxu0 0.0
  %2658 = vmatpush1.msra.mxu0 0.0
  %2659 = vmatprep.subr.mxu0 0.0
  %2660 = vmatpush1.msra.mxu0 0.0
  %2661 = vmatprep.subr.mxu0 0.0
  %2662 = vmatpush1.msra.mxu0 0.0
  %2663 = vmatprep.subr.mxu0 0.0
  %2664 = vmatpush1.msra.mxu0 0.0
  %2665 = vmatprep.subr.mxu0 0.0
  %2666 = vmatpush1.msra.mxu0 0.0
  %2667 = vmatprep.subr.mxu0 0.0
  %2668 = vmatpush1.msra.mxu0 0.0
  %2669 = vmatprep.subr.mxu0 0.0
  %2670 = vmatpush1.msra.mxu0 0.0
  %2671 = vmatprep.subr.mxu0 0.0
  %2672 = vmatpush1.msra.mxu0 0.0
  %2673 = vmatprep.subr.mxu0 0.0
  %2674 = vmatpush1.msra.mxu0 0.0
  %2675 = vmatprep.subr.mxu0 0.0
  %2676 = vmatpush1.msra.mxu0 0.0
  %2677 = vmatprep.subr.mxu0 0.0
  %2678 = vmatpush1.msra.mxu0 0.0
  %2679 = vmatprep.subr.mxu0 0.0
  %2680 = vmatpush1.msra.mxu0 0.0
  %2681 = vmatprep.subr.mxu0 0.0
  %2682 = vmatpush1.msra.mxu0 0.0
  %2683 = vmatprep.subr.mxu0 0.0
  %2684 = vmatpush1.msra.mxu0 0.0
  %2685 = vmatprep.subr.mxu0 0.0
  %2686 = vmatpush1.msra.mxu0 0.0
  %2687 = vmatprep.subr.mxu0 0.0
  %2688 = vmatpush1.msra.mxu0 0.0
  %2689 = vmatprep.subr.mxu0 0.0
  %2690 = vmatpush1.msra.mxu0 0.0
  %2691 = vmatprep.subr.mxu0 0.0
  %2692 = vmatpush1.msra.mxu0 0.0
  %2693 = vmatprep.mubr.f32.mxu0 0.0
  %2694 = vmatmul.mubr.f32.gmra.mrb[0].mxu0 %v389
  %v2695 = vpop.f32.mrb[0].mxu0
  %v2696 = vadd.f32 %v385, %v2695
  %v2697 = vpop.f32.mrb[0].mxu0
  %v2698 = vadd.f32 %v385, %v2697
  %2699 = vdwg.mxu0
  %v2704 = vcombine.low %v2625, %v2627
  %v2705 = vcombine.low %v2696, %v2698
  %v2707 = vunpack.c.l.s4 1966171168
  %v2708 = vunpack.c.0.s8 %v2707
  %v2709 = vlaneseq
  %v2710 = vshrl.u32 %v2709, 7
  %v2711 = vsub.s32 %v2708, %v2710
  %v2712 = vrot.slane %v2704, %v2711
  %v2714 = vunpack.c.l.s4 1966171168
  %v2715 = vunpack.c.0.s8 %v2714
  %v2716 = vlaneseq
  %v2717 = vshrl.u32 %v2716, 7
  %v2718 = vsub.s32 %v2715, %v2717
  %v2719 = vrot.slane %v2705, %v2718
  %v2720 = vcombine.low %v2712, %v2719
  %v2722 = vunpack.c.l.s4 1966171168
  %v2723 = vunpack.c.0.s8 %v2722
  %v2724 = vlaneseq
  %v2725 = vshrl.u32 %v2724, 7
  %v2726 = vsub.s32 %v2723, %v2725
  %v2727 = vrot.slane %v2720, %v2726
  %s2729 = scalar_lea.vmem %s2, 16
  %2730 = vst.msk [vmem:[%s2729] sm:$0xf] %vm577, %v2727
  %s2731 = scalar_lea.vmem %s1, 160
  %v2732 = vld [vmem:[%s2731] sm:$0x1f]
  %v2733 = vld [vmem:[%s2731 + $0x8] sm:$0x1f]
  %v2734 = vld [vmem:[%s2731 + $0x10] sm:$0x1f]
  %v2735 = vld [vmem:[%s2731 + $0x18] sm:$0x1f]
  %v2737 = vsel %vm24, %v2732, 0
  %v2740 = vsel %vm24, %v2733, 0
  %v2743 = vsel %vm24, %v2734, 0
  %v2746 = vsel %vm24, %v2735, 0
  %2748 = vmatprep.subr.mxu0 %v2740
  %2749 = vmatpush1.msra.mxu0 %v2737
  %2750 = vmatprep.subr.mxu0 0.0
  %2751 = vmatpush1.msra.mxu0 0.0
  %2752 = vmatprep.subr.mxu0 0.0
  %2753 = vmatpush1.msra.mxu0 0.0
  %2754 = vmatprep.subr.mxu0 0.0
  %2755 = vmatpush1.msra.mxu0 0.0
  %2756 = vmatprep.subr.mxu0 0.0
  %2757 = vmatpush1.msra.mxu0 0.0
  %2758 = vmatprep.subr.mxu0 0.0
  %2759 = vmatpush1.msra.mxu0 0.0
  %2760 = vmatprep.subr.mxu0 0.0
  %2761 = vmatpush1.msra.mxu0 0.0
  %2762 = vmatprep.subr.mxu0 0.0
  %2763 = vmatpush1.msra.mxu0 0.0
  %2764 = vmatprep.subr.mxu0 0.0
  %2765 = vmatpush1.msra.mxu0 0.0
  %2766 = vmatprep.subr.mxu0 0.0
  %2767 = vmatpush1.msra.mxu0 0.0
  %2768 = vmatprep.subr.mxu0 0.0
  %2769 = vmatpush1.msra.mxu0 0.0
  %2770 = vmatprep.subr.mxu0 0.0
  %2771 = vmatpush1.msra.mxu0 0.0
  %2772 = vmatprep.subr.mxu0 0.0
  %2773 = vmatpush1.msra.mxu0 0.0
  %2774 = vmatprep.subr.mxu0 0.0
  %2775 = vmatpush1.msra.mxu0 0.0
  %2776 = vmatprep.subr.mxu0 0.0
  %2777 = vmatpush1.msra.mxu0 0.0
  %2778 = vmatprep.subr.mxu0 0.0
  %2779 = vmatpush1.msra.mxu0 0.0
  %2780 = vmatprep.subr.mxu0 0.0
  %2781 = vmatpush1.msra.mxu0 0.0
  %2782 = vmatprep.subr.mxu0 0.0
  %2783 = vmatpush1.msra.mxu0 0.0
  %2784 = vmatprep.subr.mxu0 0.0
  %2785 = vmatpush1.msra.mxu0 0.0
  %2786 = vmatprep.subr.mxu0 0.0
  %2787 = vmatpush1.msra.mxu0 0.0
  %2788 = vmatprep.subr.mxu0 0.0
  %2789 = vmatpush1.msra.mxu0 0.0
  %2790 = vmatprep.subr.mxu0 0.0
  %2791 = vmatpush1.msra.mxu0 0.0
  %2792 = vmatprep.subr.mxu0 0.0
  %2793 = vmatpush1.msra.mxu0 0.0
  %2794 = vmatprep.subr.mxu0 0.0
  %2795 = vmatpush1.msra.mxu0 0.0
  %2796 = vmatprep.subr.mxu0 0.0
  %2797 = vmatpush1.msra.mxu0 0.0
  %2798 = vmatprep.subr.mxu0 0.0
  %2799 = vmatpush1.msra.mxu0 0.0
  %2800 = vmatprep.subr.mxu0 0.0
  %2801 = vmatpush1.msra.mxu0 0.0
  %2802 = vmatprep.subr.mxu0 0.0
  %2803 = vmatpush1.msra.mxu0 0.0
  %2804 = vmatprep.subr.mxu0 0.0
  %2805 = vmatpush1.msra.mxu0 0.0
  %2806 = vmatprep.subr.mxu0 0.0
  %2807 = vmatpush1.msra.mxu0 0.0
  %2808 = vmatprep.subr.mxu0 0.0
  %2809 = vmatpush1.msra.mxu0 0.0
  %2810 = vmatprep.subr.mxu0 0.0
  %2811 = vmatpush1.msra.mxu0 0.0
  %2812 = vmatprep.mubr.f32.mxu0 0.0
  %2813 = vmatmul.mubr.f32.gmra.mrb[0].mxu0 %v22
  %v2814 = vpop.f32.mrb[0].mxu0
  %v2815 = vadd.f32 %v19, %v2814
  %v2816 = vpop.f32.mrb[0].mxu0
  %v2817 = vadd.f32 %v19, %v2816
  %2818 = vdwg.mxu0
  %2819 = vmatprep.subr.mxu0 %v2746
  %2820 = vmatpush1.msra.mxu0 %v2743
  %2821 = vmatprep.subr.mxu0 0.0
  %2822 = vmatpush1.msra.mxu0 0.0
  %2823 = vmatprep.subr.mxu0 0.0
  %2824 = vmatpush1.msra.mxu0 0.0
  %2825 = vmatprep.subr.mxu0 0.0
  %2826 = vmatpush1.msra.mxu0 0.0
  %2827 = vmatprep.subr.mxu0 0.0
  %2828 = vmatpush1.msra.mxu0 0.0
  %2829 = vmatprep.subr.mxu0 0.0
  %2830 = vmatpush1.msra.mxu0 0.0
  %2831 = vmatprep.subr.mxu0 0.0
  %2832 = vmatpush1.msra.mxu0 0.0
  %2833 = vmatprep.subr.mxu0 0.0
  %2834 = vmatpush1.msra.mxu0 0.0
  %2835 = vmatprep.subr.mxu0 0.0
  %2836 = vmatpush1.msra.mxu0 0.0
  %2837 = vmatprep.subr.mxu0 0.0
  %2838 = vmatpush1.msra.mxu0 0.0
  %2839 = vmatprep.subr.mxu0 0.0
  %2840 = vmatpush1.msra.mxu0 0.0
  %2841 = vmatprep.subr.mxu0 0.0
  %2842 = vmatpush1.msra.mxu0 0.0
  %2843 = vmatprep.subr.mxu0 0.0
  %2844 = vmatpush1.msra.mxu0 0.0
  %2845 = vmatprep.subr.mxu0 0.0
  %2846 = vmatpush1.msra.mxu0 0.0
  %2847 = vmatprep.subr.mxu0 0.0
  %2848 = vmatpush1.msra.mxu0 0.0
  %2849 = vmatprep.subr.mxu0 0.0
  %2850 = vmatpush1.msra.mxu0 0.0
  %2851 = vmatprep.subr.mxu0 0.0
  %2852 = vmatpush1.msra.mxu0 0.0
  %2853 = vmatprep.subr.mxu0 0.0
  %2854 = vmatpush1.msra.mxu0 0.0
  %2855 = vmatprep.subr.mxu0 0.0
  %2856 = vmatpush1.msra.mxu0 0.0
  %2857 = vmatprep.subr.mxu0 0.0
  %2858 = vmatpush1.msra.mxu0 0.0
  %2859 = vmatprep.subr.mxu0 0.0
  %2860 = vmatpush1.msra.mxu0 0.0
  %2861 = vmatprep.subr.mxu0 0.0
  %2862 = vmatpush1.msra.mxu0 0.0
  %2863 = vmatprep.subr.mxu0 0.0
  %2864 = vmatpush1.msra.mxu0 0.0
  %2865 = vmatprep.subr.mxu0 0.0
  %2866 = vmatpush1.msra.mxu0 0.0
  %2867 = vmatprep.subr.mxu0 0.0
  %2868 = vmatpush1.msra.mxu0 0.0
  %2869 = vmatprep.subr.mxu0 0.0
  %2870 = vmatpush1.msra.mxu0 0.0
  %2871 = vmatprep.subr.mxu0 0.0
  %2872 = vmatpush1.msra.mxu0 0.0
  %2873 = vmatprep.subr.mxu0 0.0
  %2874 = vmatpush1.msra.mxu0 0.0
  %2875 = vmatprep.subr.mxu0 0.0
  %2876 = vmatpush1.msra.mxu0 0.0
  %2877 = vmatprep.subr.mxu0 0.0
  %2878 = vmatpush1.msra.mxu0 0.0
  %2879 = vmatprep.subr.mxu0 0.0
  %2880 = vmatpush1.msra.mxu0 0.0
  %2881 = vmatprep.subr.mxu0 0.0
  %2882 = vmatpush1.msra.mxu0 0.0
  %2883 = vmatprep.mubr.f32.mxu0 0.0
  %2884 = vmatmul.mubr.f32.gmra.mrb[0].mxu0 %v22
  %v2885 = vpop.f32.mrb[0].mxu0
  %v2886 = vadd.f32 %v19, %v2885
  %v2887 = vpop.f32.mrb[0].mxu0
  %v2888 = vadd.f32 %v19, %v2887
  %2889 = vdwg.mxu0
  %v2890 = vmul.f32 %v2815, 0.5
  %v2891 = vmul.f32 %v2817, 0.5
  %v2892 = vmul.f32 %v2886, 0.5
  %v2893 = vmul.f32 %v2888, 0.5
  %v2894 = vmul.f32 %v2815, 0.70710677
  %v2895 = vmul.f32 %v2817, 0.70710677
  %v2896 = vmul.f32 %v2886, 0.70710677
  %v2897 = vmul.f32 %v2888, 0.70710677
  %v2898 = verf.f32.pop %v2894
  %v2899 = verf.f32.pop %v2895
  %v2900 = verf.f32.pop %v2896
  %v2901 = verf.f32.pop %v2897
  %v2902 = vadd.f32 %v2898, 1.0
  %v2903 = vadd.f32 %v2899, 1.0
  %v2904 = vadd.f32 %v2900, 1.0
  %v2905 = vadd.f32 %v2901, 1.0
  %v2906 = vmul.f32 %v2890, %v2902
  %v2907 = vmul.f32 %v2891, %v2903
  %v2908 = vmul.f32 %v2892, %v2904
  %v2909 = vmul.f32 %v2893, %v2905
  %v2911 = vsel %vm208, %v2906, 0
  %v2914 = vsel %vm208, %v2907, 0
  %v2917 = vsel %vm208, %v2908, 0
  %v2920 = vsel %vm208, %v2909, 0
  %2922 = vmatprep.subr.mxu0 %v2914
  %2923 = vmatpush1.msra.mxu0 %v2911
  %2924 = vmatprep.subr.mxu0 0.0
  %2925 = vmatpush1.msra.mxu0 0.0
  %2926 = vmatprep.subr.mxu0 0.0
  %2927 = vmatpush1.msra.mxu0 0.0
  %2928 = vmatprep.subr.mxu0 0.0
  %2929 = vmatpush1.msra.mxu0 0.0
  %2930 = vmatprep.subr.mxu0 0.0
  %2931 = vmatpush1.msra.mxu0 0.0
  %2932 = vmatprep.subr.mxu0 0.0
  %2933 = vmatpush1.msra.mxu0 0.0
  %2934 = vmatprep.subr.mxu0 0.0
  %2935 = vmatpush1.msra.mxu0 0.0
  %2936 = vmatprep.subr.mxu0 0.0
  %2937 = vmatpush1.msra.mxu0 0.0
  %2938 = vmatprep.subr.mxu0 0.0
  %2939 = vmatpush1.msra.mxu0 0.0
  %2940 = vmatprep.subr.mxu0 0.0
  %2941 = vmatpush1.msra.mxu0 0.0
  %2942 = vmatprep.subr.mxu0 0.0
  %2943 = vmatpush1.msra.mxu0 0.0
  %2944 = vmatprep.subr.mxu0 0.0
  %2945 = vmatpush1.msra.mxu0 0.0
  %2946 = vmatprep.subr.mxu0 0.0
  %2947 = vmatpush1.msra.mxu0 0.0
  %2948 = vmatprep.subr.mxu0 0.0
  %2949 = vmatpush1.msra.mxu0 0.0
  %2950 = vmatprep.subr.mxu0 0.0
  %2951 = vmatpush1.msra.mxu0 0.0
  %2952 = vmatprep.subr.mxu0 0.0
  %2953 = vmatpush1.msra.mxu0 0.0
  %2954 = vmatprep.subr.mxu0 0.0
  %2955 = vmatpush1.msra.mxu0 0.0
  %2956 = vmatprep.subr.mxu0 0.0
  %2957 = vmatpush1.msra.mxu0 0.0
  %2958 = vmatprep.subr.mxu0 0.0
  %2959 = vmatpush1.msra.mxu0 0.0
  %2960 = vmatprep.subr.mxu0 0.0
  %2961 = vmatpush1.msra.mxu0 0.0
  %2962 = vmatprep.subr.mxu0 0.0
  %2963 = vmatpush1.msra.mxu0 0.0
  %2964 = vmatprep.subr.mxu0 0.0
  %2965 = vmatpush1.msra.mxu0 0.0
  %2966 = vmatprep.subr.mxu0 0.0
  %2967 = vmatpush1.msra.mxu0 0.0
  %2968 = vmatprep.subr.mxu0 0.0
  %2969 = vmatpush1.msra.mxu0 0.0
  %2970 = vmatprep.subr.mxu0 0.0
  %2971 = vmatpush1.msra.mxu0 0.0
  %2972 = vmatprep.subr.mxu0 0.0
  %2973 = vmatpush1.msra.mxu0 0.0
  %2974 = vmatprep.subr.mxu0 0.0
  %2975 = vmatpush1.msra.mxu0 0.0
  %2976 = vmatprep.subr.mxu0 0.0
  %2977 = vmatpush1.msra.mxu0 0.0
  %2978 = vmatprep.subr.mxu0 0.0
  %2979 = vmatpush1.msra.mxu0 0.0
  %2980 = vmatprep.subr.mxu0 0.0
  %2981 = vmatpush1.msra.mxu0 0.0
  %2982 = vmatprep.subr.mxu0 0.0
  %2983 = vmatpush1.msra.mxu0 0.0
  %2984 = vmatprep.subr.mxu0 0.0
  %2985 = vmatpush1.msra.mxu0 0.0
  %2986 = vmatprep.mubr.f32.mxu0 0.0
  %2987 = vmatmul.mubr.f32.gmra.mrb[0].mxu0 %v206
  %v2988 = vpop.f32.mrb[0].mxu0
  %v2989 = vadd.f32 %v201, %v2988
  %v2990 = vpop.f32.mrb[0].mxu0
  %v2991 = vadd.f32 %v201, %v2990
  %2992 = vdwg.mxu0
  %2993 = vmatprep.subr.mxu0 %v2920
  %2994 = vmatpush1.msra.mxu0 %v2917
  %2995 = vmatprep.subr.mxu0 0.0
  %2996 = vmatpush1.msra.mxu0 0.0
  %2997 = vmatprep.subr.mxu0 0.0
  %2998 = vmatpush1.msra.mxu0 0.0
  %2999 = vmatprep.subr.mxu0 0.0
  %3000 = vmatpush1.msra.mxu0 0.0
  %3001 = vmatprep.subr.mxu0 0.0
  %3002 = vmatpush1.msra.mxu0 0.0
  %3003 = vmatprep.subr.mxu0 0.0
  %3004 = vmatpush1.msra.mxu0 0.0
  %3005 = vmatprep.subr.mxu0 0.0
  %3006 = vmatpush1.msra.mxu0 0.0
  %3007 = vmatprep.subr.mxu0 0.0
  %3008 = vmatpush1.msra.mxu0 0.0
  %3009 = vmatprep.subr.mxu0 0.0
  %3010 = vmatpush1.msra.mxu0 0.0
  %3011 = vmatprep.subr.mxu0 0.0
  %3012 = vmatpush1.msra.mxu0 0.0
  %3013 = vmatprep.subr.mxu0 0.0
  %3014 = vmatpush1.msra.mxu0 0.0
  %3015 = vmatprep.subr.mxu0 0.0
  %3016 = vmatpush1.msra.mxu0 0.0
  %3017 = vmatprep.subr.mxu0 0.0
  %3018 = vmatpush1.msra.mxu0 0.0
  %3019 = vmatprep.subr.mxu0 0.0
  %3020 = vmatpush1.msra.mxu0 0.0
  %3021 = vmatprep.subr.mxu0 0.0
  %3022 = vmatpush1.msra.mxu0 0.0
  %3023 = vmatprep.subr.mxu0 0.0
  %3024 = vmatpush1.msra.mxu0 0.0
  %3025 = vmatprep.subr.mxu0 0.0
  %3026 = vmatpush1.msra.mxu0 0.0
  %3027 = vmatprep.subr.mxu0 0.0
  %3028 = vmatpush1.msra.mxu0 0.0
  %3029 = vmatprep.subr.mxu0 0.0
  %3030 = vmatpush1.msra.mxu0 0.0
  %3031 = vmatprep.subr.mxu0 0.0
  %3032 = vmatpush1.msra.mxu0 0.0
  %3033 = vmatprep.subr.mxu0 0.0
  %3034 = vmatpush1.msra.mxu0 0.0
  %3035 = vmatprep.subr.mxu0 0.0
  %3036 = vmatpush1.msra.mxu0 0.0
  %3037 = vmatprep.subr.mxu0 0.0
  %3038 = vmatpush1.msra.mxu0 0.0
  %3039 = vmatprep.subr.mxu0 0.0
  %3040 = vmatpush1.msra.mxu0 0.0
  %3041 = vmatprep.subr.mxu0 0.0
  %3042 = vmatpush1.msra.mxu0 0.0
  %3043 = vmatprep.subr.mxu0 0.0
  %3044 = vmatpush1.msra.mxu0 0.0
  %3045 = vmatprep.subr.mxu0 0.0
  %3046 = vmatpush1.msra.mxu0 0.0
  %3047 = vmatprep.subr.mxu0 0.0
  %3048 = vmatpush1.msra.mxu0 0.0
  %3049 = vmatprep.subr.mxu0 0.0
  %3050 = vmatpush1.msra.mxu0 0.0
  %3051 = vmatprep.subr.mxu0 0.0
  %3052 = vmatpush1.msra.mxu0 0.0
  %3053 = vmatprep.subr.mxu0 0.0
  %3054 = vmatpush1.msra.mxu0 0.0
  %3055 = vmatprep.subr.mxu0 0.0
  %3056 = vmatpush1.msra.mxu0 0.0
  %3057 = vmatprep.mubr.f32.mxu0 0.0
  %3058 = vmatmul.mubr.f32.gmra.mrb[0].mxu0 %v206
  %v3059 = vpop.f32.mrb[0].mxu0
  %v3060 = vadd.f32 %v201, %v3059
  %v3061 = vpop.f32.mrb[0].mxu0
  %v3062 = vadd.f32 %v201, %v3061
  %3063 = vdwg.mxu0
  %v3064 = vmul.f32 %v2989, 0.5
  %v3065 = vmul.f32 %v2991, 0.5
  %v3066 = vmul.f32 %v3060, 0.5
  %v3067 = vmul.f32 %v3062, 0.5
  %v3068 = vmul.f32 %v2989, 0.70710677
  %v3069 = vmul.f32 %v2991, 0.70710677
  %v3070 = vmul.f32 %v3060, 0.70710677
  %v3071 = vmul.f32 %v3062, 0.70710677
  %v3072 = verf.f32.pop %v3068
  %v3073 = verf.f32.pop %v3069
  %v3074 = verf.f32.pop %v3070
  %v3075 = verf.f32.pop %v3071
  %v3076 = vadd.f32 %v3072, 1.0
  %v3077 = vadd.f32 %v3073, 1.0
  %v3078 = vadd.f32 %v3074, 1.0
  %v3079 = vadd.f32 %v3075, 1.0
  %v3080 = vmul.f32 %v3064, %v3076
  %v3081 = vmul.f32 %v3065, %v3077
  %v3082 = vmul.f32 %v3066, %v3078
  %v3083 = vmul.f32 %v3067, %v3079
  %v3085 = vsel %vm208, %v3080, 0
  %v3088 = vsel %vm208, %v3081, 0
  %v3091 = vsel %vm208, %v3082, 0
  %v3094 = vsel %vm208, %v3083, 0
  %3096 = vmatprep.subr.mxu0 %v3088
  %3097 = vmatpush1.msra.mxu0 %v3085
  %3098 = vmatprep.subr.mxu0 0.0
  %3099 = vmatpush1.msra.mxu0 0.0
  %3100 = vmatprep.subr.mxu0 0.0
  %3101 = vmatpush1.msra.mxu0 0.0
  %3102 = vmatprep.subr.mxu0 0.0
  %3103 = vmatpush1.msra.mxu0 0.0
  %3104 = vmatprep.subr.mxu0 0.0
  %3105 = vmatpush1.msra.mxu0 0.0
  %3106 = vmatprep.subr.mxu0 0.0
  %3107 = vmatpush1.msra.mxu0 0.0
  %3108 = vmatprep.subr.mxu0 0.0
  %3109 = vmatpush1.msra.mxu0 0.0
  %3110 = vmatprep.subr.mxu0 0.0
  %3111 = vmatpush1.msra.mxu0 0.0
  %3112 = vmatprep.subr.mxu0 0.0
  %3113 = vmatpush1.msra.mxu0 0.0
  %3114 = vmatprep.subr.mxu0 0.0
  %3115 = vmatpush1.msra.mxu0 0.0
  %3116 = vmatprep.subr.mxu0 0.0
  %3117 = vmatpush1.msra.mxu0 0.0
  %3118 = vmatprep.subr.mxu0 0.0
  %3119 = vmatpush1.msra.mxu0 0.0
  %3120 = vmatprep.subr.mxu0 0.0
  %3121 = vmatpush1.msra.mxu0 0.0
  %3122 = vmatprep.subr.mxu0 0.0
  %3123 = vmatpush1.msra.mxu0 0.0
  %3124 = vmatprep.subr.mxu0 0.0
  %3125 = vmatpush1.msra.mxu0 0.0
  %3126 = vmatprep.subr.mxu0 0.0
  %3127 = vmatpush1.msra.mxu0 0.0
  %3128 = vmatprep.subr.mxu0 0.0
  %3129 = vmatpush1.msra.mxu0 0.0
  %3130 = vmatprep.subr.mxu0 0.0
  %3131 = vmatpush1.msra.mxu0 0.0
  %3132 = vmatprep.subr.mxu0 0.0
  %3133 = vmatpush1.msra.mxu0 0.0
  %3134 = vmatprep.subr.mxu0 0.0
  %3135 = vmatpush1.msra.mxu0 0.0
  %3136 = vmatprep.subr.mxu0 0.0
  %3137 = vmatpush1.msra.mxu0 0.0
  %3138 = vmatprep.subr.mxu0 0.0
  %3139 = vmatpush1.msra.mxu0 0.0
  %3140 = vmatprep.subr.mxu0 0.0
  %3141 = vmatpush1.msra.mxu0 0.0
  %3142 = vmatprep.subr.mxu0 0.0
  %3143 = vmatpush1.msra.mxu0 0.0
  %3144 = vmatprep.subr.mxu0 0.0
  %3145 = vmatpush1.msra.mxu0 0.0
  %3146 = vmatprep.subr.mxu0 0.0
  %3147 = vmatpush1.msra.mxu0 0.0
  %3148 = vmatprep.subr.mxu0 0.0
  %3149 = vmatpush1.msra.mxu0 0.0
  %3150 = vmatprep.subr.mxu0 0.0
  %3151 = vmatpush1.msra.mxu0 0.0
  %3152 = vmatprep.subr.mxu0 0.0
  %3153 = vmatpush1.msra.mxu0 0.0
  %3154 = vmatprep.subr.mxu0 0.0
  %3155 = vmatpush1.msra.mxu0 0.0
  %3156 = vmatprep.subr.mxu0 0.0
  %3157 = vmatpush1.msra.mxu0 0.0
  %3158 = vmatprep.subr.mxu0 0.0
  %3159 = vmatpush1.msra.mxu0 0.0
  %3160 = vmatprep.mubr.f32.mxu0 0.0
  %3161 = vmatmul.mubr.f32.gmra.mrb[0].mxu0 %v389
  %v3162 = vpop.f32.mrb[0].mxu0
  %v3163 = vadd.f32 %v385, %v3162
  %v3164 = vpop.f32.mrb[0].mxu0
  %v3165 = vadd.f32 %v385, %v3164
  %3166 = vdwg.mxu0
  %3167 = vmatprep.subr.mxu0 %v3094
  %3168 = vmatpush1.msra.mxu0 %v3091
  %3169 = vmatprep.subr.mxu0 0.0
  %3170 = vmatpush1.msra.mxu0 0.0
  %3171 = vmatprep.subr.mxu0 0.0
  %3172 = vmatpush1.msra.mxu0 0.0
  %3173 = vmatprep.subr.mxu0 0.0
  %3174 = vmatpush1.msra.mxu0 0.0
  %3175 = vmatprep.subr.mxu0 0.0
  %3176 = vmatpush1.msra.mxu0 0.0
  %3177 = vmatprep.subr.mxu0 0.0
  %3178 = vmatpush1.msra.mxu0 0.0
  %3179 = vmatprep.subr.mxu0 0.0
  %3180 = vmatpush1.msra.mxu0 0.0
  %3181 = vmatprep.subr.mxu0 0.0
  %3182 = vmatpush1.msra.mxu0 0.0
  %3183 = vmatprep.subr.mxu0 0.0
  %3184 = vmatpush1.msra.mxu0 0.0
  %3185 = vmatprep.subr.mxu0 0.0
  %3186 = vmatpush1.msra.mxu0 0.0
  %3187 = vmatprep.subr.mxu0 0.0
  %3188 = vmatpush1.msra.mxu0 0.0
  %3189 = vmatprep.subr.mxu0 0.0
  %3190 = vmatpush1.msra.mxu0 0.0
  %3191 = vmatprep.subr.mxu0 0.0
  %3192 = vmatpush1.msra.mxu0 0.0
  %3193 = vmatprep.subr.mxu0 0.0
  %3194 = vmatpush1.msra.mxu0 0.0
  %3195 = vmatprep.subr.mxu0 0.0
  %3196 = vmatpush1.msra.mxu0 0.0
  %3197 = vmatprep.subr.mxu0 0.0
  %3198 = vmatpush1.msra.mxu0 0.0
  %3199 = vmatprep.subr.mxu0 0.0
  %3200 = vmatpush1.msra.mxu0 0.0
  %3201 = vmatprep.subr.mxu0 0.0
  %3202 = vmatpush1.msra.mxu0 0.0
  %3203 = vmatprep.subr.mxu0 0.0
  %3204 = vmatpush1.msra.mxu0 0.0
  %3205 = vmatprep.subr.mxu0 0.0
  %3206 = vmatpush1.msra.mxu0 0.0
  %3207 = vmatprep.subr.mxu0 0.0
  %3208 = vmatpush1.msra.mxu0 0.0
  %3209 = vmatprep.subr.mxu0 0.0
  %3210 = vmatpush1.msra.mxu0 0.0
  %3211 = vmatprep.subr.mxu0 0.0
  %3212 = vmatpush1.msra.mxu0 0.0
  %3213 = vmatprep.subr.mxu0 0.0
  %3214 = vmatpush1.msra.mxu0 0.0
  %3215 = vmatprep.subr.mxu0 0.0
  %3216 = vmatpush1.msra.mxu0 0.0
  %3217 = vmatprep.subr.mxu0 0.0
  %3218 = vmatpush1.msra.mxu0 0.0
  %3219 = vmatprep.subr.mxu0 0.0
  %3220 = vmatpush1.msra.mxu0 0.0
  %3221 = vmatprep.subr.mxu0 0.0
  %3222 = vmatpush1.msra.mxu0 0.0
  %3223 = vmatprep.subr.mxu0 0.0
  %3224 = vmatpush1.msra.mxu0 0.0
  %3225 = vmatprep.subr.mxu0 0.0
  %3226 = vmatpush1.msra.mxu0 0.0
  %3227 = vmatprep.subr.mxu0 0.0
  %3228 = vmatpush1.msra.mxu0 0.0
  %3229 = vmatprep.subr.mxu0 0.0
  %3230 = vmatpush1.msra.mxu0 0.0
  %3231 = vmatprep.mubr.f32.mxu0 0.0
  %3232 = vmatmul.mubr.f32.gmra.mrb[0].mxu0 %v389
  %v3233 = vpop.f32.mrb[0].mxu0
  %v3234 = vadd.f32 %v385, %v3233
  %v3235 = vpop.f32.mrb[0].mxu0
  %v3236 = vadd.f32 %v385, %v3235
  %3237 = vdwg.mxu0
  %v3242 = vcombine.low %v3163, %v3165
  %v3243 = vcombine.low %v3234, %v3236
  %v3245 = vunpack.c.l.s4 1966171168
  %v3246 = vunpack.c.0.s8 %v3245
  %v3247 = vlaneseq
  %v3248 = vshrl.u32 %v3247, 7
  %v3249 = vsub.s32 %v3246, %v3248
  %v3250 = vrot.slane %v3242, %v3249
  %v3252 = vunpack.c.l.s4 1966171168
  %v3253 = vunpack.c.0.s8 %v3252
  %v3254 = vlaneseq
  %v3255 = vshrl.u32 %v3254, 7
  %v3256 = vsub.s32 %v3253, %v3255
  %v3257 = vrot.slane %v3243, %v3256
  %v3258 = vcombine.low %v3250, %v3257
  %v3260 = vunpack.c.l.s4 1966171168
  %v3261 = vunpack.c.0.s8 %v3260
  %v3262 = vlaneseq
  %v3263 = vshrl.u32 %v3262, 7
  %v3264 = vsub.s32 %v3261, %v3263
  %v3265 = vrot.slane %v3258, %v3264
  %s3267 = scalar_lea.vmem %s2, 20
  %3268 = vst.msk [vmem:[%s3267] sm:$0xf] %vm577, %v3265
  %s3269 = scalar_lea.vmem %s1, 192
  %v3270 = vld [vmem:[%s3269] sm:$0x1f]
  %v3271 = vld [vmem:[%s3269 + $0x8] sm:$0x1f]
  %v3272 = vld [vmem:[%s3269 + $0x10] sm:$0x1f]
  %v3273 = vld [vmem:[%s3269 + $0x18] sm:$0x1f]
  %v3275 = vsel %vm24, %v3270, 0
  %v3278 = vsel %vm24, %v3271, 0
  %v3281 = vsel %vm24, %v3272, 0
  %v3284 = vsel %vm24, %v3273, 0
  %3286 = vmatprep.subr.mxu0 %v3278
  %3287 = vmatpush1.msra.mxu0 %v3275
  %3288 = vmatprep.subr.mxu0 0.0
  %3289 = vmatpush1.msra.mxu0 0.0
  %3290 = vmatprep.subr.mxu0 0.0
  %3291 = vmatpush1.msra.mxu0 0.0
  %3292 = vmatprep.subr.mxu0 0.0
  %3293 = vmatpush1.msra.mxu0 0.0
  %3294 = vmatprep.subr.mxu0 0.0
  %3295 = vmatpush1.msra.mxu0 0.0
  %3296 = vmatprep.subr.mxu0 0.0
  %3297 = vmatpush1.msra.mxu0 0.0
  %3298 = vmatprep.subr.mxu0 0.0
  %3299 = vmatpush1.msra.mxu0 0.0
  %3300 = vmatprep.subr.mxu0 0.0
  %3301 = vmatpush1.msra.mxu0 0.0
  %3302 = vmatprep.subr.mxu0 0.0
  %3303 = vmatpush1.msra.mxu0 0.0
  %3304 = vmatprep.subr.mxu0 0.0
  %3305 = vmatpush1.msra.mxu0 0.0
  %3306 = vmatprep.subr.mxu0 0.0
  %3307 = vmatpush1.msra.mxu0 0.0
  %3308 = vmatprep.subr.mxu0 0.0
  %3309 = vmatpush1.msra.mxu0 0.0
  %3310 = vmatprep.subr.mxu0 0.0
  %3311 = vmatpush1.msra.mxu0 0.0
  %3312 = vmatprep.subr.mxu0 0.0
  %3313 = vmatpush1.msra.mxu0 0.0
  %3314 = vmatprep.subr.mxu0 0.0
  %3315 = vmatpush1.msra.mxu0 0.0
  %3316 = vmatprep.subr.mxu0 0.0
  %3317 = vmatpush1.msra.mxu0 0.0
  %3318 = vmatprep.subr.mxu0 0.0
  %3319 = vmatpush1.msra.mxu0 0.0
  %3320 = vmatprep.subr.mxu0 0.0
  %3321 = vmatpush1.msra.mxu0 0.0
  %3322 = vmatprep.subr.mxu0 0.0
  %3323 = vmatpush1.msra.mxu0 0.0
  %3324 = vmatprep.subr.mxu0 0.0
  %3325 = vmatpush1.msra.mxu0 0.0
  %3326 = vmatprep.subr.mxu0 0.0
  %3327 = vmatpush1.msra.mxu0 0.0
  %3328 = vmatprep.subr.mxu0 0.0
  %3329 = vmatpush1.msra.mxu0 0.0
  %3330 = vmatprep.subr.mxu0 0.0
  %3331 = vmatpush1.msra.mxu0 0.0
  %3332 = vmatprep.subr.mxu0 0.0
  %3333 = vmatpush1.msra.mxu0 0.0
  %3334 = vmatprep.subr.mxu0 0.0
  %3335 = vmatpush1.msra.mxu0 0.0
  %3336 = vmatprep.subr.mxu0 0.0
  %3337 = vmatpush1.msra.mxu0 0.0
  %3338 = vmatprep.subr.mxu0 0.0
  %3339 = vmatpush1.msra.mxu0 0.0
  %3340 = vmatprep.subr.mxu0 0.0
  %3341 = vmatpush1.msra.mxu0 0.0
  %3342 = vmatprep.subr.mxu0 0.0
  %3343 = vmatpush1.msra.mxu0 0.0
  %3344 = vmatprep.subr.mxu0 0.0
  %3345 = vmatpush1.msra.mxu0 0.0
  %3346 = vmatprep.subr.mxu0 0.0
  %3347 = vmatpush1.msra.mxu0 0.0
  %3348 = vmatprep.subr.mxu0 0.0
  %3349 = vmatpush1.msra.mxu0 0.0
  %3350 = vmatprep.mubr.f32.mxu0 0.0
  %3351 = vmatmul.mubr.f32.gmra.mrb[0].mxu0 %v22
  %v3352 = vpop.f32.mrb[0].mxu0
  %v3353 = vadd.f32 %v19, %v3352
  %v3354 = vpop.f32.mrb[0].mxu0
  %v3355 = vadd.f32 %v19, %v3354
  %3356 = vdwg.mxu0
  %3357 = vmatprep.subr.mxu0 %v3284
  %3358 = vmatpush1.msra.mxu0 %v3281
  %3359 = vmatprep.subr.mxu0 0.0
  %3360 = vmatpush1.msra.mxu0 0.0
  %3361 = vmatprep.subr.mxu0 0.0
  %3362 = vmatpush1.msra.mxu0 0.0
  %3363 = vmatprep.subr.mxu0 0.0
  %3364 = vmatpush1.msra.mxu0 0.0
  %3365 = vmatprep.subr.mxu0 0.0
  %3366 = vmatpush1.msra.mxu0 0.0
  %3367 = vmatprep.subr.mxu0 0.0
  %3368 = vmatpush1.msra.mxu0 0.0
  %3369 = vmatprep.subr.mxu0 0.0
  %3370 = vmatpush1.msra.mxu0 0.0
  %3371 = vmatprep.subr.mxu0 0.0
  %3372 = vmatpush1.msra.mxu0 0.0
  %3373 = vmatprep.subr.mxu0 0.0
  %3374 = vmatpush1.msra.mxu0 0.0
  %3375 = vmatprep.subr.mxu0 0.0
  %3376 = vmatpush1.msra.mxu0 0.0
  %3377 = vmatprep.subr.mxu0 0.0
  %3378 = vmatpush1.msra.mxu0 0.0
  %3379 = vmatprep.subr.mxu0 0.0
  %3380 = vmatpush1.msra.mxu0 0.0
  %3381 = vmatprep.subr.mxu0 0.0
  %3382 = vmatpush1.msra.mxu0 0.0
  %3383 = vmatprep.subr.mxu0 0.0
  %3384 = vmatpush1.msra.mxu0 0.0
  %3385 = vmatprep.subr.mxu0 0.0
  %3386 = vmatpush1.msra.mxu0 0.0
  %3387 = vmatprep.subr.mxu0 0.0
  %3388 = vmatpush1.msra.mxu0 0.0
  %3389 = vmatprep.subr.mxu0 0.0
  %3390 = vmatpush1.msra.mxu0 0.0
  %3391 = vmatprep.subr.mxu0 0.0
  %3392 = vmatpush1.msra.mxu0 0.0
  %3393 = vmatprep.subr.mxu0 0.0
  %3394 = vmatpush1.msra.mxu0 0.0
  %3395 = vmatprep.subr.mxu0 0.0
  %3396 = vmatpush1.msra.mxu0 0.0
  %3397 = vmatprep.subr.mxu0 0.0
  %3398 = vmatpush1.msra.mxu0 0.0
  %3399 = vmatprep.subr.mxu0 0.0
  %3400 = vmatpush1.msra.mxu0 0.0
  %3401 = vmatprep.subr.mxu0 0.0
  %3402 = vmatpush1.msra.mxu0 0.0
  %3403 = vmatprep.subr.mxu0 0.0
  %3404 = vmatpush1.msra.mxu0 0.0
  %3405 = vmatprep.subr.mxu0 0.0
  %3406 = vmatpush1.msra.mxu0 0.0
  %3407 = vmatprep.subr.mxu0 0.0
  %3408 = vmatpush1.msra.mxu0 0.0
  %3409 = vmatprep.subr.mxu0 0.0
  %3410 = vmatpush1.msra.mxu0 0.0
  %3411 = vmatprep.subr.mxu0 0.0
  %3412 = vmatpush1.msra.mxu0 0.0
  %3413 = vmatprep.subr.mxu0 0.0
  %3414 = vmatpush1.msra.mxu0 0.0
  %3415 = vmatprep.subr.mxu0 0.0
  %3416 = vmatpush1.msra.mxu0 0.0
  %3417 = vmatprep.subr.mxu0 0.0
  %3418 = vmatpush1.msra.mxu0 0.0
  %3419 = vmatprep.subr.mxu0 0.0
  %3420 = vmatpush1.msra.mxu0 0.0
  %3421 = vmatprep.mubr.f32.mxu0 0.0
  %3422 = vmatmul.mubr.f32.gmra.mrb[0].mxu0 %v22
  %v3423 = vpop.f32.mrb[0].mxu0
  %v3424 = vadd.f32 %v19, %v3423
  %v3425 = vpop.f32.mrb[0].mxu0
  %v3426 = vadd.f32 %v19, %v3425
  %3427 = vdwg.mxu0
  %v3428 = vmul.f32 %v3353, 0.5
  %v3429 = vmul.f32 %v3355, 0.5
  %v3430 = vmul.f32 %v3424, 0.5
  %v3431 = vmul.f32 %v3426, 0.5
  %v3432 = vmul.f32 %v3353, 0.70710677
  %v3433 = vmul.f32 %v3355, 0.70710677
  %v3434 = vmul.f32 %v3424, 0.70710677
  %v3435 = vmul.f32 %v3426, 0.70710677
  %v3436 = verf.f32.pop %v3432
  %v3437 = verf.f32.pop %v3433
  %v3438 = verf.f32.pop %v3434
  %v3439 = verf.f32.pop %v3435
  %v3440 = vadd.f32 %v3436, 1.0
  %v3441 = vadd.f32 %v3437, 1.0
  %v3442 = vadd.f32 %v3438, 1.0
  %v3443 = vadd.f32 %v3439, 1.0
  %v3444 = vmul.f32 %v3428, %v3440
  %v3445 = vmul.f32 %v3429, %v3441
  %v3446 = vmul.f32 %v3430, %v3442
  %v3447 = vmul.f32 %v3431, %v3443
  %v3449 = vsel %vm208, %v3444, 0
  %v3452 = vsel %vm208, %v3445, 0
  %v3455 = vsel %vm208, %v3446, 0
  %v3458 = vsel %vm208, %v3447, 0
  %3460 = vmatprep.subr.mxu0 %v3452
  %3461 = vmatpush1.msra.mxu0 %v3449
  %3462 = vmatprep.subr.mxu0 0.0
  %3463 = vmatpush1.msra.mxu0 0.0
  %3464 = vmatprep.subr.mxu0 0.0
  %3465 = vmatpush1.msra.mxu0 0.0
  %3466 = vmatprep.subr.mxu0 0.0
  %3467 = vmatpush1.msra.mxu0 0.0
  %3468 = vmatprep.subr.mxu0 0.0
  %3469 = vmatpush1.msra.mxu0 0.0
  %3470 = vmatprep.subr.mxu0 0.0
  %3471 = vmatpush1.msra.mxu0 0.0
  %3472 = vmatprep.subr.mxu0 0.0
  %3473 = vmatpush1.msra.mxu0 0.0
  %3474 = vmatprep.subr.mxu0 0.0
  %3475 = vmatpush1.msra.mxu0 0.0
  %3476 = vmatprep.subr.mxu0 0.0
  %3477 = vmatpush1.msra.mxu0 0.0
  %3478 = vmatprep.subr.mxu0 0.0
  %3479 = vmatpush1.msra.mxu0 0.0
  %3480 = vmatprep.subr.mxu0 0.0
  %3481 = vmatpush1.msra.mxu0 0.0
  %3482 = vmatprep.subr.mxu0 0.0
  %3483 = vmatpush1.msra.mxu0 0.0
  %3484 = vmatprep.subr.mxu0 0.0
  %3485 = vmatpush1.msra.mxu0 0.0
  %3486 = vmatprep.subr.mxu0 0.0
  %3487 = vmatpush1.msra.mxu0 0.0
  %3488 = vmatprep.subr.mxu0 0.0
  %3489 = vmatpush1.msra.mxu0 0.0
  %3490 = vmatprep.subr.mxu0 0.0
  %3491 = vmatpush1.msra.mxu0 0.0
  %3492 = vmatprep.subr.mxu0 0.0
  %3493 = vmatpush1.msra.mxu0 0.0
  %3494 = vmatprep.subr.mxu0 0.0
  %3495 = vmatpush1.msra.mxu0 0.0
  %3496 = vmatprep.subr.mxu0 0.0
  %3497 = vmatpush1.msra.mxu0 0.0
  %3498 = vmatprep.subr.mxu0 0.0
  %3499 = vmatpush1.msra.mxu0 0.0
  %3500 = vmatprep.subr.mxu0 0.0
  %3501 = vmatpush1.msra.mxu0 0.0
  %3502 = vmatprep.subr.mxu0 0.0
  %3503 = vmatpush1.msra.mxu0 0.0
  %3504 = vmatprep.subr.mxu0 0.0
  %3505 = vmatpush1.msra.mxu0 0.0
  %3506 = vmatprep.subr.mxu0 0.0
  %3507 = vmatpush1.msra.mxu0 0.0
  %3508 = vmatprep.subr.mxu0 0.0
  %3509 = vmatpush1.msra.mxu0 0.0
  %3510 = vmatprep.subr.mxu0 0.0
  %3511 = vmatpush1.msra.mxu0 0.0
  %3512 = vmatprep.subr.mxu0 0.0
  %3513 = vmatpush1.msra.mxu0 0.0
  %3514 = vmatprep.subr.mxu0 0.0
  %3515 = vmatpush1.msra.mxu0 0.0
  %3516 = vmatprep.subr.mxu0 0.0
  %3517 = vmatpush1.msra.mxu0 0.0
  %3518 = vmatprep.subr.mxu0 0.0
  %3519 = vmatpush1.msra.mxu0 0.0
  %3520 = vmatprep.subr.mxu0 0.0
  %3521 = vmatpush1.msra.mxu0 0.0
  %3522 = vmatprep.subr.mxu0 0.0
  %3523 = vmatpush1.msra.mxu0 0.0
  %3524 = vmatprep.mubr.f32.mxu0 0.0
  %3525 = vmatmul.mubr.f32.gmra.mrb[0].mxu0 %v206
  %v3526 = vpop.f32.mrb[0].mxu0
  %v3527 = vadd.f32 %v201, %v3526
  %v3528 = vpop.f32.mrb[0].mxu0
  %v3529 = vadd.f32 %v201, %v3528
  %3530 = vdwg.mxu0
  %3531 = vmatprep.subr.mxu0 %v3458
  %3532 = vmatpush1.msra.mxu0 %v3455
  %3533 = vmatprep.subr.mxu0 0.0
  %3534 = vmatpush1.msra.mxu0 0.0
  %3535 = vmatprep.subr.mxu0 0.0
  %3536 = vmatpush1.msra.mxu0 0.0
  %3537 = vmatprep.subr.mxu0 0.0
  %3538 = vmatpush1.msra.mxu0 0.0
  %3539 = vmatprep.subr.mxu0 0.0
  %3540 = vmatpush1.msra.mxu0 0.0
  %3541 = vmatprep.subr.mxu0 0.0
  %3542 = vmatpush1.msra.mxu0 0.0
  %3543 = vmatprep.subr.mxu0 0.0
  %3544 = vmatpush1.msra.mxu0 0.0
  %3545 = vmatprep.subr.mxu0 0.0
  %3546 = vmatpush1.msra.mxu0 0.0
  %3547 = vmatprep.subr.mxu0 0.0
  %3548 = vmatpush1.msra.mxu0 0.0
  %3549 = vmatprep.subr.mxu0 0.0
  %3550 = vmatpush1.msra.mxu0 0.0
  %3551 = vmatprep.subr.mxu0 0.0
  %3552 = vmatpush1.msra.mxu0 0.0
  %3553 = vmatprep.subr.mxu0 0.0
  %3554 = vmatpush1.msra.mxu0 0.0
  %3555 = vmatprep.subr.mxu0 0.0
  %3556 = vmatpush1.msra.mxu0 0.0
  %3557 = vmatprep.subr.mxu0 0.0
  %3558 = vmatpush1.msra.mxu0 0.0
  %3559 = vmatprep.subr.mxu0 0.0
  %3560 = vmatpush1.msra.mxu0 0.0
  %3561 = vmatprep.subr.mxu0 0.0
  %3562 = vmatpush1.msra.mxu0 0.0
  %3563 = vmatprep.subr.mxu0 0.0
  %3564 = vmatpush1.msra.mxu0 0.0
  %3565 = vmatprep.subr.mxu0 0.0
  %3566 = vmatpush1.msra.mxu0 0.0
  %3567 = vmatprep.subr.mxu0 0.0
  %3568 = vmatpush1.msra.mxu0 0.0
  %3569 = vmatprep.subr.mxu0 0.0
  %3570 = vmatpush1.msra.mxu0 0.0
  %3571 = vmatprep.subr.mxu0 0.0
  %3572 = vmatpush1.msra.mxu0 0.0
  %3573 = vmatprep.subr.mxu0 0.0
  %3574 = vmatpush1.msra.mxu0 0.0
  %3575 = vmatprep.subr.mxu0 0.0
  %3576 = vmatpush1.msra.mxu0 0.0
  %3577 = vmatprep.subr.mxu0 0.0
  %3578 = vmatpush1.msra.mxu0 0.0
  %3579 = vmatprep.subr.mxu0 0.0
  %3580 = vmatpush1.msra.mxu0 0.0
  %3581 = vmatprep.subr.mxu0 0.0
  %3582 = vmatpush1.msra.mxu0 0.0
  %3583 = vmatprep.subr.mxu0 0.0
  %3584 = vmatpush1.msra.mxu0 0.0
  %3585 = vmatprep.subr.mxu0 0.0
  %3586 = vmatpush1.msra.mxu0 0.0
  %3587 = vmatprep.subr.mxu0 0.0
  %3588 = vmatpush1.msra.mxu0 0.0
  %3589 = vmatprep.subr.mxu0 0.0
  %3590 = vmatpush1.msra.mxu0 0.0
  %3591 = vmatprep.subr.mxu0 0.0
  %3592 = vmatpush1.msra.mxu0 0.0
  %3593 = vmatprep.subr.mxu0 0.0
  %3594 = vmatpush1.msra.mxu0 0.0
  %3595 = vmatprep.mubr.f32.mxu0 0.0
  %3596 = vmatmul.mubr.f32.gmra.mrb[0].mxu0 %v206
  %v3597 = vpop.f32.mrb[0].mxu0
  %v3598 = vadd.f32 %v201, %v3597
  %v3599 = vpop.f32.mrb[0].mxu0
  %v3600 = vadd.f32 %v201, %v3599
  %3601 = vdwg.mxu0
  %v3602 = vmul.f32 %v3527, 0.5
  %v3603 = vmul.f32 %v3529, 0.5
  %v3604 = vmul.f32 %v3598, 0.5
  %v3605 = vmul.f32 %v3600, 0.5
  %v3606 = vmul.f32 %v3527, 0.70710677
  %v3607 = vmul.f32 %v3529, 0.70710677
  %v3608 = vmul.f32 %v3598, 0.70710677
  %v3609 = vmul.f32 %v3600, 0.70710677
  %v3610 = verf.f32.pop %v3606
  %v3611 = verf.f32.pop %v3607
  %v3612 = verf.f32.pop %v3608
  %v3613 = verf.f32.pop %v3609
  %v3614 = vadd.f32 %v3610, 1.0
  %v3615 = vadd.f32 %v3611, 1.0
  %v3616 = vadd.f32 %v3612, 1.0
  %v3617 = vadd.f32 %v3613, 1.0
  %v3618 = vmul.f32 %v3602, %v3614
  %v3619 = vmul.f32 %v3603, %v3615
  %v3620 = vmul.f32 %v3604, %v3616
  %v3621 = vmul.f32 %v3605, %v3617
  %v3623 = vsel %vm208, %v3618, 0
  %v3626 = vsel %vm208, %v3619, 0
  %v3629 = vsel %vm208, %v3620, 0
  %v3632 = vsel %vm208, %v3621, 0
  %3634 = vmatprep.subr.mxu0 %v3626
  %3635 = vmatpush1.msra.mxu0 %v3623
  %3636 = vmatprep.subr.mxu0 0.0
  %3637 = vmatpush1.msra.mxu0 0.0
  %3638 = vmatprep.subr.mxu0 0.0
  %3639 = vmatpush1.msra.mxu0 0.0
  %3640 = vmatprep.subr.mxu0 0.0
  %3641 = vmatpush1.msra.mxu0 0.0
  %3642 = vmatprep.subr.mxu0 0.0
  %3643 = vmatpush1.msra.mxu0 0.0
  %3644 = vmatprep.subr.mxu0 0.0
  %3645 = vmatpush1.msra.mxu0 0.0
  %3646 = vmatprep.subr.mxu0 0.0
  %3647 = vmatpush1.msra.mxu0 0.0
  %3648 = vmatprep.subr.mxu0 0.0
  %3649 = vmatpush1.msra.mxu0 0.0
  %3650 = vmatprep.subr.mxu0 0.0
  %3651 = vmatpush1.msra.mxu0 0.0
  %3652 = vmatprep.subr.mxu0 0.0
  %3653 = vmatpush1.msra.mxu0 0.0
  %3654 = vmatprep.subr.mxu0 0.0
  %3655 = vmatpush1.msra.mxu0 0.0
  %3656 = vmatprep.subr.mxu0 0.0
  %3657 = vmatpush1.msra.mxu0 0.0
  %3658 = vmatprep.subr.mxu0 0.0
  %3659 = vmatpush1.msra.mxu0 0.0
  %3660 = vmatprep.subr.mxu0 0.0
  %3661 = vmatpush1.msra.mxu0 0.0
  %3662 = vmatprep.subr.mxu0 0.0
  %3663 = vmatpush1.msra.mxu0 0.0
  %3664 = vmatprep.subr.mxu0 0.0
  %3665 = vmatpush1.msra.mxu0 0.0
  %3666 = vmatprep.subr.mxu0 0.0
  %3667 = vmatpush1.msra.mxu0 0.0
  %3668 = vmatprep.subr.mxu0 0.0
  %3669 = vmatpush1.msra.mxu0 0.0
  %3670 = vmatprep.subr.mxu0 0.0
  %3671 = vmatpush1.msra.mxu0 0.0
  %3672 = vmatprep.subr.mxu0 0.0
  %3673 = vmatpush1.msra.mxu0 0.0
  %3674 = vmatprep.subr.mxu0 0.0
  %3675 = vmatpush1.msra.mxu0 0.0
  %3676 = vmatprep.subr.mxu0 0.0
  %3677 = vmatpush1.msra.mxu0 0.0
  %3678 = vmatprep.subr.mxu0 0.0
  %3679 = vmatpush1.msra.mxu0 0.0
  %3680 = vmatprep.subr.mxu0 0.0
  %3681 = vmatpush1.msra.mxu0 0.0
  %3682 = vmatprep.subr.mxu0 0.0
  %3683 = vmatpush1.msra.mxu0 0.0
  %3684 = vmatprep.subr.mxu0 0.0
  %3685 = vmatpush1.msra.mxu0 0.0
  %3686 = vmatprep.subr.mxu0 0.0
  %3687 = vmatpush1.msra.mxu0 0.0
  %3688 = vmatprep.subr.mxu0 0.0
  %3689 = vmatpush1.msra.mxu0 0.0
  %3690 = vmatprep.subr.mxu0 0.0
  %3691 = vmatpush1.msra.mxu0 0.0
  %3692 = vmatprep.subr.mxu0 0.0
  %3693 = vmatpush1.msra.mxu0 0.0
  %3694 = vmatprep.subr.mxu0 0.0
  %3695 = vmatpush1.msra.mxu0 0.0
  %3696 = vmatprep.subr.mxu0 0.0
  %3697 = vmatpush1.msra.mxu0 0.0
  %3698 = vmatprep.mubr.f32.mxu0 0.0
  %3699 = vmatmul.mubr.f32.gmra.mrb[0].mxu0 %v389
  %v3700 = vpop.f32.mrb[0].mxu0
  %v3701 = vadd.f32 %v385, %v3700
  %v3702 = vpop.f32.mrb[0].mxu0
  %v3703 = vadd.f32 %v385, %v3702
  %3704 = vdwg.mxu0
  %3705 = vmatprep.subr.mxu0 %v3632
  %3706 = vmatpush1.msra.mxu0 %v3629
  %3707 = vmatprep.subr.mxu0 0.0
  %3708 = vmatpush1.msra.mxu0 0.0
  %3709 = vmatprep.subr.mxu0 0.0
  %3710 = vmatpush1.msra.mxu0 0.0
  %3711 = vmatprep.subr.mxu0 0.0
  %3712 = vmatpush1.msra.mxu0 0.0
  %3713 = vmatprep.subr.mxu0 0.0
  %3714 = vmatpush1.msra.mxu0 0.0
  %3715 = vmatprep.subr.mxu0 0.0
  %3716 = vmatpush1.msra.mxu0 0.0
  %3717 = vmatprep.subr.mxu0 0.0
  %3718 = vmatpush1.msra.mxu0 0.0
  %3719 = vmatprep.subr.mxu0 0.0
  %3720 = vmatpush1.msra.mxu0 0.0
  %3721 = vmatprep.subr.mxu0 0.0
  %3722 = vmatpush1.msra.mxu0 0.0
  %3723 = vmatprep.subr.mxu0 0.0
  %3724 = vmatpush1.msra.mxu0 0.0
  %3725 = vmatprep.subr.mxu0 0.0
  %3726 = vmatpush1.msra.mxu0 0.0
  %3727 = vmatprep.subr.mxu0 0.0
  %3728 = vmatpush1.msra.mxu0 0.0
  %3729 = vmatprep.subr.mxu0 0.0
  %3730 = vmatpush1.msra.mxu0 0.0
  %3731 = vmatprep.subr.mxu0 0.0
  %3732 = vmatpush1.msra.mxu0 0.0
  %3733 = vmatprep.subr.mxu0 0.0
  %3734 = vmatpush1.msra.mxu0 0.0
  %3735 = vmatprep.subr.mxu0 0.0
  %3736 = vmatpush1.msra.mxu0 0.0
  %3737 = vmatprep.subr.mxu0 0.0
  %3738 = vmatpush1.msra.mxu0 0.0
  %3739 = vmatprep.subr.mxu0 0.0
  %3740 = vmatpush1.msra.mxu0 0.0
  %3741 = vmatprep.subr.mxu0 0.0
  %3742 = vmatpush1.msra.mxu0 0.0
  %3743 = vmatprep.subr.mxu0 0.0
  %3744 = vmatpush1.msra.mxu0 0.0
  %3745 = vmatprep.subr.mxu0 0.0
  %3746 = vmatpush1.msra.mxu0 0.0
  %3747 = vmatprep.subr.mxu0 0.0
  %3748 = vmatpush1.msra.mxu0 0.0
  %3749 = vmatprep.subr.mxu0 0.0
  %3750 = vmatpush1.msra.mxu0 0.0
  %3751 = vmatprep.subr.mxu0 0.0
  %3752 = vmatpush1.msra.mxu0 0.0
  %3753 = vmatprep.subr.mxu0 0.0
  %3754 = vmatpush1.msra.mxu0 0.0
  %3755 = vmatprep.subr.mxu0 0.0
  %3756 = vmatpush1.msra.mxu0 0.0
  %3757 = vmatprep.subr.mxu0 0.0
  %3758 = vmatpush1.msra.mxu0 0.0
  %3759 = vmatprep.subr.mxu0 0.0
  %3760 = vmatpush1.msra.mxu0 0.0
  %3761 = vmatprep.subr.mxu0 0.0
  %3762 = vmatpush1.msra.mxu0 0.0
  %3763 = vmatprep.subr.mxu0 0.0
  %3764 = vmatpush1.msra.mxu0 0.0
  %3765 = vmatprep.subr.mxu0 0.0
  %3766 = vmatpush1.msra.mxu0 0.0
  %3767 = vmatprep.subr.mxu0 0.0
  %3768 = vmatpush1.msra.mxu0 0.0
  %3769 = vmatprep.mubr.f32.mxu0 0.0
  %3770 = vmatmul.mubr.f32.gmra.mrb[0].mxu0 %v389
  %v3771 = vpop.f32.mrb[0].mxu0
  %v3772 = vadd.f32 %v385, %v3771
  %v3773 = vpop.f32.mrb[0].mxu0
  %v3774 = vadd.f32 %v385, %v3773
  %3775 = vdwg.mxu0
  %v3780 = vcombine.low %v3701, %v3703
  %v3781 = vcombine.low %v3772, %v3774
  %v3783 = vunpack.c.l.s4 1966171168
  %v3784 = vunpack.c.0.s8 %v3783
  %v3785 = vlaneseq
  %v3786 = vshrl.u32 %v3785, 7
  %v3787 = vsub.s32 %v3784, %v3786
  %v3788 = vrot.slane %v3780, %v3787
  %v3790 = vunpack.c.l.s4 1966171168
  %v3791 = vunpack.c.0.s8 %v3790
  %v3792 = vlaneseq
  %v3793 = vshrl.u32 %v3792, 7
  %v3794 = vsub.s32 %v3791, %v3793
  %v3795 = vrot.slane %v3781, %v3794
  %v3796 = vcombine.low %v3788, %v3795
  %v3798 = vunpack.c.l.s4 1966171168
  %v3799 = vunpack.c.0.s8 %v3798
  %v3800 = vlaneseq
  %v3801 = vshrl.u32 %v3800, 7
  %v3802 = vsub.s32 %v3799, %v3801
  %v3803 = vrot.slane %v3796, %v3802
  %s3805 = scalar_lea.vmem %s2, 24
  %3806 = vst.msk [vmem:[%s3805] sm:$0xf] %vm577, %v3803
  %s3807 = scalar_lea.vmem %s1, 224
  %v3808 = vld [vmem:[%s3807] sm:$0x1f]
  %v3809 = vld [vmem:[%s3807 + $0x8] sm:$0x1f]
  %v3810 = vld [vmem:[%s3807 + $0x10] sm:$0x1f]
  %v3811 = vld [vmem:[%s3807 + $0x18] sm:$0x1f]
  %v3813 = vsel %vm24, %v3808, 0
  %v3816 = vsel %vm24, %v3809, 0
  %v3819 = vsel %vm24, %v3810, 0
  %v3822 = vsel %vm24, %v3811, 0
  %3824 = vmatprep.subr.mxu0 %v3816
  %3825 = vmatpush1.msra.mxu0 %v3813
  %3826 = vmatprep.subr.mxu0 0.0
  %3827 = vmatpush1.msra.mxu0 0.0
  %3828 = vmatprep.subr.mxu0 0.0
  %3829 = vmatpush1.msra.mxu0 0.0
  %3830 = vmatprep.subr.mxu0 0.0
  %3831 = vmatpush1.msra.mxu0 0.0
  %3832 = vmatprep.subr.mxu0 0.0
  %3833 = vmatpush1.msra.mxu0 0.0
  %3834 = vmatprep.subr.mxu0 0.0
  %3835 = vmatpush1.msra.mxu0 0.0
  %3836 = vmatprep.subr.mxu0 0.0
  %3837 = vmatpush1.msra.mxu0 0.0
  %3838 = vmatprep.subr.mxu0 0.0
  %3839 = vmatpush1.msra.mxu0 0.0
  %3840 = vmatprep.subr.mxu0 0.0
  %3841 = vmatpush1.msra.mxu0 0.0
  %3842 = vmatprep.subr.mxu0 0.0
  %3843 = vmatpush1.msra.mxu0 0.0
  %3844 = vmatprep.subr.mxu0 0.0
  %3845 = vmatpush1.msra.mxu0 0.0
  %3846 = vmatprep.subr.mxu0 0.0
  %3847 = vmatpush1.msra.mxu0 0.0
  %3848 = vmatprep.subr.mxu0 0.0
  %3849 = vmatpush1.msra.mxu0 0.0
  %3850 = vmatprep.subr.mxu0 0.0
  %3851 = vmatpush1.msra.mxu0 0.0
  %3852 = vmatprep.subr.mxu0 0.0
  %3853 = vmatpush1.msra.mxu0 0.0
  %3854 = vmatprep.subr.mxu0 0.0
  %3855 = vmatpush1.msra.mxu0 0.0
  %3856 = vmatprep.subr.mxu0 0.0
  %3857 = vmatpush1.msra.mxu0 0.0
  %3858 = vmatprep.subr.mxu0 0.0
  %3859 = vmatpush1.msra.mxu0 0.0
  %3860 = vmatprep.subr.mxu0 0.0
  %3861 = vmatpush1.msra.mxu0 0.0
  %3862 = vmatprep.subr.mxu0 0.0
  %3863 = vmatpush1.msra.mxu0 0.0
  %3864 = vmatprep.subr.mxu0 0.0
  %3865 = vmatpush1.msra.mxu0 0.0
  %3866 = vmatprep.subr.mxu0 0.0
  %3867 = vmatpush1.msra.mxu0 0.0
  %3868 = vmatprep.subr.mxu0 0.0
  %3869 = vmatpush1.msra.mxu0 0.0
  %3870 = vmatprep.subr.mxu0 0.0
  %3871 = vmatpush1.msra.mxu0 0.0
  %3872 = vmatprep.subr.mxu0 0.0
  %3873 = vmatpush1.msra.mxu0 0.0
  %3874 = vmatprep.subr.mxu0 0.0
  %3875 = vmatpush1.msra.mxu0 0.0
  %3876 = vmatprep.subr.mxu0 0.0
  %3877 = vmatpush1.msra.mxu0 0.0
  %3878 = vmatprep.subr.mxu0 0.0
  %3879 = vmatpush1.msra.mxu0 0.0
  %3880 = vmatprep.subr.mxu0 0.0
  %3881 = vmatpush1.msra.mxu0 0.0
  %3882 = vmatprep.subr.mxu0 0.0
  %3883 = vmatpush1.msra.mxu0 0.0
  %3884 = vmatprep.subr.mxu0 0.0
  %3885 = vmatpush1.msra.mxu0 0.0
  %3886 = vmatprep.subr.mxu0 0.0
  %3887 = vmatpush1.msra.mxu0 0.0
  %3888 = vmatprep.mubr.f32.mxu0 0.0
  %3889 = vmatmul.mubr.f32.gmra.mrb[0].mxu0 %v22
  %v3890 = vpop.f32.mrb[0].mxu0
  %v3891 = vadd.f32 %v19, %v3890
  %v3892 = vpop.f32.mrb[0].mxu0
  %v3893 = vadd.f32 %v19, %v3892
  %3894 = vdwg.mxu0
  %3895 = vmatprep.subr.mxu0 %v3822
  %3896 = vmatpush1.msra.mxu0 %v3819
  %3897 = vmatprep.subr.mxu0 0.0
  %3898 = vmatpush1.msra.mxu0 0.0
  %3899 = vmatprep.subr.mxu0 0.0
  %3900 = vmatpush1.msra.mxu0 0.0
  %3901 = vmatprep.subr.mxu0 0.0
  %3902 = vmatpush1.msra.mxu0 0.0
  %3903 = vmatprep.subr.mxu0 0.0
  %3904 = vmatpush1.msra.mxu0 0.0
  %3905 = vmatprep.subr.mxu0 0.0
  %3906 = vmatpush1.msra.mxu0 0.0
  %3907 = vmatprep.subr.mxu0 0.0
  %3908 = vmatpush1.msra.mxu0 0.0
  %3909 = vmatprep.subr.mxu0 0.0
  %3910 = vmatpush1.msra.mxu0 0.0
  %3911 = vmatprep.subr.mxu0 0.0
  %3912 = vmatpush1.msra.mxu0 0.0
  %3913 = vmatprep.subr.mxu0 0.0
  %3914 = vmatpush1.msra.mxu0 0.0
  %3915 = vmatprep.subr.mxu0 0.0
  %3916 = vmatpush1.msra.mxu0 0.0
  %3917 = vmatprep.subr.mxu0 0.0
  %3918 = vmatpush1.msra.mxu0 0.0
  %3919 = vmatprep.subr.mxu0 0.0
  %3920 = vmatpush1.msra.mxu0 0.0
  %3921 = vmatprep.subr.mxu0 0.0
  %3922 = vmatpush1.msra.mxu0 0.0
  %3923 = vmatprep.subr.mxu0 0.0
  %3924 = vmatpush1.msra.mxu0 0.0
  %3925 = vmatprep.subr.mxu0 0.0
  %3926 = vmatpush1.msra.mxu0 0.0
  %3927 = vmatprep.subr.mxu0 0.0
  %3928 = vmatpush1.msra.mxu0 0.0
  %3929 = vmatprep.subr.mxu0 0.0
  %3930 = vmatpush1.msra.mxu0 0.0
  %3931 = vmatprep.subr.mxu0 0.0
  %3932 = vmatpush1.msra.mxu0 0.0
  %3933 = vmatprep.subr.mxu0 0.0
  %3934 = vmatpush1.msra.mxu0 0.0
  %3935 = vmatprep.subr.mxu0 0.0
  %3936 = vmatpush1.msra.mxu0 0.0
  %3937 = vmatprep.subr.mxu0 0.0
  %3938 = vmatpush1.msra.mxu0 0.0
  %3939 = vmatprep.subr.mxu0 0.0
  %3940 = vmatpush1.msra.mxu0 0.0
  %3941 = vmatprep.subr.mxu0 0.0
  %3942 = vmatpush1.msra.mxu0 0.0
  %3943 = vmatprep.subr.mxu0 0.0
  %3944 = vmatpush1.msra.mxu0 0.0
  %3945 = vmatprep.subr.mxu0 0.0
  %3946 = vmatpush1.msra.mxu0 0.0
  %3947 = vmatprep.subr.mxu0 0.0
  %3948 = vmatpush1.msra.mxu0 0.0
  %3949 = vmatprep.subr.mxu0 0.0
  %3950 = vmatpush1.msra.mxu0 0.0
  %3951 = vmatprep.subr.mxu0 0.0
  %3952 = vmatpush1.msra.mxu0 0.0
  %3953 = vmatprep.subr.mxu0 0.0
  %3954 = vmatpush1.msra.mxu0 0.0
  %3955 = vmatprep.subr.mxu0 0.0
  %3956 = vmatpush1.msra.mxu0 0.0
  %3957 = vmatprep.subr.mxu0 0.0
  %3958 = vmatpush1.msra.mxu0 0.0
  %3959 = vmatprep.mubr.f32.mxu0 0.0
  %3960 = vmatmul.mubr.f32.gmra.mrb[0].mxu0 %v22
  %v3961 = vpop.f32.mrb[0].mxu0
  %v3962 = vadd.f32 %v19, %v3961
  %v3963 = vpop.f32.mrb[0].mxu0
  %v3964 = vadd.f32 %v19, %v3963
  %3965 = vdwg.mxu0
  %v3966 = vmul.f32 %v3891, 0.5
  %v3967 = vmul.f32 %v3893, 0.5
  %v3968 = vmul.f32 %v3962, 0.5
  %v3969 = vmul.f32 %v3964, 0.5
  %v3970 = vmul.f32 %v3891, 0.70710677
  %v3971 = vmul.f32 %v3893, 0.70710677
  %v3972 = vmul.f32 %v3962, 0.70710677
  %v3973 = vmul.f32 %v3964, 0.70710677
  %v3974 = verf.f32.pop %v3970
  %v3975 = verf.f32.pop %v3971
  %v3976 = verf.f32.pop %v3972
  %v3977 = verf.f32.pop %v3973
  %v3978 = vadd.f32 %v3974, 1.0
  %v3979 = vadd.f32 %v3975, 1.0
  %v3980 = vadd.f32 %v3976, 1.0
  %v3981 = vadd.f32 %v3977, 1.0
  %v3982 = vmul.f32 %v3966, %v3978
  %v3983 = vmul.f32 %v3967, %v3979
  %v3984 = vmul.f32 %v3968, %v3980
  %v3985 = vmul.f32 %v3969, %v3981
  %v3987 = vsel %vm208, %v3982, 0
  %v3990 = vsel %vm208, %v3983, 0
  %v3993 = vsel %vm208, %v3984, 0
  %v3996 = vsel %vm208, %v3985, 0
  %3998 = vmatprep.subr.mxu0 %v3990
  %3999 = vmatpush1.msra.mxu0 %v3987
  %4000 = vmatprep.subr.mxu0 0.0
  %4001 = vmatpush1.msra.mxu0 0.0
  %4002 = vmatprep.subr.mxu0 0.0
  %4003 = vmatpush1.msra.mxu0 0.0
  %4004 = vmatprep.subr.mxu0 0.0
  %4005 = vmatpush1.msra.mxu0 0.0
  %4006 = vmatprep.subr.mxu0 0.0
  %4007 = vmatpush1.msra.mxu0 0.0
  %4008 = vmatprep.subr.mxu0 0.0
  %4009 = vmatpush1.msra.mxu0 0.0
  %4010 = vmatprep.subr.mxu0 0.0
  %4011 = vmatpush1.msra.mxu0 0.0
  %4012 = vmatprep.subr.mxu0 0.0
  %4013 = vmatpush1.msra.mxu0 0.0
  %4014 = vmatprep.subr.mxu0 0.0
  %4015 = vmatpush1.msra.mxu0 0.0
  %4016 = vmatprep.subr.mxu0 0.0
  %4017 = vmatpush1.msra.mxu0 0.0
  %4018 = vmatprep.subr.mxu0 0.0
  %4019 = vmatpush1.msra.mxu0 0.0
  %4020 = vmatprep.subr.mxu0 0.0
  %4021 = vmatpush1.msra.mxu0 0.0
  %4022 = vmatprep.subr.mxu0 0.0
  %4023 = vmatpush1.msra.mxu0 0.0
  %4024 = vmatprep.subr.mxu0 0.0
  %4025 = vmatpush1.msra.mxu0 0.0
  %4026 = vmatprep.subr.mxu0 0.0
  %4027 = vmatpush1.msra.mxu0 0.0
  %4028 = vmatprep.subr.mxu0 0.0
  %4029 = vmatpush1.msra.mxu0 0.0
  %4030 = vmatprep.subr.mxu0 0.0
  %4031 = vmatpush1.msra.mxu0 0.0
  %4032 = vmatprep.subr.mxu0 0.0
  %4033 = vmatpush1.msra.mxu0 0.0
  %4034 = vmatprep.subr.mxu0 0.0
  %4035 = vmatpush1.msra.mxu0 0.0
  %4036 = vmatprep.subr.mxu0 0.0
  %4037 = vmatpush1.msra.mxu0 0.0
  %4038 = vmatprep.subr.mxu0 0.0
  %4039 = vmatpush1.msra.mxu0 0.0
  %4040 = vmatprep.subr.mxu0 0.0
  %4041 = vmatpush1.msra.mxu0 0.0
  %4042 = vmatprep.subr.mxu0 0.0
  %4043 = vmatpush1.msra.mxu0 0.0
  %4044 = vmatprep.subr.mxu0 0.0
  %4045 = vmatpush1.msra.mxu0 0.0
  %4046 = vmatprep.subr.mxu0 0.0
  %4047 = vmatpush1.msra.mxu0 0.0
  %4048 = vmatprep.subr.mxu0 0.0
  %4049 = vmatpush1.msra.mxu0 0.0
  %4050 = vmatprep.subr.mxu0 0.0
  %4051 = vmatpush1.msra.mxu0 0.0
  %4052 = vmatprep.subr.mxu0 0.0
  %4053 = vmatpush1.msra.mxu0 0.0
  %4054 = vmatprep.subr.mxu0 0.0
  %4055 = vmatpush1.msra.mxu0 0.0
  %4056 = vmatprep.subr.mxu0 0.0
  %4057 = vmatpush1.msra.mxu0 0.0
  %4058 = vmatprep.subr.mxu0 0.0
  %4059 = vmatpush1.msra.mxu0 0.0
  %4060 = vmatprep.subr.mxu0 0.0
  %4061 = vmatpush1.msra.mxu0 0.0
  %4062 = vmatprep.mubr.f32.mxu0 0.0
  %4063 = vmatmul.mubr.f32.gmra.mrb[0].mxu0 %v206
  %v4064 = vpop.f32.mrb[0].mxu0
  %v4065 = vadd.f32 %v201, %v4064
  %v4066 = vpop.f32.mrb[0].mxu0
  %v4067 = vadd.f32 %v201, %v4066
  %4068 = vdwg.mxu0
  %4069 = vmatprep.subr.mxu0 %v3996
  %4070 = vmatpush1.msra.mxu0 %v3993
  %4071 = vmatprep.subr.mxu0 0.0
  %4072 = vmatpush1.msra.mxu0 0.0
  %4073 = vmatprep.subr.mxu0 0.0
  %4074 = vmatpush1.msra.mxu0 0.0
  %4075 = vmatprep.subr.mxu0 0.0
  %4076 = vmatpush1.msra.mxu0 0.0
  %4077 = vmatprep.subr.mxu0 0.0
  %4078 = vmatpush1.msra.mxu0 0.0
  %4079 = vmatprep.subr.mxu0 0.0
  %4080 = vmatpush1.msra.mxu0 0.0
  %4081 = vmatprep.subr.mxu0 0.0
  %4082 = vmatpush1.msra.mxu0 0.0
  %4083 = vmatprep.subr.mxu0 0.0
  %4084 = vmatpush1.msra.mxu0 0.0
  %4085 = vmatprep.subr.mxu0 0.0
  %4086 = vmatpush1.msra.mxu0 0.0
  %4087 = vmatprep.subr.mxu0 0.0
  %4088 = vmatpush1.msra.mxu0 0.0
  %4089 = vmatprep.subr.mxu0 0.0
  %4090 = vmatpush1.msra.mxu0 0.0
  %4091 = vmatprep.subr.mxu0 0.0
  %4092 = vmatpush1.msra.mxu0 0.0
  %4093 = vmatprep.subr.mxu0 0.0
  %4094 = vmatpush1.msra.mxu0 0.0
  %4095 = vmatprep.subr.mxu0 0.0
  %4096 = vmatpush1.msra.mxu0 0.0
  %4097 = vmatprep.subr.mxu0 0.0
  %4098 = vmatpush1.msra.mxu0 0.0
  %4099 = vmatprep.subr.mxu0 0.0
  %4100 = vmatpush1.msra.mxu0 0.0
  %4101 = vmatprep.subr.mxu0 0.0
  %4102 = vmatpush1.msra.mxu0 0.0
  %4103 = vmatprep.subr.mxu0 0.0
  %4104 = vmatpush1.msra.mxu0 0.0
  %4105 = vmatprep.subr.mxu0 0.0
  %4106 = vmatpush1.msra.mxu0 0.0
  %4107 = vmatprep.subr.mxu0 0.0
  %4108 = vmatpush1.msra.mxu0 0.0
  %4109 = vmatprep.subr.mxu0 0.0
  %4110 = vmatpush1.msra.mxu0 0.0
  %4111 = vmatprep.subr.mxu0 0.0
  %4112 = vmatpush1.msra.mxu0 0.0
  %4113 = vmatprep.subr.mxu0 0.0
  %4114 = vmatpush1.msra.mxu0 0.0
  %4115 = vmatprep.subr.mxu0 0.0
  %4116 = vmatpush1.msra.mxu0 0.0
  %4117 = vmatprep.subr.mxu0 0.0
  %4118 = vmatpush1.msra.mxu0 0.0
  %4119 = vmatprep.subr.mxu0 0.0
  %4120 = vmatpush1.msra.mxu0 0.0
  %4121 = vmatprep.subr.mxu0 0.0
  %4122 = vmatpush1.msra.mxu0 0.0
  %4123 = vmatprep.subr.mxu0 0.0
  %4124 = vmatpush1.msra.mxu0 0.0
  %4125 = vmatprep.subr.mxu0 0.0
  %4126 = vmatpush1.msra.mxu0 0.0
  %4127 = vmatprep.subr.mxu0 0.0
  %4128 = vmatpush1.msra.mxu0 0.0
  %4129 = vmatprep.subr.mxu0 0.0
  %4130 = vmatpush1.msra.mxu0 0.0
  %4131 = vmatprep.subr.mxu0 0.0
  %4132 = vmatpush1.msra.mxu0 0.0
  %4133 = vmatprep.mubr.f32.mxu0 0.0
  %4134 = vmatmul.mubr.f32.gmra.mrb[0].mxu0 %v206
  %v4135 = vpop.f32.mrb[0].mxu0
  %v4136 = vadd.f32 %v201, %v4135
  %v4137 = vpop.f32.mrb[0].mxu0
  %v4138 = vadd.f32 %v201, %v4137
  %4139 = vdwg.mxu0
  %v4140 = vmul.f32 %v4065, 0.5
  %v4141 = vmul.f32 %v4067, 0.5
  %v4142 = vmul.f32 %v4136, 0.5
  %v4143 = vmul.f32 %v4138, 0.5
  %v4144 = vmul.f32 %v4065, 0.70710677
  %v4145 = vmul.f32 %v4067, 0.70710677
  %v4146 = vmul.f32 %v4136, 0.70710677
  %v4147 = vmul.f32 %v4138, 0.70710677
  %v4148 = verf.f32.pop %v4144
  %v4149 = verf.f32.pop %v4145
  %v4150 = verf.f32.pop %v4146
  %v4151 = verf.f32.pop %v4147
  %v4152 = vadd.f32 %v4148, 1.0
  %v4153 = vadd.f32 %v4149, 1.0
  %v4154 = vadd.f32 %v4150, 1.0
  %v4155 = vadd.f32 %v4151, 1.0
  %v4156 = vmul.f32 %v4140, %v4152
  %v4157 = vmul.f32 %v4141, %v4153
  %v4158 = vmul.f32 %v4142, %v4154
  %v4159 = vmul.f32 %v4143, %v4155
  %v4161 = vsel %vm208, %v4156, 0
  %v4164 = vsel %vm208, %v4157, 0
  %v4167 = vsel %vm208, %v4158, 0
  %v4170 = vsel %vm208, %v4159, 0
  %4172 = vmatprep.subr.mxu0 %v4164
  %4173 = vmatpush1.msra.mxu0 %v4161
  %4174 = vmatprep.subr.mxu0 0.0
  %4175 = vmatpush1.msra.mxu0 0.0
  %4176 = vmatprep.subr.mxu0 0.0
  %4177 = vmatpush1.msra.mxu0 0.0
  %4178 = vmatprep.subr.mxu0 0.0
  %4179 = vmatpush1.msra.mxu0 0.0
  %4180 = vmatprep.subr.mxu0 0.0
  %4181 = vmatpush1.msra.mxu0 0.0
  %4182 = vmatprep.subr.mxu0 0.0
  %4183 = vmatpush1.msra.mxu0 0.0
  %4184 = vmatprep.subr.mxu0 0.0
  %4185 = vmatpush1.msra.mxu0 0.0
  %4186 = vmatprep.subr.mxu0 0.0
  %4187 = vmatpush1.msra.mxu0 0.0
  %4188 = vmatprep.subr.mxu0 0.0
  %4189 = vmatpush1.msra.mxu0 0.0
  %4190 = vmatprep.subr.mxu0 0.0
  %4191 = vmatpush1.msra.mxu0 0.0
  %4192 = vmatprep.subr.mxu0 0.0
  %4193 = vmatpush1.msra.mxu0 0.0
  %4194 = vmatprep.subr.mxu0 0.0
  %4195 = vmatpush1.msra.mxu0 0.0
  %4196 = vmatprep.subr.mxu0 0.0
  %4197 = vmatpush1.msra.mxu0 0.0
  %4198 = vmatprep.subr.mxu0 0.0
  %4199 = vmatpush1.msra.mxu0 0.0
  %4200 = vmatprep.subr.mxu0 0.0
  %4201 = vmatpush1.msra.mxu0 0.0
  %4202 = vmatprep.subr.mxu0 0.0
  %4203 = vmatpush1.msra.mxu0 0.0
  %4204 = vmatprep.subr.mxu0 0.0
  %4205 = vmatpush1.msra.mxu0 0.0
  %4206 = vmatprep.subr.mxu0 0.0
  %4207 = vmatpush1.msra.mxu0 0.0
  %4208 = vmatprep.subr.mxu0 0.0
  %4209 = vmatpush1.msra.mxu0 0.0
  %4210 = vmatprep.subr.mxu0 0.0
  %4211 = vmatpush1.msra.mxu0 0.0
  %4212 = vmatprep.subr.mxu0 0.0
  %4213 = vmatpush1.msra.mxu0 0.0
  %4214 = vmatprep.subr.mxu0 0.0
  %4215 = vmatpush1.msra.mxu0 0.0
  %4216 = vmatprep.subr.mxu0 0.0
  %4217 = vmatpush1.msra.mxu0 0.0
  %4218 = vmatprep.subr.mxu0 0.0
  %4219 = vmatpush1.msra.mxu0 0.0
  %4220 = vmatprep.subr.mxu0 0.0
  %4221 = vmatpush1.msra.mxu0 0.0
  %4222 = vmatprep.subr.mxu0 0.0
  %4223 = vmatpush1.msra.mxu0 0.0
  %4224 = vmatprep.subr.mxu0 0.0
  %4225 = vmatpush1.msra.mxu0 0.0
  %4226 = vmatprep.subr.mxu0 0.0
  %4227 = vmatpush1.msra.mxu0 0.0
  %4228 = vmatprep.subr.mxu0 0.0
  %4229 = vmatpush1.msra.mxu0 0.0
  %4230 = vmatprep.subr.mxu0 0.0
  %4231 = vmatpush1.msra.mxu0 0.0
  %4232 = vmatprep.subr.mxu0 0.0
  %4233 = vmatpush1.msra.mxu0 0.0
  %4234 = vmatprep.subr.mxu0 0.0
  %4235 = vmatpush1.msra.mxu0 0.0
  %4236 = vmatprep.mubr.f32.mxu0 0.0
  %4237 = vmatmul.mubr.f32.gmra.mrb[0].mxu0 %v389
  %v4238 = vpop.f32.mrb[0].mxu0
  %v4239 = vadd.f32 %v385, %v4238
  %v4240 = vpop.f32.mrb[0].mxu0
  %v4241 = vadd.f32 %v385, %v4240
  %4242 = vdwg.mxu0
  %4243 = vmatprep.subr.mxu0 %v4170
  %4244 = vmatpush1.msra.mxu0 %v4167
  %4245 = vmatprep.subr.mxu0 0.0
  %4246 = vmatpush1.msra.mxu0 0.0
  %4247 = vmatprep.subr.mxu0 0.0
  %4248 = vmatpush1.msra.mxu0 0.0
  %4249 = vmatprep.subr.mxu0 0.0
  %4250 = vmatpush1.msra.mxu0 0.0
  %4251 = vmatprep.subr.mxu0 0.0
  %4252 = vmatpush1.msra.mxu0 0.0
  %4253 = vmatprep.subr.mxu0 0.0
  %4254 = vmatpush1.msra.mxu0 0.0
  %4255 = vmatprep.subr.mxu0 0.0
  %4256 = vmatpush1.msra.mxu0 0.0
  %4257 = vmatprep.subr.mxu0 0.0
  %4258 = vmatpush1.msra.mxu0 0.0
  %4259 = vmatprep.subr.mxu0 0.0
  %4260 = vmatpush1.msra.mxu0 0.0
  %4261 = vmatprep.subr.mxu0 0.0
  %4262 = vmatpush1.msra.mxu0 0.0
  %4263 = vmatprep.subr.mxu0 0.0
  %4264 = vmatpush1.msra.mxu0 0.0
  %4265 = vmatprep.subr.mxu0 0.0
  %4266 = vmatpush1.msra.mxu0 0.0
  %4267 = vmatprep.subr.mxu0 0.0
  %4268 = vmatpush1.msra.mxu0 0.0
  %4269 = vmatprep.subr.mxu0 0.0
  %4270 = vmatpush1.msra.mxu0 0.0
  %4271 = vmatprep.subr.mxu0 0.0
  %4272 = vmatpush1.msra.mxu0 0.0
  %4273 = vmatprep.subr.mxu0 0.0
  %4274 = vmatpush1.msra.mxu0 0.0
  %4275 = vmatprep.subr.mxu0 0.0
  %4276 = vmatpush1.msra.mxu0 0.0
  %4277 = vmatprep.subr.mxu0 0.0
  %4278 = vmatpush1.msra.mxu0 0.0
  %4279 = vmatprep.subr.mxu0 0.0
  %4280 = vmatpush1.msra.mxu0 0.0
  %4281 = vmatprep.subr.mxu0 0.0
  %4282 = vmatpush1.msra.mxu0 0.0
  %4283 = vmatprep.subr.mxu0 0.0
  %4284 = vmatpush1.msra.mxu0 0.0
  %4285 = vmatprep.subr.mxu0 0.0
  %4286 = vmatpush1.msra.mxu0 0.0
  %4287 = vmatprep.subr.mxu0 0.0
  %4288 = vmatpush1.msra.mxu0 0.0
  %4289 = vmatprep.subr.mxu0 0.0
  %4290 = vmatpush1.msra.mxu0 0.0
  %4291 = vmatprep.subr.mxu0 0.0
  %4292 = vmatpush1.msra.mxu0 0.0
  %4293 = vmatprep.subr.mxu0 0.0
  %4294 = vmatpush1.msra.mxu0 0.0
  %4295 = vmatprep.subr.mxu0 0.0
  %4296 = vmatpush1.msra.mxu0 0.0
  %4297 = vmatprep.subr.mxu0 0.0
  %4298 = vmatpush1.msra.mxu0 0.0
  %4299 = vmatprep.subr.mxu0 0.0
  %4300 = vmatpush1.msra.mxu0 0.0
  %4301 = vmatprep.subr.mxu0 0.0
  %4302 = vmatpush1.msra.mxu0 0.0
  %4303 = vmatprep.subr.mxu0 0.0
  %4304 = vmatpush1.msra.mxu0 0.0
  %4305 = vmatprep.subr.mxu0 0.0
  %4306 = vmatpush1.msra.mxu0 0.0
  %4307 = vmatprep.mubr.f32.mxu0 0.0
  %4308 = vmatmul.mubr.f32.gmra.mrb[0].mxu0 %v389
  %v4309 = vpop.f32.mrb[0].mxu0
  %v4310 = vadd.f32 %v385, %v4309
  %v4311 = vpop.f32.mrb[0].mxu0
  %v4312 = vadd.f32 %v385, %v4311
  %4313 = vdwg.mxu0
  %v4318 = vcombine.low %v4239, %v4241
  %v4319 = vcombine.low %v4310, %v4312
  %v4321 = vunpack.c.l.s4 1966171168
  %v4322 = vunpack.c.0.s8 %v4321
  %v4323 = vlaneseq
  %v4324 = vshrl.u32 %v4323, 7
  %v4325 = vsub.s32 %v4322, %v4324
  %v4326 = vrot.slane %v4318, %v4325
  %v4328 = vunpack.c.l.s4 1966171168
  %v4329 = vunpack.c.0.s8 %v4328
  %v4330 = vlaneseq
  %v4331 = vshrl.u32 %v4330, 7
  %v4332 = vsub.s32 %v4329, %v4331
  %v4333 = vrot.slane %v4319, %v4332
  %v4334 = vcombine.low %v4326, %v4333
  %v4336 = vunpack.c.l.s4 1966171168
  %v4337 = vunpack.c.0.s8 %v4336
  %v4338 = vlaneseq
  %v4339 = vshrl.u32 %v4338, 7
  %v4340 = vsub.s32 %v4337, %v4339
  %v4341 = vrot.slane %v4334, %v4340
  %s4343 = scalar_lea.vmem %s2, 28
  %4344 = vst.msk [vmem:[%s4343] sm:$0xf] %vm577, %v4341
  // Predicated region
  $region10: #{model_forward.1} parent=0 // pred_check
    _
  $region11: #{model_forward.1} parent=0 // pred_check_branch
    %4346 = sbr.rel (0) target = $region13
  $region12: #{model_forward.1} parent=0 // pred_region
    _
  $region13: #{model_forward.1} parent=0 // pred_fallthru
    _
  // Predicated region
  $region14: #{model_forward.1} parent=0 // pred_check
    _
  $region15: #{model_forward.1} parent=0 // pred_check_branch
    %4348 = sbr.rel (0) target = $region17
  $region16: #{model_forward.1} parent=0 // pred_region
    _
  $region17: #{model_forward.1} parent=0 // pred_fallthru
    _

</llo_original>
